<compile_context>
chip_gen: v5e
topology: v5e:2x2
jax: 0.10.0
libtpu: 0.0.40
codegen_flags: <defaults>
</compile_context>

<pallas_src>
import functools

import jax
import jax.numpy as jnp
from jax.experimental import pallas as pl
from jax.experimental.pallas import tpu as pltpu


def _layernorm(x, gamma, beta, eps=1e-5):
    # Two-pass (centered) variance: avoids E[x^2]-E[x]^2 cancellation (review concern).
    mean = jnp.mean(x, axis=-1, keepdims=True)
    xc = x - mean
    var = jnp.mean(xc * xc, axis=-1, keepdims=True)
    return xc * jax.lax.rsqrt(var + eps) * gamma + beta


def transformer_block_kernel(
    x_ref,                               # (T, D) bf16 — full sequence, resident per batch
    wqkv_ref,                            # (D, 3*HDh) bf16 — fused [Q|K|V], 1/sqrt(Dh) folded into Q
    w0_ref,                              # (HDh, D) bf16
    g1_ref, be1_ref,                     # (1, D) fp32
    w1_ref, b1_ref,                      # (D, F) bf16, (1, F) fp32
    w2_ref, b2_ref,                      # (F, D) bf16, (1, D) fp32
    g2_ref, be2_ref,                     # (1, D) fp32
    o_ref,                               # (TQ, D) bf16
    qkv_ref,                             # VMEM scratch (T, 3*HDh) bf16 — persists across q-tiles
    attn_ref,                            # VMEM scratch (TQ, HDh) fp32 — head-concat before W_0
    *, heads,
):
    T, D = x_ref.shape
    TQ = o_ref.shape[0]
    hdh = w0_ref.shape[0]                # H * Dh
    dh = hdh // heads

    qi = pl.program_id(1)

    # --- fused full-sequence Q/K/V projection: once per batch element (q-tile 0 only) ---
    @pl.when(qi == 0)
    def _project_qkv():
        qkv_ref[...] = jnp.dot(
            x_ref[...], wqkv_ref[...], preferred_element_type=jnp.float32
        ).astype(jnp.bfloat16)

    q_start = pl.multiple_of(qi * TQ, TQ)
    x_rows = x_ref[pl.ds(q_start, TQ), :].astype(jnp.float32)      # residual rows (fp32)
    q_blk = qkv_ref[pl.ds(q_start, TQ), pl.ds(0, hdh)]             # (TQ, HDh) bf16, pre-scaled

    # --- per-head attention; heads stay inside this grid step (static lane blocks) ---
    for h in range(heads):
        lo = h * dh
        q_h = q_blk[:, lo:lo + dh]                                 # (TQ, Dh) bf16
        k_h = qkv_ref[:, pl.ds(hdh + lo, dh)]                      # (T,  Dh) bf16
        v_h = qkv_ref[:, pl.ds(2 * hdh + lo, dh)]                  # (T,  Dh) bf16
        s = jax.lax.dot_general(q_h, k_h, (((1,), (1,)), ((), ())),
                                preferred_element_type=jnp.float32)        # (TQ, T)
        s = s - jnp.max(s, axis=-1, keepdims=True)
        p = jnp.exp(s)
        # approx reciprocal goes to the EUP slot; ~1e-3 rel. error vs exact softmax.
        p = p * pl.reciprocal(jnp.sum(p, axis=-1, keepdims=True), approx=True)
        attn_ref[:, pl.ds(lo, dh)] = jnp.dot(
            p.astype(jnp.bfloat16), v_h, preferred_element_type=jnp.float32)

    # --- single full-depth W_0 projection over the concatenated heads ---
    mhsa = jnp.dot(attn_ref[...].astype(jnp.bfloat16), w0_ref[...],
                   preferred_element_type=jnp.float32)                     # (TQ, D)

    # --- residual + post-norm LayerNorm 1 ---
    y = _layernorm(mhsa + x_rows, g1_ref[...], be1_ref[...])

    # --- MLP: Linear(D,F) -> exact (erf) GELU -> Linear(F,D) ---
    h1 = jnp.dot(y.astype(jnp.bfloat16), w1_ref[...],
                 preferred_element_type=jnp.float32) + b1_ref[...]         # (TQ, F)
    g = 0.5 * h1 * (1.0 + jax.lax.erf(h1 * 0.7071067811865476))            # nn.GELU (exact)
    h2 = jnp.dot(g.astype(jnp.bfloat16), w2_ref[...],
                 preferred_element_type=jnp.float32) + b2_ref[...]         # (TQ, D)

    # --- residual + post-norm LayerNorm 2 ---
    out = _layernorm(h2 + y, g2_ref[...], be2_ref[...])
    o_ref[...] = out.astype(o_ref.dtype)


def _vmem_capacity_bytes():
    try:
        return int(pltpu.get_tpu_info().vmem_capacity_bytes)
    except Exception:
        return 64 * 1024 * 1024            # conservative (v7x-sized) fallback


def _pick_tq(T, vmem_cap):
    """Query-row tile: bigger on 128-MiB parts (v5e/v6e), <=256 on 64-MiB v7x."""
    max_tq = 512 if vmem_cap >= (96 << 20) else 256
    if T <= max_tq:
        return T
    for cand in (512, 256, 128, 64, 32, 16, 8):
        if cand <= max_tq and T % cand == 0:
            return cand
    return T                               # no nice divisor: single full-length tile


def _resident_spec(block_shape, index_map):
    """Single-buffered BlockSpec for (per-batch-)constant blocks: halves their VMEM
    footprint vs. default double-buffering (matters under v7x's 64 MiB)."""
    try:
        return pl.BlockSpec(block_shape, index_map, pipeline_mode=pl.Buffered(1))
    except Exception:                      # jax builds without pipeline_mode support
        return pl.BlockSpec(block_shape, index_map)


def transformer_block(x, p, heads):
    x = x.astype(jnp.bfloat16)             # bf16 streamed activations
    B, T, D = x.shape
    hdh = p['w0'].shape[0]                 # H * Dh
    F = p['w1'].shape[1]

    vmem_cap = _vmem_capacity_bytes()
    TQ = _pick_tq(T, vmem_cap)
    grid = (B, T // TQ)

    x_map = lambda b, qi: (b, 0, 0)        # full sequence, resident per batch element
    out_map = lambda b, qi: (b, qi, 0)
    cmap = lambda b, qi: (0, 0)            # weights: constant over the whole grid

    in_specs = [
        _resident_spec((None, T, D), x_map),
        _resident_spec((D, 3 * hdh), cmap),     # fused Wqkv
        _resident_spec((hdh, D), cmap),         # W0
        _resident_spec((1, D), cmap),           # g1
        _resident_spec((1, D), cmap),           # be1
        _resident_spec((D, F), cmap),           # w1
        _resident_spec((1, F), cmap),           # b1
        _resident_spec((F, D), cmap),           # w2
        _resident_spec((1, D), cmap),           # b2
        _resident_spec((1, D), cmap),           # g2
        _resident_spec((1, D), cmap),           # be2
    ]
    out_spec = pl.BlockSpec((None, TQ, D), out_map)

    kernel = functools.partial(transformer_block_kernel, heads=heads)
    return pl.pallas_call(
        kernel,
        out_shape=jax.ShapeDtypeStruct((B, T, D), jnp.bfloat16),
        grid=grid,
        in_specs=in_specs,
        out_specs=out_spec,
        scratch_shapes=[
            pltpu.VMEM((T, 3 * hdh), jnp.bfloat16),   # full-seq Q|K|V, reused across q-tiles
            pltpu.VMEM((TQ, hdh), jnp.float32),       # concatenated per-head attention
        ],
        compiler_params=pltpu.CompilerParams(
            # Batch feeds the second TensorCore (v7x); the q-tile axis must stay
            # "arbitrary" because the QKV scratch computed at qi==0 is reused later.
            dimension_semantics=("parallel", "arbitrary"),
            vmem_limit_bytes=min(int(vmem_cap * 0.8), 110 * 1024 * 1024),
        ),
    )(x, p['wqkv'], p['w0'], p['g1'], p['be1'],
      p['w1'], p['b1'], p['w2'], p['b2'], p['g2'], p['be2'])


def transformer_encoder(x, block_params, heads):
    out_dtype = x.dtype
    y = x.astype(jnp.bfloat16)              # bf16 between blocks (halves inter-block traffic)
    for p in block_params:
        y = transformer_block(y, p, heads)
    return y.astype(out_dtype)


def init_params(key, dim, heads, dim_head, dim_linear_block, blocks):
    """Deterministic synthetic init, laid out for the fused kernel.

    to_qvk is nn.Linear(dim, 3*_dim, bias=False) whose output columns follow the einops
    pattern 'b t (d k h)'.  We regroup them so the fused matrix is [Q | K | V] with each
    part head-major / dim_head-minor (matching 'b t (h d)' expected by W_0), and fold the
    1/sqrt(dim_head) scale into the Q columns.  Matmul weights are stored bf16."""
    _dim = heads * dim_head
    scale = dim_head ** (-0.5)

    def rnd(k, shape, s=0.05):
        return (s * jax.random.normal(k, shape)).astype(jnp.float32)

    params = []
    for i in range(blocks):
        ks = jax.random.split(jax.random.fold_in(key, i), 4)
        w_qvk = rnd(ks[0], (dim, dim_head, 3, heads))        # (in, d, k, h) — '(d k h)' columns
        w_qvk = jnp.transpose(w_qvk, (0, 2, 3, 1))           # (in, k, h, d)
        wq = w_qvk[:, 0].reshape(dim, _dim) * scale          # scale folded into Wq
        wk = w_qvk[:, 1].reshape(dim, _dim)
        wv = w_qvk[:, 2].reshape(dim, _dim)
        wqkv = jnp.concatenate([wq, wk, wv], axis=1).astype(jnp.bfloat16)   # (D, 3*_dim)
        w0 = rnd(ks[1], (_dim, dim)).astype(jnp.bfloat16)    # input rows follow '(h d)'
        w1 = rnd(ks[2], (dim, dim_linear_block)).astype(jnp.bfloat16)
        w2 = rnd(ks[3], (dim_linear_block, dim)).astype(jnp.bfloat16)

        params.append(dict(
            wqkv=wqkv, w0=w0,
            g1=jnp.ones((1, dim), jnp.float32), be1=jnp.zeros((1, dim), jnp.float32),
            w1=w1, b1=jnp.zeros((1, dim_linear_block), jnp.float32),
            w2=w2, b2=jnp.zeros((1, dim), jnp.float32),
            g2=jnp.ones((1, dim), jnp.float32), be2=jnp.zeros((1, dim), jnp.float32),
        ))
    return params


if __name__ == "__main__":
    B, T, D = 2, 8, 32            # batch, tokens, embedding dim
    heads = 8
    dim_head = D // heads         # module default: dim_head = dim / heads = 4
    dim_linear_block = 64
    blocks = 2

    key = jax.random.PRNGKey(0)
    kx, kp = jax.random.split(key)
    x = jax.random.normal(kx, (B, T, D), dtype=jnp.float32)
    params = init_params(kp, D, heads, dim_head, dim_linear_block, blocks)

    encoder = jax.jit(transformer_encoder, static_argnums=(2,))
    y = encoder(x, params, heads)
    jax.block_until_ready(y)
    assert y.shape == (B, T, D) and y.dtype == jnp.float32
    assert bool(jnp.all(jnp.isfinite(y)))
    print("KERNEL_OK")
</pallas_src>

<mosaic_0001>
module attributes {stable_mosaic.version = 11 : i64} {
  func.func @transformer_block_kernel(%arg0: i32, %arg1: i32, %arg2: memref<1x8x32xbf16, #tpu.memory_space<vmem>>, %arg3: memref<32x96xbf16, #tpu.memory_space<vmem>>, %arg4: memref<32x32xbf16, #tpu.memory_space<vmem>>, %arg5: memref<1x32xf32, #tpu.memory_space<vmem>>, %arg6: memref<1x32xf32, #tpu.memory_space<vmem>>, %arg7: memref<32x64xbf16, #tpu.memory_space<vmem>>, %arg8: memref<1x64xf32, #tpu.memory_space<vmem>>, %arg9: memref<64x32xbf16, #tpu.memory_space<vmem>>, %arg10: memref<1x32xf32, #tpu.memory_space<vmem>>, %arg11: memref<1x32xf32, #tpu.memory_space<vmem>>, %arg12: memref<1x32xf32, #tpu.memory_space<vmem>>, %arg13: memref<1x8x32xbf16, #tpu.memory_space<vmem>>, %arg14: memref<8x96xbf16, #tpu.memory_space<vmem>>, %arg15: memref<8x32xf32, #tpu.memory_space<vmem>>) attributes {dimension_semantics = [#tpu.dimension_semantics<parallel>, #tpu.dimension_semantics<arbitrary>], iteration_bounds = array<i64: 2, 1>, scalar_prefetch = 0 : i64, scratch_operands = 2 : i64, tpu.core_type = #tpu.core_type<tc>, window_params = [{pipeline_mode = #tpu.pipeline_mode<synchronous>, transform_indices = @transform_0, window_bounds = array<i64: 1, 8, 32>}, {pipeline_mode = #tpu.pipeline_mode<synchronous>, transform_indices = @transform_1, window_bounds = array<i64: 32, 96>}, {pipeline_mode = #tpu.pipeline_mode<synchronous>, transform_indices = @transform_2, window_bounds = array<i64: 32, 32>}, {pipeline_mode = #tpu.pipeline_mode<synchronous>, transform_indices = @transform_3, window_bounds = array<i64: 1, 32>}, {pipeline_mode = #tpu.pipeline_mode<synchronous>, transform_indices = @transform_4, window_bounds = array<i64: 1, 32>}, {pipeline_mode = #tpu.pipeline_mode<synchronous>, transform_indices = @transform_5, window_bounds = array<i64: 32, 64>}, {pipeline_mode = #tpu.pipeline_mode<synchronous>, transform_indices = @transform_6, window_bounds = array<i64: 1, 64>}, {pipeline_mode = #tpu.pipeline_mode<synchronous>, transform_indices = @transform_7, window_bounds = array<i64: 64, 32>}, {pipeline_mode = #tpu.pipeline_mode<synchronous>, transform_indices = @transform_8, window_bounds = array<i64: 1, 32>}, {pipeline_mode = #tpu.pipeline_mode<synchronous>, transform_indices = @transform_9, window_bounds = array<i64: 1, 32>}, {pipeline_mode = #tpu.pipeline_mode<synchronous>, transform_indices = @transform_10, window_bounds = array<i64: 1, 32>}, {transform_indices = @transform_11, window_bounds = array<i64: 1, 8, 32>}]} {
    %c0_i32 = arith.constant 0 : i32
    %0 = arith.cmpi eq, %arg1, %c0_i32 : i32
    %1 = arith.extui %0 : i1 to i32
    %c0_i32_0 = arith.constant 0 : i32
    %2 = arith.cmpi ne, %1, %c0_i32_0 : i32
    scf.if %2 {
      %c0_98 = arith.constant 0 : index
      %c0_99 = arith.constant 0 : index
      %c0_100 = arith.constant 0 : index
      %221 = vector.load %arg2[%c0_98, %c0_99, %c0_100] : memref<1x8x32xbf16, #tpu.memory_space<vmem>>, vector<1x8x32xbf16>
      %222 = vector.shape_cast %221 : vector<1x8x32xbf16> to vector<8x32xbf16>
      %c0_101 = arith.constant 0 : index
      %c0_102 = arith.constant 0 : index
      %223 = vector.load %arg3[%c0_101, %c0_102] : memref<32x96xbf16, #tpu.memory_space<vmem>>, vector<32x96xbf16>
      %cst_103 = arith.constant dense<0.000000e+00> : vector<8x96xf32>
      %224 = tpu.matmul %222, %223, %cst_103 {dimension_numbers = #tpu.dot_dimension_numbers<[1], [0], [0], [1], [0, 0, 1, 1], [], []>} : vector<8x32xbf16>, vector<32x96xbf16>, vector<8x96xf32> -> vector<8x96xf32>
      %225 = arith.truncf %224 : vector<8x96xf32> to vector<8x96xbf16>
      %c0_104 = arith.constant 0 : index
      %c0_105 = arith.constant 0 : index
      %226 = vector.load %arg14[%c0_104, %c0_105] : memref<8x96xbf16, #tpu.memory_space<vmem>>, vector<8x96xbf16>
      tpu.vector_store %arg14[%c0_104, %c0_105], %225 {strides = array<i32>} : memref<8x96xbf16, #tpu.memory_space<vmem>>, vector<8x96xbf16>,
    } else {
    }
    %c8_i32 = arith.constant 8 : i32
    %3 = arith.muli %arg1, %c8_i32 : i32
    %4 = tpu.assume_multiple %3, 8 : i32
    %c0 = arith.constant 0 : index
    %5 = arith.index_cast %4 : i32 to index
    %c0_1 = arith.constant 0 : index
    %6 = vector.load %arg2[%c0, %5, %c0_1] : memref<1x8x32xbf16, #tpu.memory_space<vmem>>, vector<1x8x32xbf16>
    %7 = vector.shape_cast %6 : vector<1x8x32xbf16> to vector<8x32xbf16>
    %8 = arith.extf %7 : vector<8x32xbf16> to vector<8x32xf32>
    %9 = arith.index_cast %4 : i32 to index
    %c0_2 = arith.constant 0 : index
    %10 = vector.load %arg14[%9, %c0_2] : memref<8x96xbf16, #tpu.memory_space<vmem>>, vector<8x32xbf16>
    %11 = vector.extract_strided_slice %10 {offsets = [0, 0], sizes = [8, 4], strides = [1, 1]} : vector<8x32xbf16> to vector<8x4xbf16>
    %c0_3 = arith.constant 0 : index
    %c32 = arith.constant 32 : index
    %12 = vector.load %arg14[%c0_3, %c32] : memref<8x96xbf16, #tpu.memory_space<vmem>>, vector<8x4xbf16>
    %c0_4 = arith.constant 0 : index
    %c64 = arith.constant 64 : index
    %13 = vector.load %arg14[%c0_4, %c64] : memref<8x96xbf16, #tpu.memory_space<vmem>>, vector<8x4xbf16>
    %cst = arith.constant dense<0.000000e+00> : vector<8x8xf32>
    %14 = tpu.matmul %11, %12, %cst {dimension_numbers = #tpu.dot_dimension_numbers<[1], [1], [0], [0], [0, 0, 1, 0], [], []>} : vector<8x4xbf16>, vector<8x4xbf16>, vector<8x8xf32> -> vector<8x8xf32>
    %cst_5 = arith.constant dense<0xFF800000> : vector<8xf32>
    %15 = vector.multi_reduction <maximumf>, %14, %cst_5 [1] : vector<8x8xf32> to vector<8xf32>
    %16 = vector.shape_cast %15 : vector<8xf32> to vector<8x1xf32>
    %17 = vector.broadcast %16 : vector<8x1xf32> to vector<8x8xf32>
    %18 = arith.subf %14, %17 : vector<8x8xf32>
    %19 = math.exp %18 : vector<8x8xf32>
    %cst_6 = arith.constant dense<0.000000e+00> : vector<8xf32>
    %20 = vector.multi_reduction <add>, %19, %cst_6 [1] : vector<8x8xf32> to vector<8xf32>
    %21 = vector.shape_cast %20 : vector<8xf32> to vector<8x1xf32>
    %22 = tpu.reciprocal %21 {approx = true} : vector<8x1xf32> -> vector<8x1xf32>
    %23 = vector.broadcast %22 : vector<8x1xf32> to vector<8x8xf32>
    %24 = arith.mulf %19, %23 : vector<8x8xf32>
    %25 = arith.truncf %24 : vector<8x8xf32> to vector<8x8xbf16>
    %cst_7 = arith.constant dense<0.000000e+00> : vector<8x4xf32>
    %26 = tpu.matmul %25, %13, %cst_7 {dimension_numbers = #tpu.dot_dimension_numbers<[1], [0], [0], [1], [0, 0, 1, 1], [], []>} : vector<8x8xbf16>, vector<8x4xbf16>, vector<8x4xf32> -> vector<8x4xf32>
    %c0_8 = arith.constant 0 : index
    %c0_9 = arith.constant 0 : index
    %27 = vector.load %arg15[%c0_8, %c0_9] : memref<8x32xf32, #tpu.memory_space<vmem>>, vector<8x4xf32>
    tpu.vector_store %arg15[%c0_8, %c0_9], %26 {strides = array<i32>} : memref<8x32xf32, #tpu.memory_space<vmem>>, vector<8x4xf32>,
    %28 = vector.extract_strided_slice %10 {offsets = [0, 4], sizes = [8, 4], strides = [1, 1]} : vector<8x32xbf16> to vector<8x4xbf16>
    %c0_10 = arith.constant 0 : index
    %c36 = arith.constant 36 : index
    %29 = vector.load %arg14[%c0_10, %c36] : memref<8x96xbf16, #tpu.memory_space<vmem>>, vector<8x4xbf16>
    %c0_11 = arith.constant 0 : index
    %c68 = arith.constant 68 : index
    %30 = vector.load %arg14[%c0_11, %c68] : memref<8x96xbf16, #tpu.memory_space<vmem>>, vector<8x4xbf16>
    %cst_12 = arith.constant dense<0.000000e+00> : vector<8x8xf32>
    %31 = tpu.matmul %28, %29, %cst_12 {dimension_numbers = #tpu.dot_dimension_numbers<[1], [1], [0], [0], [0, 0, 1, 0], [], []>} : vector<8x4xbf16>, vector<8x4xbf16>, vector<8x8xf32> -> vector<8x8xf32>
    %cst_13 = arith.constant dense<0xFF800000> : vector<8xf32>
    %32 = vector.multi_reduction <maximumf>, %31, %cst_13 [1] : vector<8x8xf32> to vector<8xf32>
    %33 = vector.shape_cast %32 : vector<8xf32> to vector<8x1xf32>
    %34 = vector.broadcast %33 : vector<8x1xf32> to vector<8x8xf32>
    %35 = arith.subf %31, %34 : vector<8x8xf32>
    %36 = math.exp %35 : vector<8x8xf32>
    %cst_14 = arith.constant dense<0.000000e+00> : vector<8xf32>
    %37 = vector.multi_reduction <add>, %36, %cst_14 [1] : vector<8x8xf32> to vector<8xf32>
    %38 = vector.shape_cast %37 : vector<8xf32> to vector<8x1xf32>
    %39 = tpu.reciprocal %38 {approx = true} : vector<8x1xf32> -> vector<8x1xf32>
    %40 = vector.broadcast %39 : vector<8x1xf32> to vector<8x8xf32>
    %41 = arith.mulf %36, %40 : vector<8x8xf32>
    %42 = arith.truncf %41 : vector<8x8xf32> to vector<8x8xbf16>
    %cst_15 = arith.constant dense<0.000000e+00> : vector<8x4xf32>
    %43 = tpu.matmul %42, %30, %cst_15 {dimension_numbers = #tpu.dot_dimension_numbers<[1], [0], [0], [1], [0, 0, 1, 1], [], []>} : vector<8x8xbf16>, vector<8x4xbf16>, vector<8x4xf32> -> vector<8x4xf32>
    %c0_16 = arith.constant 0 : index
    %c4 = arith.constant 4 : index
    %44 = vector.load %arg15[%c0_16, %c4] : memref<8x32xf32, #tpu.memory_space<vmem>>, vector<8x4xf32>
    tpu.vector_store %arg15[%c0_16, %c4], %43 {strides = array<i32>} : memref<8x32xf32, #tpu.memory_space<vmem>>, vector<8x4xf32>,
    %45 = vector.extract_strided_slice %10 {offsets = [0, 8], sizes = [8, 4], strides = [1, 1]} : vector<8x32xbf16> to vector<8x4xbf16>
    %c0_17 = arith.constant 0 : index
    %c40 = arith.constant 40 : index
    %46 = vector.load %arg14[%c0_17, %c40] : memref<8x96xbf16, #tpu.memory_space<vmem>>, vector<8x4xbf16>
    %c0_18 = arith.constant 0 : index
    %c72 = arith.constant 72 : index
    %47 = vector.load %arg14[%c0_18, %c72] : memref<8x96xbf16, #tpu.memory_space<vmem>>, vector<8x4xbf16>
    %cst_19 = arith.constant dense<0.000000e+00> : vector<8x8xf32>
    %48 = tpu.matmul %45, %46, %cst_19 {dimension_numbers = #tpu.dot_dimension_numbers<[1], [1], [0], [0], [0, 0, 1, 0], [], []>} : vector<8x4xbf16>, vector<8x4xbf16>, vector<8x8xf32> -> vector<8x8xf32>
    %cst_20 = arith.constant dense<0xFF800000> : vector<8xf32>
    %49 = vector.multi_reduction <maximumf>, %48, %cst_20 [1] : vector<8x8xf32> to vector<8xf32>
    %50 = vector.shape_cast %49 : vector<8xf32> to vector<8x1xf32>
    %51 = vector.broadcast %50 : vector<8x1xf32> to vector<8x8xf32>
    %52 = arith.subf %48, %51 : vector<8x8xf32>
    %53 = math.exp %52 : vector<8x8xf32>
    %cst_21 = arith.constant dense<0.000000e+00> : vector<8xf32>
    %54 = vector.multi_reduction <add>, %53, %cst_21 [1] : vector<8x8xf32> to vector<8xf32>
    %55 = vector.shape_cast %54 : vector<8xf32> to vector<8x1xf32>
    %56 = tpu.reciprocal %55 {approx = true} : vector<8x1xf32> -> vector<8x1xf32>
    %57 = vector.broadcast %56 : vector<8x1xf32> to vector<8x8xf32>
    %58 = arith.mulf %53, %57 : vector<8x8xf32>
    %59 = arith.truncf %58 : vector<8x8xf32> to vector<8x8xbf16>
    %cst_22 = arith.constant dense<0.000000e+00> : vector<8x4xf32>
    %60 = tpu.matmul %59, %47, %cst_22 {dimension_numbers = #tpu.dot_dimension_numbers<[1], [0], [0], [1], [0, 0, 1, 1], [], []>} : vector<8x8xbf16>, vector<8x4xbf16>, vector<8x4xf32> -> vector<8x4xf32>
    %c0_23 = arith.constant 0 : index
    %c8 = arith.constant 8 : index
    %61 = vector.load %arg15[%c0_23, %c8] : memref<8x32xf32, #tpu.memory_space<vmem>>, vector<8x4xf32>
    tpu.vector_store %arg15[%c0_23, %c8], %60 {strides = array<i32>} : memref<8x32xf32, #tpu.memory_space<vmem>>, vector<8x4xf32>,
    %62 = vector.extract_strided_slice %10 {offsets = [0, 12], sizes = [8, 4], strides = [1, 1]} : vector<8x32xbf16> to vector<8x4xbf16>
    %c0_24 = arith.constant 0 : index
    %c44 = arith.constant 44 : index
    %63 = vector.load %arg14[%c0_24, %c44] : memref<8x96xbf16, #tpu.memory_space<vmem>>, vector<8x4xbf16>
    %c0_25 = arith.constant 0 : index
    %c76 = arith.constant 76 : index
    %64 = vector.load %arg14[%c0_25, %c76] : memref<8x96xbf16, #tpu.memory_space<vmem>>, vector<8x4xbf16>
    %cst_26 = arith.constant dense<0.000000e+00> : vector<8x8xf32>
    %65 = tpu.matmul %62, %63, %cst_26 {dimension_numbers = #tpu.dot_dimension_numbers<[1], [1], [0], [0], [0, 0, 1, 0], [], []>} : vector<8x4xbf16>, vector<8x4xbf16>, vector<8x8xf32> -> vector<8x8xf32>
    %cst_27 = arith.constant dense<0xFF800000> : vector<8xf32>
    %66 = vector.multi_reduction <maximumf>, %65, %cst_27 [1] : vector<8x8xf32> to vector<8xf32>
    %67 = vector.shape_cast %66 : vector<8xf32> to vector<8x1xf32>
    %68 = vector.broadcast %67 : vector<8x1xf32> to vector<8x8xf32>
    %69 = arith.subf %65, %68 : vector<8x8xf32>
    %70 = math.exp %69 : vector<8x8xf32>
    %cst_28 = arith.constant dense<0.000000e+00> : vector<8xf32>
    %71 = vector.multi_reduction <add>, %70, %cst_28 [1] : vector<8x8xf32> to vector<8xf32>
    %72 = vector.shape_cast %71 : vector<8xf32> to vector<8x1xf32>
    %73 = tpu.reciprocal %72 {approx = true} : vector<8x1xf32> -> vector<8x1xf32>
    %74 = vector.broadcast %73 : vector<8x1xf32> to vector<8x8xf32>
    %75 = arith.mulf %70, %74 : vector<8x8xf32>
    %76 = arith.truncf %75 : vector<8x8xf32> to vector<8x8xbf16>
    %cst_29 = arith.constant dense<0.000000e+00> : vector<8x4xf32>
    %77 = tpu.matmul %76, %64, %cst_29 {dimension_numbers = #tpu.dot_dimension_numbers<[1], [0], [0], [1], [0, 0, 1, 1], [], []>} : vector<8x8xbf16>, vector<8x4xbf16>, vector<8x4xf32> -> vector<8x4xf32>
    %c0_30 = arith.constant 0 : index
    %c12 = arith.constant 12 : index
    %78 = vector.load %arg15[%c0_30, %c12] : memref<8x32xf32, #tpu.memory_space<vmem>>, vector<8x4xf32>
    tpu.vector_store %arg15[%c0_30, %c12], %77 {strides = array<i32>} : memref<8x32xf32, #tpu.memory_space<vmem>>, vector<8x4xf32>,
    %79 = vector.extract_strided_slice %10 {offsets = [0, 16], sizes = [8, 4], strides = [1, 1]} : vector<8x32xbf16> to vector<8x4xbf16>
    %c0_31 = arith.constant 0 : index
    %c48 = arith.constant 48 : index
    %80 = vector.load %arg14[%c0_31, %c48] : memref<8x96xbf16, #tpu.memory_space<vmem>>, vector<8x4xbf16>
    %c0_32 = arith.constant 0 : index
    %c80 = arith.constant 80 : index
    %81 = vector.load %arg14[%c0_32, %c80] : memref<8x96xbf16, #tpu.memory_space<vmem>>, vector<8x4xbf16>
    %cst_33 = arith.constant dense<0.000000e+00> : vector<8x8xf32>
    %82 = tpu.matmul %79, %80, %cst_33 {dimension_numbers = #tpu.dot_dimension_numbers<[1], [1], [0], [0], [0, 0, 1, 0], [], []>} : vector<8x4xbf16>, vector<8x4xbf16>, vector<8x8xf32> -> vector<8x8xf32>
    %cst_34 = arith.constant dense<0xFF800000> : vector<8xf32>
    %83 = vector.multi_reduction <maximumf>, %82, %cst_34 [1] : vector<8x8xf32> to vector<8xf32>
    %84 = vector.shape_cast %83 : vector<8xf32> to vector<8x1xf32>
    %85 = vector.broadcast %84 : vector<8x1xf32> to vector<8x8xf32>
    %86 = arith.subf %82, %85 : vector<8x8xf32>
    %87 = math.exp %86 : vector<8x8xf32>
    %cst_35 = arith.constant dense<0.000000e+00> : vector<8xf32>
    %88 = vector.multi_reduction <add>, %87, %cst_35 [1] : vector<8x8xf32> to vector<8xf32>
    %89 = vector.shape_cast %88 : vector<8xf32> to vector<8x1xf32>
    %90 = tpu.reciprocal %89 {approx = true} : vector<8x1xf32> -> vector<8x1xf32>
    %91 = vector.broadcast %90 : vector<8x1xf32> to vector<8x8xf32>
    %92 = arith.mulf %87, %91 : vector<8x8xf32>
    %93 = arith.truncf %92 : vector<8x8xf32> to vector<8x8xbf16>
    %cst_36 = arith.constant dense<0.000000e+00> : vector<8x4xf32>
    %94 = tpu.matmul %93, %81, %cst_36 {dimension_numbers = #tpu.dot_dimension_numbers<[1], [0], [0], [1], [0, 0, 1, 1], [], []>} : vector<8x8xbf16>, vector<8x4xbf16>, vector<8x4xf32> -> vector<8x4xf32>
    %c0_37 = arith.constant 0 : index
    %c16 = arith.constant 16 : index
    %95 = vector.load %arg15[%c0_37, %c16] : memref<8x32xf32, #tpu.memory_space<vmem>>, vector<8x4xf32>
    tpu.vector_store %arg15[%c0_37, %c16], %94 {strides = array<i32>} : memref<8x32xf32, #tpu.memory_space<vmem>>, vector<8x4xf32>,
    %96 = vector.extract_strided_slice %10 {offsets = [0, 20], sizes = [8, 4], strides = [1, 1]} : vector<8x32xbf16> to vector<8x4xbf16>
    %c0_38 = arith.constant 0 : index
    %c52 = arith.constant 52 : index
    %97 = vector.load %arg14[%c0_38, %c52] : memref<8x96xbf16, #tpu.memory_space<vmem>>, vector<8x4xbf16>
    %c0_39 = arith.constant 0 : index
    %c84 = arith.constant 84 : index
    %98 = vector.load %arg14[%c0_39, %c84] : memref<8x96xbf16, #tpu.memory_space<vmem>>, vector<8x4xbf16>
    %cst_40 = arith.constant dense<0.000000e+00> : vector<8x8xf32>
    %99 = tpu.matmul %96, %97, %cst_40 {dimension_numbers = #tpu.dot_dimension_numbers<[1], [1], [0], [0], [0, 0, 1, 0], [], []>} : vector<8x4xbf16>, vector<8x4xbf16>, vector<8x8xf32> -> vector<8x8xf32>
    %cst_41 = arith.constant dense<0xFF800000> : vector<8xf32>
    %100 = vector.multi_reduction <maximumf>, %99, %cst_41 [1] : vector<8x8xf32> to vector<8xf32>
    %101 = vector.shape_cast %100 : vector<8xf32> to vector<8x1xf32>
    %102 = vector.broadcast %101 : vector<8x1xf32> to vector<8x8xf32>
    %103 = arith.subf %99, %102 : vector<8x8xf32>
    %104 = math.exp %103 : vector<8x8xf32>
    %cst_42 = arith.constant dense<0.000000e+00> : vector<8xf32>
    %105 = vector.multi_reduction <add>, %104, %cst_42 [1] : vector<8x8xf32> to vector<8xf32>
    %106 = vector.shape_cast %105 : vector<8xf32> to vector<8x1xf32>
    %107 = tpu.reciprocal %106 {approx = true} : vector<8x1xf32> -> vector<8x1xf32>
    %108 = vector.broadcast %107 : vector<8x1xf32> to vector<8x8xf32>
    %109 = arith.mulf %104, %108 : vector<8x8xf32>
    %110 = arith.truncf %109 : vector<8x8xf32> to vector<8x8xbf16>
    %cst_43 = arith.constant dense<0.000000e+00> : vector<8x4xf32>
    %111 = tpu.matmul %110, %98, %cst_43 {dimension_numbers = #tpu.dot_dimension_numbers<[1], [0], [0], [1], [0, 0, 1, 1], [], []>} : vector<8x8xbf16>, vector<8x4xbf16>, vector<8x4xf32> -> vector<8x4xf32>
    %c0_44 = arith.constant 0 : index
    %c20 = arith.constant 20 : index
    %112 = vector.load %arg15[%c0_44, %c20] : memref<8x32xf32, #tpu.memory_space<vmem>>, vector<8x4xf32>
    tpu.vector_store %arg15[%c0_44, %c20], %111 {strides = array<i32>} : memref<8x32xf32, #tpu.memory_space<vmem>>, vector<8x4xf32>,
    %113 = vector.extract_strided_slice %10 {offsets = [0, 24], sizes = [8, 4], strides = [1, 1]} : vector<8x32xbf16> to vector<8x4xbf16>
    %c0_45 = arith.constant 0 : index
    %c56 = arith.constant 56 : index
    %114 = vector.load %arg14[%c0_45, %c56] : memref<8x96xbf16, #tpu.memory_space<vmem>>, vector<8x4xbf16>
    %c0_46 = arith.constant 0 : index
    %c88 = arith.constant 88 : index
    %115 = vector.load %arg14[%c0_46, %c88] : memref<8x96xbf16, #tpu.memory_space<vmem>>, vector<8x4xbf16>
    %cst_47 = arith.constant dense<0.000000e+00> : vector<8x8xf32>
    %116 = tpu.matmul %113, %114, %cst_47 {dimension_numbers = #tpu.dot_dimension_numbers<[1], [1], [0], [0], [0, 0, 1, 0], [], []>} : vector<8x4xbf16>, vector<8x4xbf16>, vector<8x8xf32> -> vector<8x8xf32>
    %cst_48 = arith.constant dense<0xFF800000> : vector<8xf32>
    %117 = vector.multi_reduction <maximumf>, %116, %cst_48 [1] : vector<8x8xf32> to vector<8xf32>
    %118 = vector.shape_cast %117 : vector<8xf32> to vector<8x1xf32>
    %119 = vector.broadcast %118 : vector<8x1xf32> to vector<8x8xf32>
    %120 = arith.subf %116, %119 : vector<8x8xf32>
    %121 = math.exp %120 : vector<8x8xf32>
    %cst_49 = arith.constant dense<0.000000e+00> : vector<8xf32>
    %122 = vector.multi_reduction <add>, %121, %cst_49 [1] : vector<8x8xf32> to vector<8xf32>
    %123 = vector.shape_cast %122 : vector<8xf32> to vector<8x1xf32>
    %124 = tpu.reciprocal %123 {approx = true} : vector<8x1xf32> -> vector<8x1xf32>
    %125 = vector.broadcast %124 : vector<8x1xf32> to vector<8x8xf32>
    %126 = arith.mulf %121, %125 : vector<8x8xf32>
    %127 = arith.truncf %126 : vector<8x8xf32> to vector<8x8xbf16>
    %cst_50 = arith.constant dense<0.000000e+00> : vector<8x4xf32>
    %128 = tpu.matmul %127, %115, %cst_50 {dimension_numbers = #tpu.dot_dimension_numbers<[1], [0], [0], [1], [0, 0, 1, 1], [], []>} : vector<8x8xbf16>, vector<8x4xbf16>, vector<8x4xf32> -> vector<8x4xf32>
    %c0_51 = arith.constant 0 : index
    %c24 = arith.constant 24 : index
    %129 = vector.load %arg15[%c0_51, %c24] : memref<8x32xf32, #tpu.memory_space<vmem>>, vector<8x4xf32>
    tpu.vector_store %arg15[%c0_51, %c24], %128 {strides = array<i32>} : memref<8x32xf32, #tpu.memory_space<vmem>>, vector<8x4xf32>,
    %130 = vector.extract_strided_slice %10 {offsets = [0, 28], sizes = [8, 4], strides = [1, 1]} : vector<8x32xbf16> to vector<8x4xbf16>
    %c0_52 = arith.constant 0 : index
    %c60 = arith.constant 60 : index
    %131 = vector.load %arg14[%c0_52, %c60] : memref<8x96xbf16, #tpu.memory_space<vmem>>, vector<8x4xbf16>
    %c0_53 = arith.constant 0 : index
    %c92 = arith.constant 92 : index
    %132 = vector.load %arg14[%c0_53, %c92] : memref<8x96xbf16, #tpu.memory_space<vmem>>, vector<8x4xbf16>
    %cst_54 = arith.constant dense<0.000000e+00> : vector<8x8xf32>
    %133 = tpu.matmul %130, %131, %cst_54 {dimension_numbers = #tpu.dot_dimension_numbers<[1], [1], [0], [0], [0, 0, 1, 0], [], []>} : vector<8x4xbf16>, vector<8x4xbf16>, vector<8x8xf32> -> vector<8x8xf32>
    %cst_55 = arith.constant dense<0xFF800000> : vector<8xf32>
    %134 = vector.multi_reduction <maximumf>, %133, %cst_55 [1] : vector<8x8xf32> to vector<8xf32>
    %135 = vector.shape_cast %134 : vector<8xf32> to vector<8x1xf32>
    %136 = vector.broadcast %135 : vector<8x1xf32> to vector<8x8xf32>
    %137 = arith.subf %133, %136 : vector<8x8xf32>
    %138 = math.exp %137 : vector<8x8xf32>
    %cst_56 = arith.constant dense<0.000000e+00> : vector<8xf32>
    %139 = vector.multi_reduction <add>, %138, %cst_56 [1] : vector<8x8xf32> to vector<8xf32>
    %140 = vector.shape_cast %139 : vector<8xf32> to vector<8x1xf32>
    %141 = tpu.reciprocal %140 {approx = true} : vector<8x1xf32> -> vector<8x1xf32>
    %142 = vector.broadcast %141 : vector<8x1xf32> to vector<8x8xf32>
    %143 = arith.mulf %138, %142 : vector<8x8xf32>
    %144 = arith.truncf %143 : vector<8x8xf32> to vector<8x8xbf16>
    %cst_57 = arith.constant dense<0.000000e+00> : vector<8x4xf32>
    %145 = tpu.matmul %144, %132, %cst_57 {dimension_numbers = #tpu.dot_dimension_numbers<[1], [0], [0], [1], [0, 0, 1, 1], [], []>} : vector<8x8xbf16>, vector<8x4xbf16>, vector<8x4xf32> -> vector<8x4xf32>
    %c0_58 = arith.constant 0 : index
    %c28 = arith.constant 28 : index
    %146 = vector.load %arg15[%c0_58, %c28] : memref<8x32xf32, #tpu.memory_space<vmem>>, vector<8x4xf32>
    tpu.vector_store %arg15[%c0_58, %c28], %145 {strides = array<i32>} : memref<8x32xf32, #tpu.memory_space<vmem>>, vector<8x4xf32>,
    %c0_59 = arith.constant 0 : index
    %c0_60 = arith.constant 0 : index
    %147 = vector.load %arg15[%c0_59, %c0_60] : memref<8x32xf32, #tpu.memory_space<vmem>>, vector<8x32xf32>
    %148 = arith.truncf %147 : vector<8x32xf32> to vector<8x32xbf16>
    %c0_61 = arith.constant 0 : index
    %c0_62 = arith.constant 0 : index
    %149 = vector.load %arg4[%c0_61, %c0_62] : memref<32x32xbf16, #tpu.memory_space<vmem>>, vector<32x32xbf16>
    %cst_63 = arith.constant dense<0.000000e+00> : vector<8x32xf32>
    %150 = tpu.matmul %148, %149, %cst_63 {dimension_numbers = #tpu.dot_dimension_numbers<[1], [0], [0], [1], [0, 0, 1, 1], [], []>} : vector<8x32xbf16>, vector<32x32xbf16>, vector<8x32xf32> -> vector<8x32xf32>
    %151 = arith.addf %150, %8 : vector<8x32xf32>
    %c0_64 = arith.constant 0 : index
    %c0_65 = arith.constant 0 : index
    %152 = vector.load %arg5[%c0_64, %c0_65] : memref<1x32xf32, #tpu.memory_space<vmem>>, vector<1x32xf32>
    %c0_66 = arith.constant 0 : index
    %c0_67 = arith.constant 0 : index
    %153 = vector.load %arg6[%c0_66, %c0_67] : memref<1x32xf32, #tpu.memory_space<vmem>>, vector<1x32xf32>
    %cst_68 = arith.constant dense<0.000000e+00> : vector<8xf32>
    %154 = vector.multi_reduction <add>, %151, %cst_68 [1] : vector<8x32xf32> to vector<8xf32>
    %155 = vector.shape_cast %154 : vector<8xf32> to vector<8x1xf32>
    %cst_69 = arith.constant 3.200000e+01 : f32
    %156 = vector.broadcast %cst_69 : f32 to vector<8x1xf32>
    %157 = arith.divf %155, %156 : vector<8x1xf32>
    %158 = vector.broadcast %157 : vector<8x1xf32> to vector<8x32xf32>
    %159 = arith.subf %151, %158 : vector<8x32xf32>
    %160 = arith.mulf %159, %159 : vector<8x32xf32>
    %cst_70 = arith.constant dense<0.000000e+00> : vector<8xf32>
    %161 = vector.multi_reduction <add>, %160, %cst_70 [1] : vector<8x32xf32> to vector<8xf32>
    %162 = vector.shape_cast %161 : vector<8xf32> to vector<8x1xf32>
    %cst_71 = arith.constant 3.200000e+01 : f32
    %163 = vector.broadcast %cst_71 : f32 to vector<8x1xf32>
    %164 = arith.divf %162, %163 : vector<8x1xf32>
    %cst_72 = arith.constant 9.99999974E-6 : f32
    %165 = vector.broadcast %cst_72 : f32 to vector<8x1xf32>
    %166 = arith.addf %164, %165 : vector<8x1xf32>
    %167 = math.rsqrt %166 : vector<8x1xf32>
    %168 = vector.broadcast %167 : vector<8x1xf32> to vector<8x32xf32>
    %169 = arith.mulf %159, %168 : vector<8x32xf32>
    %170 = vector.broadcast %152 : vector<1x32xf32> to vector<8x32xf32>
    %171 = arith.mulf %169, %170 : vector<8x32xf32>
    %172 = vector.broadcast %153 : vector<1x32xf32> to vector<8x32xf32>
    %173 = arith.addf %171, %172 : vector<8x32xf32>
    %174 = arith.truncf %173 : vector<8x32xf32> to vector<8x32xbf16>
    %c0_73 = arith.constant 0 : index
    %c0_74 = arith.constant 0 : index
    %175 = vector.load %arg7[%c0_73, %c0_74] : memref<32x64xbf16, #tpu.memory_space<vmem>>, vector<32x64xbf16>
    %cst_75 = arith.constant dense<0.000000e+00> : vector<8x64xf32>
    %176 = tpu.matmul %174, %175, %cst_75 {dimension_numbers = #tpu.dot_dimension_numbers<[1], [0], [0], [1], [0, 0, 1, 1], [], []>} : vector<8x32xbf16>, vector<32x64xbf16>, vector<8x64xf32> -> vector<8x64xf32>
    %c0_76 = arith.constant 0 : index
    %c0_77 = arith.constant 0 : index
    %177 = vector.load %arg8[%c0_76, %c0_77] : memref<1x64xf32, #tpu.memory_space<vmem>>, vector<1x64xf32>
    %178 = vector.broadcast %177 : vector<1x64xf32> to vector<8x64xf32>
    %179 = arith.addf %176, %178 : vector<8x64xf32>
    %cst_78 = arith.constant 5.000000e-01 : f32
    %180 = vector.broadcast %cst_78 : f32 to vector<8x64xf32>
    %181 = arith.mulf %180, %179 : vector<8x64xf32>
    %cst_79 = arith.constant 0.707106769 : f32
    %182 = vector.broadcast %cst_79 : f32 to vector<8x64xf32>
    %183 = arith.mulf %179, %182 : vector<8x64xf32>
    %184 = math.erf %183 : vector<8x64xf32>
    %cst_80 = arith.constant 1.000000e+00 : f32
    %185 = vector.broadcast %cst_80 : f32 to vector<8x64xf32>
    %186 = arith.addf %185, %184 : vector<8x64xf32>
    %187 = arith.mulf %181, %186 : vector<8x64xf32>
    %188 = arith.truncf %187 : vector<8x64xf32> to vector<8x64xbf16>
    %c0_81 = arith.constant 0 : index
    %c0_82 = arith.constant 0 : index
    %189 = vector.load %arg9[%c0_81, %c0_82] : memref<64x32xbf16, #tpu.memory_space<vmem>>, vector<64x32xbf16>
    %cst_83 = arith.constant dense<0.000000e+00> : vector<8x32xf32>
    %190 = tpu.matmul %188, %189, %cst_83 {dimension_numbers = #tpu.dot_dimension_numbers<[1], [0], [0], [1], [0, 0, 1, 1], [], []>} : vector<8x64xbf16>, vector<64x32xbf16>, vector<8x32xf32> -> vector<8x32xf32>
    %c0_84 = arith.constant 0 : index
    %c0_85 = arith.constant 0 : index
    %191 = vector.load %arg10[%c0_84, %c0_85] : memref<1x32xf32, #tpu.memory_space<vmem>>, vector<1x32xf32>
    %192 = vector.broadcast %191 : vector<1x32xf32> to vector<8x32xf32>
    %193 = arith.addf %190, %192 : vector<8x32xf32>
    %194 = arith.addf %193, %173 : vector<8x32xf32>
    %c0_86 = arith.constant 0 : index
    %c0_87 = arith.constant 0 : index
    %195 = vector.load %arg11[%c0_86, %c0_87] : memref<1x32xf32, #tpu.memory_space<vmem>>, vector<1x32xf32>
    %c0_88 = arith.constant 0 : index
    %c0_89 = arith.constant 0 : index
    %196 = vector.load %arg12[%c0_88, %c0_89] : memref<1x32xf32, #tpu.memory_space<vmem>>, vector<1x32xf32>
    %cst_90 = arith.constant dense<0.000000e+00> : vector<8xf32>
    %197 = vector.multi_reduction <add>, %194, %cst_90 [1] : vector<8x32xf32> to vector<8xf32>
    %198 = vector.shape_cast %197 : vector<8xf32> to vector<8x1xf32>
    %cst_91 = arith.constant 3.200000e+01 : f32
    %199 = vector.broadcast %cst_91 : f32 to vector<8x1xf32>
    %200 = arith.divf %198, %199 : vector<8x1xf32>
    %201 = vector.broadcast %200 : vector<8x1xf32> to vector<8x32xf32>
    %202 = arith.subf %194, %201 : vector<8x32xf32>
    %203 = arith.mulf %202, %202 : vector<8x32xf32>
    %cst_92 = arith.constant dense<0.000000e+00> : vector<8xf32>
    %204 = vector.multi_reduction <add>, %203, %cst_92 [1] : vector<8x32xf32> to vector<8xf32>
    %205 = vector.shape_cast %204 : vector<8xf32> to vector<8x1xf32>
    %cst_93 = arith.constant 3.200000e+01 : f32
    %206 = vector.broadcast %cst_93 : f32 to vector<8x1xf32>
    %207 = arith.divf %205, %206 : vector<8x1xf32>
    %cst_94 = arith.constant 9.99999974E-6 : f32
    %208 = vector.broadcast %cst_94 : f32 to vector<8x1xf32>
    %209 = arith.addf %207, %208 : vector<8x1xf32>
    %210 = math.rsqrt %209 : vector<8x1xf32>
    %211 = vector.broadcast %210 : vector<8x1xf32> to vector<8x32xf32>
    %212 = arith.mulf %202, %211 : vector<8x32xf32>
    %213 = vector.broadcast %195 : vector<1x32xf32> to vector<8x32xf32>
    %214 = arith.mulf %212, %213 : vector<8x32xf32>
    %215 = vector.broadcast %196 : vector<1x32xf32> to vector<8x32xf32>
    %216 = arith.addf %214, %215 : vector<8x32xf32>
    %217 = arith.truncf %216 : vector<8x32xf32> to vector<8x32xbf16>
    %c0_95 = arith.constant 0 : index
    %c0_96 = arith.constant 0 : index
    %c0_97 = arith.constant 0 : index
    %218 = vector.load %arg13[%c0_95, %c0_96, %c0_97] : memref<1x8x32xbf16, #tpu.memory_space<vmem>>, vector<1x8x32xbf16>
    %219 = vector.shape_cast %218 : vector<1x8x32xbf16> to vector<8x32xbf16>
    %220 = vector.shape_cast %217 : vector<8x32xbf16> to vector<1x8x32xbf16>
    tpu.vector_store %arg13[%c0_95, %c0_96, %c0_97], %220 {strides = array<i32>} : memref<1x8x32xbf16, #tpu.memory_space<vmem>>, vector<1x8x32xbf16>,
    return
  }
  func.func @transform_0(%arg0: i32, %arg1: i32) -> (i32, i32, i32) {
    %c0_i32 = arith.constant 0 : i32
    %c0_i32_0 = arith.constant 0 : i32
    %c0_i32_1 = arith.constant 0 : i32
    return %arg0, %c0_i32, %c0_i32_0 : i32, i32, i32
  }
  func.func @transform_1(%arg0: i32, %arg1: i32) -> (i32, i32) {
    %c0_i32 = arith.constant 0 : i32
    %c0_i32_0 = arith.constant 0 : i32
    %c0_i32_1 = arith.constant 0 : i32
    return %c0_i32, %c0_i32_0 : i32, i32
  }
  func.func @transform_2(%arg0: i32, %arg1: i32) -> (i32, i32) {
    %c0_i32 = arith.constant 0 : i32
    %c0_i32_0 = arith.constant 0 : i32
    %c0_i32_1 = arith.constant 0 : i32
    return %c0_i32, %c0_i32_0 : i32, i32
  }
  func.func @transform_3(%arg0: i32, %arg1: i32) -> (i32, i32) {
    %c0_i32 = arith.constant 0 : i32
    %c0_i32_0 = arith.constant 0 : i32
    %c0_i32_1 = arith.constant 0 : i32
    return %c0_i32, %c0_i32_0 : i32, i32
  }
  func.func @transform_4(%arg0: i32, %arg1: i32) -> (i32, i32) {
    %c0_i32 = arith.constant 0 : i32
    %c0_i32_0 = arith.constant 0 : i32
    %c0_i32_1 = arith.constant 0 : i32
    return %c0_i32, %c0_i32_0 : i32, i32
  }
  func.func @transform_5(%arg0: i32, %arg1: i32) -> (i32, i32) {
    %c0_i32 = arith.constant 0 : i32
    %c0_i32_0 = arith.constant 0 : i32
    %c0_i32_1 = arith.constant 0 : i32
    return %c0_i32, %c0_i32_0 : i32, i32
  }
  func.func @transform_6(%arg0: i32, %arg1: i32) -> (i32, i32) {
    %c0_i32 = arith.constant 0 : i32
    %c0_i32_0 = arith.constant 0 : i32
    %c0_i32_1 = arith.constant 0 : i32
    return %c0_i32, %c0_i32_0 : i32, i32
  }
  func.func @transform_7(%arg0: i32, %arg1: i32) -> (i32, i32) {
    %c0_i32 = arith.constant 0 : i32
    %c0_i32_0 = arith.constant 0 : i32
    %c0_i32_1 = arith.constant 0 : i32
    return %c0_i32, %c0_i32_0 : i32, i32
  }
  func.func @transform_8(%arg0: i32, %arg1: i32) -> (i32, i32) {
    %c0_i32 = arith.constant 0 : i32
    %c0_i32_0 = arith.constant 0 : i32
    %c0_i32_1 = arith.constant 0 : i32
    return %c0_i32, %c0_i32_0 : i32, i32
  }
  func.func @transform_9(%arg0: i32, %arg1: i32) -> (i32, i32) {
    %c0_i32 = arith.constant 0 : i32
    %c0_i32_0 = arith.constant 0 : i32
    %c0_i32_1 = arith.constant 0 : i32
    return %c0_i32, %c0_i32_0 : i32, i32
  }
  func.func @transform_10(%arg0: i32, %arg1: i32) -> (i32, i32) {
    %c0_i32 = arith.constant 0 : i32
    %c0_i32_0 = arith.constant 0 : i32
    %c0_i32_1 = arith.constant 0 : i32
    return %c0_i32, %c0_i32_0 : i32, i32
  }
  func.func @transform_11(%arg0: i32, %arg1: i32) -> (i32, i32, i32) {
    %c0_i32 = arith.constant 0 : i32
    %c0_i32_0 = arith.constant 0 : i32
    return %arg0, %arg1, %c0_i32 : i32, i32, i32
  }
}

module attributes {stable_mosaic.version = 11 : i64} {
  func.func @transformer_block_kernel(%arg0: i32, %arg1: i32, %arg2: memref<1x8x32xbf16, #tpu.memory_space<vmem>>, %arg3: memref<32x96xbf16, #tpu.memory_space<vmem>>, %arg4: memref<32x32xbf16, #tpu.memory_space<vmem>>, %arg5: memref<1x32xf32, #tpu.memory_space<vmem>>, %arg6: memref<1x32xf32, #tpu.memory_space<vmem>>, %arg7: memref<32x64xbf16, #tpu.memory_space<vmem>>, %arg8: memref<1x64xf32, #tpu.memory_space<vmem>>, %arg9: memref<64x32xbf16, #tpu.memory_space<vmem>>, %arg10: memref<1x32xf32, #tpu.memory_space<vmem>>, %arg11: memref<1x32xf32, #tpu.memory_space<vmem>>, %arg12: memref<1x32xf32, #tpu.memory_space<vmem>>, %arg13: memref<1x8x32xbf16, #tpu.memory_space<vmem>>, %arg14: memref<8x96xbf16, #tpu.memory_space<vmem>>, %arg15: memref<8x32xf32, #tpu.memory_space<vmem>>) attributes {dimension_semantics = [#tpu.dimension_semantics<parallel>, #tpu.dimension_semantics<arbitrary>], iteration_bounds = array<i64: 2, 1>, scalar_prefetch = 0 : i64, scratch_operands = 2 : i64, tpu.core_type = #tpu.core_type<tc>, window_params = [{pipeline_mode = #tpu.pipeline_mode<synchronous>, transform_indices = @transform_0, window_bounds = array<i64: 1, 8, 32>}, {pipeline_mode = #tpu.pipeline_mode<synchronous>, transform_indices = @transform_1, window_bounds = array<i64: 32, 96>}, {pipeline_mode = #tpu.pipeline_mode<synchronous>, transform_indices = @transform_2, window_bounds = array<i64: 32, 32>}, {pipeline_mode = #tpu.pipeline_mode<synchronous>, transform_indices = @transform_3, window_bounds = array<i64: 1, 32>}, {pipeline_mode = #tpu.pipeline_mode<synchronous>, transform_indices = @transform_4, window_bounds = array<i64: 1, 32>}, {pipeline_mode = #tpu.pipeline_mode<synchronous>, transform_indices = @transform_5, window_bounds = array<i64: 32, 64>}, {pipeline_mode = #tpu.pipeline_mode<synchronous>, transform_indices = @transform_6, window_bounds = array<i64: 1, 64>}, {pipeline_mode = #tpu.pipeline_mode<synchronous>, transform_indices = @transform_7, window_bounds = array<i64: 64, 32>}, {pipeline_mode = #tpu.pipeline_mode<synchronous>, transform_indices = @transform_8, window_bounds = array<i64: 1, 32>}, {pipeline_mode = #tpu.pipeline_mode<synchronous>, transform_indices = @transform_9, window_bounds = array<i64: 1, 32>}, {pipeline_mode = #tpu.pipeline_mode<synchronous>, transform_indices = @transform_10, window_bounds = array<i64: 1, 32>}, {transform_indices = @transform_11, window_bounds = array<i64: 1, 8, 32>}]} {
    %c0_i32 = arith.constant 0 : i32
    %0 = arith.cmpi eq, %arg1, %c0_i32 : i32
    %1 = arith.extui %0 : i1 to i32
    %c0_i32_0 = arith.constant 0 : i32
    %2 = arith.cmpi ne, %1, %c0_i32_0 : i32
    scf.if %2 {
      %c0_98 = arith.constant 0 : index
      %c0_99 = arith.constant 0 : index
      %c0_100 = arith.constant 0 : index
      %221 = vector.load %arg2[%c0_98, %c0_99, %c0_100] : memref<1x8x32xbf16, #tpu.memory_space<vmem>>, vector<1x8x32xbf16>
      %222 = vector.shape_cast %221 : vector<1x8x32xbf16> to vector<8x32xbf16>
      %c0_101 = arith.constant 0 : index
      %c0_102 = arith.constant 0 : index
      %223 = vector.load %arg3[%c0_101, %c0_102] : memref<32x96xbf16, #tpu.memory_space<vmem>>, vector<32x96xbf16>
      %cst_103 = arith.constant dense<0.000000e+00> : vector<8x96xf32>
      %224 = tpu.matmul %222, %223, %cst_103 {dimension_numbers = #tpu.dot_dimension_numbers<[1], [0], [0], [1], [0, 0, 1, 1], [], []>} : vector<8x32xbf16>, vector<32x96xbf16>, vector<8x96xf32> -> vector<8x96xf32>
      %225 = arith.truncf %224 : vector<8x96xf32> to vector<8x96xbf16>
      %c0_104 = arith.constant 0 : index
      %c0_105 = arith.constant 0 : index
      %226 = vector.load %arg14[%c0_104, %c0_105] : memref<8x96xbf16, #tpu.memory_space<vmem>>, vector<8x96xbf16>
      tpu.vector_store %arg14[%c0_104, %c0_105], %225 {strides = array<i32>} : memref<8x96xbf16, #tpu.memory_space<vmem>>, vector<8x96xbf16>,
    } else {
    }
    %c8_i32 = arith.constant 8 : i32
    %3 = arith.muli %arg1, %c8_i32 : i32
    %4 = tpu.assume_multiple %3, 8 : i32
    %c0 = arith.constant 0 : index
    %5 = arith.index_cast %4 : i32 to index
    %c0_1 = arith.constant 0 : index
    %6 = vector.load %arg2[%c0, %5, %c0_1] : memref<1x8x32xbf16, #tpu.memory_space<vmem>>, vector<1x8x32xbf16>
    %7 = vector.shape_cast %6 : vector<1x8x32xbf16> to vector<8x32xbf16>
    %8 = arith.extf %7 : vector<8x32xbf16> to vector<8x32xf32>
    %9 = arith.index_cast %4 : i32 to index
    %c0_2 = arith.constant 0 : index
    %10 = vector.load %arg14[%9, %c0_2] : memref<8x96xbf16, #tpu.memory_space<vmem>>, vector<8x32xbf16>
    %11 = vector.extract_strided_slice %10 {offsets = [0, 0], sizes = [8, 4], strides = [1, 1]} : vector<8x32xbf16> to vector<8x4xbf16>
    %c0_3 = arith.constant 0 : index
    %c32 = arith.constant 32 : index
    %12 = vector.load %arg14[%c0_3, %c32] : memref<8x96xbf16, #tpu.memory_space<vmem>>, vector<8x4xbf16>
    %c0_4 = arith.constant 0 : index
    %c64 = arith.constant 64 : index
    %13 = vector.load %arg14[%c0_4, %c64] : memref<8x96xbf16, #tpu.memory_space<vmem>>, vector<8x4xbf16>
    %cst = arith.constant dense<0.000000e+00> : vector<8x8xf32>
    %14 = tpu.matmul %11, %12, %cst {dimension_numbers = #tpu.dot_dimension_numbers<[1], [1], [0], [0], [0, 0, 1, 0], [], []>} : vector<8x4xbf16>, vector<8x4xbf16>, vector<8x8xf32> -> vector<8x8xf32>
    %cst_5 = arith.constant dense<0xFF800000> : vector<8xf32>
    %15 = vector.multi_reduction <maximumf>, %14, %cst_5 [1] : vector<8x8xf32> to vector<8xf32>
    %16 = vector.shape_cast %15 : vector<8xf32> to vector<8x1xf32>
    %17 = vector.broadcast %16 : vector<8x1xf32> to vector<8x8xf32>
    %18 = arith.subf %14, %17 : vector<8x8xf32>
    %19 = math.exp %18 : vector<8x8xf32>
    %cst_6 = arith.constant dense<0.000000e+00> : vector<8xf32>
    %20 = vector.multi_reduction <add>, %19, %cst_6 [1] : vector<8x8xf32> to vector<8xf32>
    %21 = vector.shape_cast %20 : vector<8xf32> to vector<8x1xf32>
    %22 = tpu.reciprocal %21 {approx = true} : vector<8x1xf32> -> vector<8x1xf32>
    %23 = vector.broadcast %22 : vector<8x1xf32> to vector<8x8xf32>
    %24 = arith.mulf %19, %23 : vector<8x8xf32>
    %25 = arith.truncf %24 : vector<8x8xf32> to vector<8x8xbf16>
    %cst_7 = arith.constant dense<0.000000e+00> : vector<8x4xf32>
    %26 = tpu.matmul %25, %13, %cst_7 {dimension_numbers = #tpu.dot_dimension_numbers<[1], [0], [0], [1], [0, 0, 1, 1], [], []>} : vector<8x8xbf16>, vector<8x4xbf16>, vector<8x4xf32> -> vector<8x4xf32>
    %c0_8 = arith.constant 0 : index
    %c0_9 = arith.constant 0 : index
    %27 = vector.load %arg15[%c0_8, %c0_9] : memref<8x32xf32, #tpu.memory_space<vmem>>, vector<8x4xf32>
    tpu.vector_store %arg15[%c0_8, %c0_9], %26 {strides = array<i32>} : memref<8x32xf32, #tpu.memory_space<vmem>>, vector<8x4xf32>,
    %28 = vector.extract_strided_slice %10 {offsets = [0, 4], sizes = [8, 4], strides = [1, 1]} : vector<8x32xbf16> to vector<8x4xbf16>
    %c0_10 = arith.constant 0 : index
    %c36 = arith.constant 36 : index
    %29 = vector.load %arg14[%c0_10, %c36] : memref<8x96xbf16, #tpu.memory_space<vmem>>, vector<8x4xbf16>
    %c0_11 = arith.constant 0 : index
    %c68 = arith.constant 68 : index
    %30 = vector.load %arg14[%c0_11, %c68] : memref<8x96xbf16, #tpu.memory_space<vmem>>, vector<8x4xbf16>
    %cst_12 = arith.constant dense<0.000000e+00> : vector<8x8xf32>
    %31 = tpu.matmul %28, %29, %cst_12 {dimension_numbers = #tpu.dot_dimension_numbers<[1], [1], [0], [0], [0, 0, 1, 0], [], []>} : vector<8x4xbf16>, vector<8x4xbf16>, vector<8x8xf32> -> vector<8x8xf32>
    %cst_13 = arith.constant dense<0xFF800000> : vector<8xf32>
    %32 = vector.multi_reduction <maximumf>, %31, %cst_13 [1] : vector<8x8xf32> to vector<8xf32>
    %33 = vector.shape_cast %32 : vector<8xf32> to vector<8x1xf32>
    %34 = vector.broadcast %33 : vector<8x1xf32> to vector<8x8xf32>
    %35 = arith.subf %31, %34 : vector<8x8xf32>
    %36 = math.exp %35 : vector<8x8xf32>
    %cst_14 = arith.constant dense<0.000000e+00> : vector<8xf32>
    %37 = vector.multi_reduction <add>, %36, %cst_14 [1] : vector<8x8xf32> to vector<8xf32>
    %38 = vector.shape_cast %37 : vector<8xf32> to vector<8x1xf32>
    %39 = tpu.reciprocal %38 {approx = true} : vector<8x1xf32> -> vector<8x1xf32>
    %40 = vector.broadcast %39 : vector<8x1xf32> to vector<8x8xf32>
    %41 = arith.mulf %36, %40 : vector<8x8xf32>
    %42 = arith.truncf %41 : vector<8x8xf32> to vector<8x8xbf16>
    %cst_15 = arith.constant dense<0.000000e+00> : vector<8x4xf32>
    %43 = tpu.matmul %42, %30, %cst_15 {dimension_numbers = #tpu.dot_dimension_numbers<[1], [0], [0], [1], [0, 0, 1, 1], [], []>} : vector<8x8xbf16>, vector<8x4xbf16>, vector<8x4xf32> -> vector<8x4xf32>
    %c0_16 = arith.constant 0 : index
    %c4 = arith.constant 4 : index
    %44 = vector.load %arg15[%c0_16, %c4] : memref<8x32xf32, #tpu.memory_space<vmem>>, vector<8x4xf32>
    tpu.vector_store %arg15[%c0_16, %c4], %43 {strides = array<i32>} : memref<8x32xf32, #tpu.memory_space<vmem>>, vector<8x4xf32>,
    %45 = vector.extract_strided_slice %10 {offsets = [0, 8], sizes = [8, 4], strides = [1, 1]} : vector<8x32xbf16> to vector<8x4xbf16>
    %c0_17 = arith.constant 0 : index
    %c40 = arith.constant 40 : index
    %46 = vector.load %arg14[%c0_17, %c40] : memref<8x96xbf16, #tpu.memory_space<vmem>>, vector<8x4xbf16>
    %c0_18 = arith.constant 0 : index
    %c72 = arith.constant 72 : index
    %47 = vector.load %arg14[%c0_18, %c72] : memref<8x96xbf16, #tpu.memory_space<vmem>>, vector<8x4xbf16>
    %cst_19 = arith.constant dense<0.000000e+00> : vector<8x8xf32>
    %48 = tpu.matmul %45, %46, %cst_19 {dimension_numbers = #tpu.dot_dimension_numbers<[1], [1], [0], [0], [0, 0, 1, 0], [], []>} : vector<8x4xbf16>, vector<8x4xbf16>, vector<8x8xf32> -> vector<8x8xf32>
    %cst_20 = arith.constant dense<0xFF800000> : vector<8xf32>
    %49 = vector.multi_reduction <maximumf>, %48, %cst_20 [1] : vector<8x8xf32> to vector<8xf32>
    %50 = vector.shape_cast %49 : vector<8xf32> to vector<8x1xf32>
    %51 = vector.broadcast %50 : vector<8x1xf32> to vector<8x8xf32>
    %52 = arith.subf %48, %51 : vector<8x8xf32>
    %53 = math.exp %52 : vector<8x8xf32>
    %cst_21 = arith.constant dense<0.000000e+00> : vector<8xf32>
    %54 = vector.multi_reduction <add>, %53, %cst_21 [1] : vector<8x8xf32> to vector<8xf32>
    %55 = vector.shape_cast %54 : vector<8xf32> to vector<8x1xf32>
    %56 = tpu.reciprocal %55 {approx = true} : vector<8x1xf32> -> vector<8x1xf32>
    %57 = vector.broadcast %56 : vector<8x1xf32> to vector<8x8xf32>
    %58 = arith.mulf %53, %57 : vector<8x8xf32>
    %59 = arith.truncf %58 : vector<8x8xf32> to vector<8x8xbf16>
    %cst_22 = arith.constant dense<0.000000e+00> : vector<8x4xf32>
    %60 = tpu.matmul %59, %47, %cst_22 {dimension_numbers = #tpu.dot_dimension_numbers<[1], [0], [0], [1], [0, 0, 1, 1], [], []>} : vector<8x8xbf16>, vector<8x4xbf16>, vector<8x4xf32> -> vector<8x4xf32>
    %c0_23 = arith.constant 0 : index
    %c8 = arith.constant 8 : index
    %61 = vector.load %arg15[%c0_23, %c8] : memref<8x32xf32, #tpu.memory_space<vmem>>, vector<8x4xf32>
    tpu.vector_store %arg15[%c0_23, %c8], %60 {strides = array<i32>} : memref<8x32xf32, #tpu.memory_space<vmem>>, vector<8x4xf32>,
    %62 = vector.extract_strided_slice %10 {offsets = [0, 12], sizes = [8, 4], strides = [1, 1]} : vector<8x32xbf16> to vector<8x4xbf16>
    %c0_24 = arith.constant 0 : index
    %c44 = arith.constant 44 : index
    %63 = vector.load %arg14[%c0_24, %c44] : memref<8x96xbf16, #tpu.memory_space<vmem>>, vector<8x4xbf16>
    %c0_25 = arith.constant 0 : index
    %c76 = arith.constant 76 : index
    %64 = vector.load %arg14[%c0_25, %c76] : memref<8x96xbf16, #tpu.memory_space<vmem>>, vector<8x4xbf16>
    %cst_26 = arith.constant dense<0.000000e+00> : vector<8x8xf32>
    %65 = tpu.matmul %62, %63, %cst_26 {dimension_numbers = #tpu.dot_dimension_numbers<[1], [1], [0], [0], [0, 0, 1, 0], [], []>} : vector<8x4xbf16>, vector<8x4xbf16>, vector<8x8xf32> -> vector<8x8xf32>
    %cst_27 = arith.constant dense<0xFF800000> : vector<8xf32>
    %66 = vector.multi_reduction <maximumf>, %65, %cst_27 [1] : vector<8x8xf32> to vector<8xf32>
    %67 = vector.shape_cast %66 : vector<8xf32> to vector<8x1xf32>
    %68 = vector.broadcast %67 : vector<8x1xf32> to vector<8x8xf32>
    %69 = arith.subf %65, %68 : vector<8x8xf32>
    %70 = math.exp %69 : vector<8x8xf32>
    %cst_28 = arith.constant dense<0.000000e+00> : vector<8xf32>
    %71 = vector.multi_reduction <add>, %70, %cst_28 [1] : vector<8x8xf32> to vector<8xf32>
    %72 = vector.shape_cast %71 : vector<8xf32> to vector<8x1xf32>
    %73 = tpu.reciprocal %72 {approx = true} : vector<8x1xf32> -> vector<8x1xf32>
    %74 = vector.broadcast %73 : vector<8x1xf32> to vector<8x8xf32>
    %75 = arith.mulf %70, %74 : vector<8x8xf32>
    %76 = arith.truncf %75 : vector<8x8xf32> to vector<8x8xbf16>
    %cst_29 = arith.constant dense<0.000000e+00> : vector<8x4xf32>
    %77 = tpu.matmul %76, %64, %cst_29 {dimension_numbers = #tpu.dot_dimension_numbers<[1], [0], [0], [1], [0, 0, 1, 1], [], []>} : vector<8x8xbf16>, vector<8x4xbf16>, vector<8x4xf32> -> vector<8x4xf32>
    %c0_30 = arith.constant 0 : index
    %c12 = arith.constant 12 : index
    %78 = vector.load %arg15[%c0_30, %c12] : memref<8x32xf32, #tpu.memory_space<vmem>>, vector<8x4xf32>
    tpu.vector_store %arg15[%c0_30, %c12], %77 {strides = array<i32>} : memref<8x32xf32, #tpu.memory_space<vmem>>, vector<8x4xf32>,
    %79 = vector.extract_strided_slice %10 {offsets = [0, 16], sizes = [8, 4], strides = [1, 1]} : vector<8x32xbf16> to vector<8x4xbf16>
    %c0_31 = arith.constant 0 : index
    %c48 = arith.constant 48 : index
    %80 = vector.load %arg14[%c0_31, %c48] : memref<8x96xbf16, #tpu.memory_space<vmem>>, vector<8x4xbf16>
    %c0_32 = arith.constant 0 : index
    %c80 = arith.constant 80 : index
    %81 = vector.load %arg14[%c0_32, %c80] : memref<8x96xbf16, #tpu.memory_space<vmem>>, vector<8x4xbf16>
    %cst_33 = arith.constant dense<0.000000e+00> : vector<8x8xf32>
    %82 = tpu.matmul %79, %80, %cst_33 {dimension_numbers = #tpu.dot_dimension_numbers<[1], [1], [0], [0], [0, 0, 1, 0], [], []>} : vector<8x4xbf16>, vector<8x4xbf16>, vector<8x8xf32> -> vector<8x8xf32>
    %cst_34 = arith.constant dense<0xFF800000> : vector<8xf32>
    %83 = vector.multi_reduction <maximumf>, %82, %cst_34 [1] : vector<8x8xf32> to vector<8xf32>
    %84 = vector.shape_cast %83 : vector<8xf32> to vector<8x1xf32>
    %85 = vector.broadcast %84 : vector<8x1xf32> to vector<8x8xf32>
    %86 = arith.subf %82, %85 : vector<8x8xf32>
    %87 = math.exp %86 : vector<8x8xf32>
    %cst_35 = arith.constant dense<0.000000e+00> : vector<8xf32>
    %88 = vector.multi_reduction <add>, %87, %cst_35 [1] : vector<8x8xf32> to vector<8xf32>
    %89 = vector.shape_cast %88 : vector<8xf32> to vector<8x1xf32>
    %90 = tpu.reciprocal %89 {approx = true} : vector<8x1xf32> -> vector<8x1xf32>
    %91 = vector.broadcast %90 : vector<8x1xf32> to vector<8x8xf32>
    %92 = arith.mulf %87, %91 : vector<8x8xf32>
    %93 = arith.truncf %92 : vector<8x8xf32> to vector<8x8xbf16>
    %cst_36 = arith.constant dense<0.000000e+00> : vector<8x4xf32>
    %94 = tpu.matmul %93, %81, %cst_36 {dimension_numbers = #tpu.dot_dimension_numbers<[1], [0], [0], [1], [0, 0, 1, 1], [], []>} : vector<8x8xbf16>, vector<8x4xbf16>, vector<8x4xf32> -> vector<8x4xf32>
    %c0_37 = arith.constant 0 : index
    %c16 = arith.constant 16 : index
    %95 = vector.load %arg15[%c0_37, %c16] : memref<8x32xf32, #tpu.memory_space<vmem>>, vector<8x4xf32>
    tpu.vector_store %arg15[%c0_37, %c16], %94 {strides = array<i32>} : memref<8x32xf32, #tpu.memory_space<vmem>>, vector<8x4xf32>,
    %96 = vector.extract_strided_slice %10 {offsets = [0, 20], sizes = [8, 4], strides = [1, 1]} : vector<8x32xbf16> to vector<8x4xbf16>
    %c0_38 = arith.constant 0 : index
    %c52 = arith.constant 52 : index
    %97 = vector.load %arg14[%c0_38, %c52] : memref<8x96xbf16, #tpu.memory_space<vmem>>, vector<8x4xbf16>
    %c0_39 = arith.constant 0 : index
    %c84 = arith.constant 84 : index
    %98 = vector.load %arg14[%c0_39, %c84] : memref<8x96xbf16, #tpu.memory_space<vmem>>, vector<8x4xbf16>
    %cst_40 = arith.constant dense<0.000000e+00> : vector<8x8xf32>
    %99 = tpu.matmul %96, %97, %cst_40 {dimension_numbers = #tpu.dot_dimension_numbers<[1], [1], [0], [0], [0, 0, 1, 0], [], []>} : vector<8x4xbf16>, vector<8x4xbf16>, vector<8x8xf32> -> vector<8x8xf32>
    %cst_41 = arith.constant dense<0xFF800000> : vector<8xf32>
    %100 = vector.multi_reduction <maximumf>, %99, %cst_41 [1] : vector<8x8xf32> to vector<8xf32>
    %101 = vector.shape_cast %100 : vector<8xf32> to vector<8x1xf32>
    %102 = vector.broadcast %101 : vector<8x1xf32> to vector<8x8xf32>
    %103 = arith.subf %99, %102 : vector<8x8xf32>
    %104 = math.exp %103 : vector<8x8xf32>
    %cst_42 = arith.constant dense<0.000000e+00> : vector<8xf32>
    %105 = vector.multi_reduction <add>, %104, %cst_42 [1] : vector<8x8xf32> to vector<8xf32>
    %106 = vector.shape_cast %105 : vector<8xf32> to vector<8x1xf32>
    %107 = tpu.reciprocal %106 {approx = true} : vector<8x1xf32> -> vector<8x1xf32>
    %108 = vector.broadcast %107 : vector<8x1xf32> to vector<8x8xf32>
    %109 = arith.mulf %104, %108 : vector<8x8xf32>
    %110 = arith.truncf %109 : vector<8x8xf32> to vector<8x8xbf16>
    %cst_43 = arith.constant dense<0.000000e+00> : vector<8x4xf32>
    %111 = tpu.matmul %110, %98, %cst_43 {dimension_numbers = #tpu.dot_dimension_numbers<[1], [0], [0], [1], [0, 0, 1, 1], [], []>} : vector<8x8xbf16>, vector<8x4xbf16>, vector<8x4xf32> -> vector<8x4xf32>
    %c0_44 = arith.constant 0 : index
    %c20 = arith.constant 20 : index
    %112 = vector.load %arg15[%c0_44, %c20] : memref<8x32xf32, #tpu.memory_space<vmem>>, vector<8x4xf32>
    tpu.vector_store %arg15[%c0_44, %c20], %111 {strides = array<i32>} : memref<8x32xf32, #tpu.memory_space<vmem>>, vector<8x4xf32>,
    %113 = vector.extract_strided_slice %10 {offsets = [0, 24], sizes = [8, 4], strides = [1, 1]} : vector<8x32xbf16> to vector<8x4xbf16>
    %c0_45 = arith.constant 0 : index
    %c56 = arith.constant 56 : index
    %114 = vector.load %arg14[%c0_45, %c56] : memref<8x96xbf16, #tpu.memory_space<vmem>>, vector<8x4xbf16>
    %c0_46 = arith.constant 0 : index
    %c88 = arith.constant 88 : index
    %115 = vector.load %arg14[%c0_46, %c88] : memref<8x96xbf16, #tpu.memory_space<vmem>>, vector<8x4xbf16>
    %cst_47 = arith.constant dense<0.000000e+00> : vector<8x8xf32>
    %116 = tpu.matmul %113, %114, %cst_47 {dimension_numbers = #tpu.dot_dimension_numbers<[1], [1], [0], [0], [0, 0, 1, 0], [], []>} : vector<8x4xbf16>, vector<8x4xbf16>, vector<8x8xf32> -> vector<8x8xf32>
    %cst_48 = arith.constant dense<0xFF800000> : vector<8xf32>
    %117 = vector.multi_reduction <maximumf>, %116, %cst_48 [1] : vector<8x8xf32> to vector<8xf32>
    %118 = vector.shape_cast %117 : vector<8xf32> to vector<8x1xf32>
    %119 = vector.broadcast %118 : vector<8x1xf32> to vector<8x8xf32>
    %120 = arith.subf %116, %119 : vector<8x8xf32>
    %121 = math.exp %120 : vector<8x8xf32>
    %cst_49 = arith.constant dense<0.000000e+00> : vector<8xf32>
    %122 = vector.multi_reduction <add>, %121, %cst_49 [1] : vector<8x8xf32> to vector<8xf32>
    %123 = vector.shape_cast %122 : vector<8xf32> to vector<8x1xf32>
    %124 = tpu.reciprocal %123 {approx = true} : vector<8x1xf32> -> vector<8x1xf32>
    %125 = vector.broadcast %124 : vector<8x1xf32> to vector<8x8xf32>
    %126 = arith.mulf %121, %125 : vector<8x8xf32>
    %127 = arith.truncf %126 : vector<8x8xf32> to vector<8x8xbf16>
    %cst_50 = arith.constant dense<0.000000e+00> : vector<8x4xf32>
    %128 = tpu.matmul %127, %115, %cst_50 {dimension_numbers = #tpu.dot_dimension_numbers<[1], [0], [0], [1], [0, 0, 1, 1], [], []>} : vector<8x8xbf16>, vector<8x4xbf16>, vector<8x4xf32> -> vector<8x4xf32>
    %c0_51 = arith.constant 0 : index
    %c24 = arith.constant 24 : index
    %129 = vector.load %arg15[%c0_51, %c24] : memref<8x32xf32, #tpu.memory_space<vmem>>, vector<8x4xf32>
    tpu.vector_store %arg15[%c0_51, %c24], %128 {strides = array<i32>} : memref<8x32xf32, #tpu.memory_space<vmem>>, vector<8x4xf32>,
    %130 = vector.extract_strided_slice %10 {offsets = [0, 28], sizes = [8, 4], strides = [1, 1]} : vector<8x32xbf16> to vector<8x4xbf16>
    %c0_52 = arith.constant 0 : index
    %c60 = arith.constant 60 : index
    %131 = vector.load %arg14[%c0_52, %c60] : memref<8x96xbf16, #tpu.memory_space<vmem>>, vector<8x4xbf16>
    %c0_53 = arith.constant 0 : index
    %c92 = arith.constant 92 : index
    %132 = vector.load %arg14[%c0_53, %c92] : memref<8x96xbf16, #tpu.memory_space<vmem>>, vector<8x4xbf16>
    %cst_54 = arith.constant dense<0.000000e+00> : vector<8x8xf32>
    %133 = tpu.matmul %130, %131, %cst_54 {dimension_numbers = #tpu.dot_dimension_numbers<[1], [1], [0], [0], [0, 0, 1, 0], [], []>} : vector<8x4xbf16>, vector<8x4xbf16>, vector<8x8xf32> -> vector<8x8xf32>
    %cst_55 = arith.constant dense<0xFF800000> : vector<8xf32>
    %134 = vector.multi_reduction <maximumf>, %133, %cst_55 [1] : vector<8x8xf32> to vector<8xf32>
    %135 = vector.shape_cast %134 : vector<8xf32> to vector<8x1xf32>
    %136 = vector.broadcast %135 : vector<8x1xf32> to vector<8x8xf32>
    %137 = arith.subf %133, %136 : vector<8x8xf32>
    %138 = math.exp %137 : vector<8x8xf32>
    %cst_56 = arith.constant dense<0.000000e+00> : vector<8xf32>
    %139 = vector.multi_reduction <add>, %138, %cst_56 [1] : vector<8x8xf32> to vector<8xf32>
    %140 = vector.shape_cast %139 : vector<8xf32> to vector<8x1xf32>
    %141 = tpu.reciprocal %140 {approx = true} : vector<8x1xf32> -> vector<8x1xf32>
    %142 = vector.broadcast %141 : vector<8x1xf32> to vector<8x8xf32>
    %143 = arith.mulf %138, %142 : vector<8x8xf32>
    %144 = arith.truncf %143 : vector<8x8xf32> to vector<8x8xbf16>
    %cst_57 = arith.constant dense<0.000000e+00> : vector<8x4xf32>
    %145 = tpu.matmul %144, %132, %cst_57 {dimension_numbers = #tpu.dot_dimension_numbers<[1], [0], [0], [1], [0, 0, 1, 1], [], []>} : vector<8x8xbf16>, vector<8x4xbf16>, vector<8x4xf32> -> vector<8x4xf32>
    %c0_58 = arith.constant 0 : index
    %c28 = arith.constant 28 : index
    %146 = vector.load %arg15[%c0_58, %c28] : memref<8x32xf32, #tpu.memory_space<vmem>>, vector<8x4xf32>
    tpu.vector_store %arg15[%c0_58, %c28], %145 {strides = array<i32>} : memref<8x32xf32, #tpu.memory_space<vmem>>, vector<8x4xf32>,
    %c0_59 = arith.constant 0 : index
    %c0_60 = arith.constant 0 : index
    %147 = vector.load %arg15[%c0_59, %c0_60] : memref<8x32xf32, #tpu.memory_space<vmem>>, vector<8x32xf32>
    %148 = arith.truncf %147 : vector<8x32xf32> to vector<8x32xbf16>
    %c0_61 = arith.constant 0 : index
    %c0_62 = arith.constant 0 : index
    %149 = vector.load %arg4[%c0_61, %c0_62] : memref<32x32xbf16, #tpu.memory_space<vmem>>, vector<32x32xbf16>
    %cst_63 = arith.constant dense<0.000000e+00> : vector<8x32xf32>
    %150 = tpu.matmul %148, %149, %cst_63 {dimension_numbers = #tpu.dot_dimension_numbers<[1], [0], [0], [1], [0, 0, 1, 1], [], []>} : vector<8x32xbf16>, vector<32x32xbf16>, vector<8x32xf32> -> vector<8x32xf32>
    %151 = arith.addf %150, %8 : vector<8x32xf32>
    %c0_64 = arith.constant 0 : index
    %c0_65 = arith.constant 0 : index
    %152 = vector.load %arg5[%c0_64, %c0_65] : memref<1x32xf32, #tpu.memory_space<vmem>>, vector<1x32xf32>
    %c0_66 = arith.constant 0 : index
    %c0_67 = arith.constant 0 : index
    %153 = vector.load %arg6[%c0_66, %c0_67] : memref<1x32xf32, #tpu.memory_space<vmem>>, vector<1x32xf32>
    %cst_68 = arith.constant dense<0.000000e+00> : vector<8xf32>
    %154 = vector.multi_reduction <add>, %151, %cst_68 [1] : vector<8x32xf32> to vector<8xf32>
    %155 = vector.shape_cast %154 : vector<8xf32> to vector<8x1xf32>
    %cst_69 = arith.constant 3.200000e+01 : f32
    %156 = vector.broadcast %cst_69 : f32 to vector<8x1xf32>
    %157 = arith.divf %155, %156 : vector<8x1xf32>
    %158 = vector.broadcast %157 : vector<8x1xf32> to vector<8x32xf32>
    %159 = arith.subf %151, %158 : vector<8x32xf32>
    %160 = arith.mulf %159, %159 : vector<8x32xf32>
    %cst_70 = arith.constant dense<0.000000e+00> : vector<8xf32>
    %161 = vector.multi_reduction <add>, %160, %cst_70 [1] : vector<8x32xf32> to vector<8xf32>
    %162 = vector.shape_cast %161 : vector<8xf32> to vector<8x1xf32>
    %cst_71 = arith.constant 3.200000e+01 : f32
    %163 = vector.broadcast %cst_71 : f32 to vector<8x1xf32>
    %164 = arith.divf %162, %163 : vector<8x1xf32>
    %cst_72 = arith.constant 9.99999974E-6 : f32
    %165 = vector.broadcast %cst_72 : f32 to vector<8x1xf32>
    %166 = arith.addf %164, %165 : vector<8x1xf32>
    %167 = math.rsqrt %166 : vector<8x1xf32>
    %168 = vector.broadcast %167 : vector<8x1xf32> to vector<8x32xf32>
    %169 = arith.mulf %159, %168 : vector<8x32xf32>
    %170 = vector.broadcast %152 : vector<1x32xf32> to vector<8x32xf32>
    %171 = arith.mulf %169, %170 : vector<8x32xf32>
    %172 = vector.broadcast %153 : vector<1x32xf32> to vector<8x32xf32>
    %173 = arith.addf %171, %172 : vector<8x32xf32>
    %174 = arith.truncf %173 : vector<8x32xf32> to vector<8x32xbf16>
    %c0_73 = arith.constant 0 : index
    %c0_74 = arith.constant 0 : index
    %175 = vector.load %arg7[%c0_73, %c0_74] : memref<32x64xbf16, #tpu.memory_space<vmem>>, vector<32x64xbf16>
    %cst_75 = arith.constant dense<0.000000e+00> : vector<8x64xf32>
    %176 = tpu.matmul %174, %175, %cst_75 {dimension_numbers = #tpu.dot_dimension_numbers<[1], [0], [0], [1], [0, 0, 1, 1], [], []>} : vector<8x32xbf16>, vector<32x64xbf16>, vector<8x64xf32> -> vector<8x64xf32>
    %c0_76 = arith.constant 0 : index
    %c0_77 = arith.constant 0 : index
    %177 = vector.load %arg8[%c0_76, %c0_77] : memref<1x64xf32, #tpu.memory_space<vmem>>, vector<1x64xf32>
    %178 = vector.broadcast %177 : vector<1x64xf32> to vector<8x64xf32>
    %179 = arith.addf %176, %178 : vector<8x64xf32>
    %cst_78 = arith.constant 5.000000e-01 : f32
    %180 = vector.broadcast %cst_78 : f32 to vector<8x64xf32>
    %181 = arith.mulf %180, %179 : vector<8x64xf32>
    %cst_79 = arith.constant 0.707106769 : f32
    %182 = vector.broadcast %cst_79 : f32 to vector<8x64xf32>
    %183 = arith.mulf %179, %182 : vector<8x64xf32>
    %184 = math.erf %183 : vector<8x64xf32>
    %cst_80 = arith.constant 1.000000e+00 : f32
    %185 = vector.broadcast %cst_80 : f32 to vector<8x64xf32>
    %186 = arith.addf %185, %184 : vector<8x64xf32>
    %187 = arith.mulf %181, %186 : vector<8x64xf32>
    %188 = arith.truncf %187 : vector<8x64xf32> to vector<8x64xbf16>
    %c0_81 = arith.constant 0 : index
    %c0_82 = arith.constant 0 : index
    %189 = vector.load %arg9[%c0_81, %c0_82] : memref<64x32xbf16, #tpu.memory_space<vmem>>, vector<64x32xbf16>
    %cst_83 = arith.constant dense<0.000000e+00> : vector<8x32xf32>
    %190 = tpu.matmul %188, %189, %cst_83 {dimension_numbers = #tpu.dot_dimension_numbers<[1], [0], [0], [1], [0, 0, 1, 1], [], []>} : vector<8x64xbf16>, vector<64x32xbf16>, vector<8x32xf32> -> vector<8x32xf32>
    %c0_84 = arith.constant 0 : index
    %c0_85 = arith.constant 0 : index
    %191 = vector.load %arg10[%c0_84, %c0_85] : memref<1x32xf32, #tpu.memory_space<vmem>>, vector<1x32xf32>
    %192 = vector.broadcast %191 : vector<1x32xf32> to vector<8x32xf32>
    %193 = arith.addf %190, %192 : vector<8x32xf32>
    %194 = arith.addf %193, %173 : vector<8x32xf32>
    %c0_86 = arith.constant 0 : index
    %c0_87 = arith.constant 0 : index
    %195 = vector.load %arg11[%c0_86, %c0_87] : memref<1x32xf32, #tpu.memory_space<vmem>>, vector<1x32xf32>
    %c0_88 = arith.constant 0 : index
    %c0_89 = arith.constant 0 : index
    %196 = vector.load %arg12[%c0_88, %c0_89] : memref<1x32xf32, #tpu.memory_space<vmem>>, vector<1x32xf32>
    %cst_90 = arith.constant dense<0.000000e+00> : vector<8xf32>
    %197 = vector.multi_reduction <add>, %194, %cst_90 [1] : vector<8x32xf32> to vector<8xf32>
    %198 = vector.shape_cast %197 : vector<8xf32> to vector<8x1xf32>
    %cst_91 = arith.constant 3.200000e+01 : f32
    %199 = vector.broadcast %cst_91 : f32 to vector<8x1xf32>
    %200 = arith.divf %198, %199 : vector<8x1xf32>
    %201 = vector.broadcast %200 : vector<8x1xf32> to vector<8x32xf32>
    %202 = arith.subf %194, %201 : vector<8x32xf32>
    %203 = arith.mulf %202, %202 : vector<8x32xf32>
    %cst_92 = arith.constant dense<0.000000e+00> : vector<8xf32>
    %204 = vector.multi_reduction <add>, %203, %cst_92 [1] : vector<8x32xf32> to vector<8xf32>
    %205 = vector.shape_cast %204 : vector<8xf32> to vector<8x1xf32>
    %cst_93 = arith.constant 3.200000e+01 : f32
    %206 = vector.broadcast %cst_93 : f32 to vector<8x1xf32>
    %207 = arith.divf %205, %206 : vector<8x1xf32>
    %cst_94 = arith.constant 9.99999974E-6 : f32
    %208 = vector.broadcast %cst_94 : f32 to vector<8x1xf32>
    %209 = arith.addf %207, %208 : vector<8x1xf32>
    %210 = math.rsqrt %209 : vector<8x1xf32>
    %211 = vector.broadcast %210 : vector<8x1xf32> to vector<8x32xf32>
    %212 = arith.mulf %202, %211 : vector<8x32xf32>
    %213 = vector.broadcast %195 : vector<1x32xf32> to vector<8x32xf32>
    %214 = arith.mulf %212, %213 : vector<8x32xf32>
    %215 = vector.broadcast %196 : vector<1x32xf32> to vector<8x32xf32>
    %216 = arith.addf %214, %215 : vector<8x32xf32>
    %217 = arith.truncf %216 : vector<8x32xf32> to vector<8x32xbf16>
    %c0_95 = arith.constant 0 : index
    %c0_96 = arith.constant 0 : index
    %c0_97 = arith.constant 0 : index
    %218 = vector.load %arg13[%c0_95, %c0_96, %c0_97] : memref<1x8x32xbf16, #tpu.memory_space<vmem>>, vector<1x8x32xbf16>
    %219 = vector.shape_cast %218 : vector<1x8x32xbf16> to vector<8x32xbf16>
    %220 = vector.shape_cast %217 : vector<8x32xbf16> to vector<1x8x32xbf16>
    tpu.vector_store %arg13[%c0_95, %c0_96, %c0_97], %220 {strides = array<i32>} : memref<1x8x32xbf16, #tpu.memory_space<vmem>>, vector<1x8x32xbf16>,
    return
  }
  func.func @transform_0(%arg0: i32, %arg1: i32) -> (i32, i32, i32) {
    %c0_i32 = arith.constant 0 : i32
    %c0_i32_0 = arith.constant 0 : i32
    %c0_i32_1 = arith.constant 0 : i32
    return %arg0, %c0_i32, %c0_i32_0 : i32, i32, i32
  }
  func.func @transform_1(%arg0: i32, %arg1: i32) -> (i32, i32) {
    %c0_i32 = arith.constant 0 : i32
    %c0_i32_0 = arith.constant 0 : i32
    %c0_i32_1 = arith.constant 0 : i32
    return %c0_i32, %c0_i32_0 : i32, i32
  }
  func.func @transform_2(%arg0: i32, %arg1: i32) -> (i32, i32) {
    %c0_i32 = arith.constant 0 : i32
    %c0_i32_0 = arith.constant 0 : i32
    %c0_i32_1 = arith.constant 0 : i32
    return %c0_i32, %c0_i32_0 : i32, i32
  }
  func.func @transform_3(%arg0: i32, %arg1: i32) -> (i32, i32) {
    %c0_i32 = arith.constant 0 : i32
    %c0_i32_0 = arith.constant 0 : i32
    %c0_i32_1 = arith.constant 0 : i32
    return %c0_i32, %c0_i32_0 : i32, i32
  }
  func.func @transform_4(%arg0: i32, %arg1: i32) -> (i32, i32) {
    %c0_i32 = arith.constant 0 : i32
    %c0_i32_0 = arith.constant 0 : i32
    %c0_i32_1 = arith.constant 0 : i32
    return %c0_i32, %c0_i32_0 : i32, i32
  }
  func.func @transform_5(%arg0: i32, %arg1: i32) -> (i32, i32) {
    %c0_i32 = arith.constant 0 : i32
    %c0_i32_0 = arith.constant 0 : i32
    %c0_i32_1 = arith.constant 0 : i32
    return %c0_i32, %c0_i32_0 : i32, i32
  }
  func.func @transform_6(%arg0: i32, %arg1: i32) -> (i32, i32) {
    %c0_i32 = arith.constant 0 : i32
    %c0_i32_0 = arith.constant 0 : i32
    %c0_i32_1 = arith.constant 0 : i32
    return %c0_i32, %c0_i32_0 : i32, i32
  }
  func.func @transform_7(%arg0: i32, %arg1: i32) -> (i32, i32) {
    %c0_i32 = arith.constant 0 : i32
    %c0_i32_0 = arith.constant 0 : i32
    %c0_i32_1 = arith.constant 0 : i32
    return %c0_i32, %c0_i32_0 : i32, i32
  }
  func.func @transform_8(%arg0: i32, %arg1: i32) -> (i32, i32) {
    %c0_i32 = arith.constant 0 : i32
    %c0_i32_0 = arith.constant 0 : i32
    %c0_i32_1 = arith.constant 0 : i32
    return %c0_i32, %c0_i32_0 : i32, i32
  }
  func.func @transform_9(%arg0: i32, %arg1: i32) -> (i32, i32) {
    %c0_i32 = arith.constant 0 : i32
    %c0_i32_0 = arith.constant 0 : i32
    %c0_i32_1 = arith.constant 0 : i32
    return %c0_i32, %c0_i32_0 : i32, i32
  }
  func.func @transform_10(%arg0: i32, %arg1: i32) -> (i32, i32) {
    %c0_i32 = arith.constant 0 : i32
    %c0_i32_0 = arith.constant 0 : i32
    %c0_i32_1 = arith.constant 0 : i32
    return %c0_i32, %c0_i32_0 : i32, i32
  }
  func.func @transform_11(%arg0: i32, %arg1: i32) -> (i32, i32, i32) {
    %c0_i32 = arith.constant 0 : i32
    %c0_i32_0 = arith.constant 0 : i32
    return %arg0, %arg1, %c0_i32 : i32, i32, i32
  }
}

</mosaic_0001>

<llo_original>
// kernel: transformer_encoder.3
$region0: #{transformer_encoder.3}
  #allocation0 [shape = 'u32[]', space=smem, size = 0x4, offset = 0x4, fixed_abs, tag = 'smem constant byte address 0x4 - core index']
  #allocation1 [shape = 'u32[72,128]{1,0:T(1,128)}', space=vmem, size = 0x9000, scoped, tag = 'internal scratch']
  #allocation2 [shape = 'bf16[8,96]{1,0:T(8,128)(2,1)}', space=vmem, size = 0x800, scoped, tag = 'scratch operand']
  #allocation3 [shape = 'f32[8,32]{1,0:T(8,128)}', space=vmem, size = 0x1000, scoped, tag = 'scratch operand']
  %s0 = inlined_call_operand.vmem [shape: bf16[2,8,32], index: 0, kind: input, shape index: {}]
  %s1 = inlined_call_operand.vmem [shape: bf16[32,96], index: 1, kind: input, shape index: {}]
  %s2 = inlined_call_operand.vmem [shape: bf16[32,32], index: 2, kind: input, shape index: {}]
  %s3 = inlined_call_operand.vmem [shape: f32[1,32], index: 3, kind: input, shape index: {}]
  %s4 = inlined_call_operand.vmem [shape: f32[1,32], index: 4, kind: input, shape index: {}]
  %s5 = inlined_call_operand.vmem [shape: bf16[32,64], index: 5, kind: input, shape index: {}]
  %s6 = inlined_call_operand.vmem [shape: f32[1,64], index: 6, kind: input, shape index: {}]
  %s7 = inlined_call_operand.vmem [shape: bf16[64,32], index: 7, kind: input, shape index: {}]
  %s8 = inlined_call_operand.vmem [shape: f32[1,32], index: 8, kind: input, shape index: {}]
  %s9 = inlined_call_operand.vmem [shape: f32[1,32], index: 9, kind: input, shape index: {}]
  %s10 = inlined_call_operand.vmem [shape: f32[1,32], index: 10, kind: input, shape index: {}]
  %s11 = inlined_call_operand.vmem [shape: bf16[2,8,32], index: 11, kind: output, shape index: {}]
  %s12 = sld [smem:[#allocation0]]
  $region81: #{transformer_encoder.3} parent=0
    _
  %s14 = ssub.s32 1, %s12
  %s15 = scalar_select 0, %s14, %s12
  loop: start=0, step=1, limit=4
  $region2: #{transformer_encoder.3} parent=0 // loop_pre_header
    _
  $region3: #{transformer_encoder.3} parent=0 // loop_header
    %s17 = sphi 0, %s21
    %p18 = scmp.ge.s32.totalorder %s17, 4
    %s24 = sphi 0, %s36
    %s25 = sphi 0, %s32
    %s26 = sphi 0, %s24
    %s27 = sphi 0, %s25
    %s28 = sphi 0, %s26
    %s29 = sphi 0, %s27
    %s39 = sphi 0, %s41
    %s42 = sphi 0, %s39
    %s43 = sphi 0, %s42
    %s59 = sphi 0, %s43
    %s63 = sphi 0, %s63
    %s65 = sphi 0, %s63
    %s66 = sphi 0, %s65
    %s80 = sphi 0, %s66
    %s84 = sphi 0, %s84
    %s86 = sphi 0, %s84
    %s87 = sphi 0, %s86
    %s101 = sphi 0, %s87
    %s105 = sphi 0, %s105
    %s107 = sphi 0, %s105
    %s108 = sphi 0, %s107
    %s122 = sphi 0, %s108
    %s126 = sphi 0, %s126
    %s128 = sphi 0, %s126
    %s129 = sphi 0, %s128
    %s143 = sphi 0, %s129
    %s147 = sphi 0, %s147
    %s149 = sphi 0, %s147
    %s150 = sphi 0, %s149
    %s164 = sphi 0, %s150
    %s168 = sphi 0, %s168
    %s170 = sphi 0, %s168
    %s171 = sphi 0, %s170
    %s185 = sphi 0, %s171
    %s189 = sphi 0, %s189
    %s191 = sphi 0, %s189
    %s192 = sphi 0, %s191
    %s206 = sphi 0, %s192
    %s210 = sphi 0, %s210
    %s212 = sphi 0, %s210
    %s213 = sphi 0, %s212
    %s227 = sphi 0, %s213
    %s231 = sphi 0, %s231
    %s233 = sphi 0, %s231
    %s234 = sphi 0, %s233
    %s248 = sphi 0, %s234
    %s252 = sphi 0, %s252
    %s254 = sphi 0, %s252
    %s255 = sphi 0, %s254
    %s269 = sphi 0, %s255
    %s277 = sphi 0, %s279
    %s280 = sphi 0, %s277
    %s281 = sphi 0, %s280
    %s297 = sphi 0, %s281
  $region4: #{transformer_encoder.3} parent=0 // loop_header_branch
    %20 = sbr.rel (%p18) target = $region8
  $region5: #{transformer_encoder.3} parent=0 // loop_body
    %s22 = ssub.s32 %s17, 1
    %s23 = ssub.s32 %s17, 2
    %s30 = sadd.s32 1, %s25
    %p31 = scmp.ge.s32.totalorder %s30, 1
    %s32 = scalar_select %p31, 0, %s30
    %s33 = sadd.s32 1, %s24
    %s34 = scalar_select %p31, %s33, %s24
    %p35 = scmp.ge.s32.totalorder %s34, 2
    %s36 = scalar_select %p35, 0, %s34
    %s37 = ssub.s32 %s24, %s36
    %p38 = scmp.eq.s32.totalorder %s37, 0
    %s40 = sadd.s32 %s39, 1
    %s41 = scalar_select %p38, %s39, %s40
    %p44 = pneg %p38
    %p45 = scmp.eq.s32.totalorder %s17, 1
    %p46 = por %p44, %p45
    %p47 = scmp.ne.s32.totalorder %s39, %s42
    %p48 = scmp.eq.s32.totalorder %s17, 0
    %p49 = por %p47, %p48
    %p50 = scmp.ne.s32.totalorder %s39, %s42
    %p51 = scmp.eq.s32.totalorder %s22, 1
    %p52 = por %p50, %p51
    %p53 = scmp.ne.s32.totalorder %s42, %s43
    %p54 = scmp.eq.s32.totalorder %s22, 0
    %p55 = por %p53, %p54
    %p56 = scmp.ne.s32.totalorder %s42, %s43
    %p57 = scmp.eq.s32.totalorder %s23, 1
    %p58 = por %p56, %p57
    %p60 = scmp.ne.s32.totalorder %s43, %s59
    %p61 = scmp.eq.s32.totalorder %s23, 0
    %p62 = por %p60, %p61
    %s64 = sadd.s32 %s63, 1
    %p67 = scmp.eq.s32.totalorder %s17, 1
    %p68 = scmp.ne.s32.totalorder %s63, %s65
    %p69 = scmp.eq.s32.totalorder %s17, 0
    %p70 = por %p68, %p69
    %p71 = scmp.ne.s32.totalorder %s63, %s65
    %p72 = scmp.eq.s32.totalorder %s22, 1
    %p73 = por %p71, %p72
    %p74 = scmp.ne.s32.totalorder %s65, %s66
    %p75 = scmp.eq.s32.totalorder %s22, 0
    %p76 = por %p74, %p75
    %p77 = scmp.ne.s32.totalorder %s65, %s66
    %p78 = scmp.eq.s32.totalorder %s23, 1
    %p79 = por %p77, %p78
    %p81 = scmp.ne.s32.totalorder %s66, %s80
    %p82 = scmp.eq.s32.totalorder %s23, 0
    %p83 = por %p81, %p82
    %s85 = sadd.s32 %s84, 1
    %p88 = scmp.eq.s32.totalorder %s17, 1
    %p89 = scmp.ne.s32.totalorder %s84, %s86
    %p90 = scmp.eq.s32.totalorder %s17, 0
    %p91 = por %p89, %p90
    %p92 = scmp.ne.s32.totalorder %s84, %s86
    %p93 = scmp.eq.s32.totalorder %s22, 1
    %p94 = por %p92, %p93
    %p95 = scmp.ne.s32.totalorder %s86, %s87
    %p96 = scmp.eq.s32.totalorder %s22, 0
    %p97 = por %p95, %p96
    %p98 = scmp.ne.s32.totalorder %s86, %s87
    %p99 = scmp.eq.s32.totalorder %s23, 1
    %p100 = por %p98, %p99
    %p102 = scmp.ne.s32.totalorder %s87, %s101
    %p103 = scmp.eq.s32.totalorder %s23, 0
    %p104 = por %p102, %p103
    %s106 = sadd.s32 %s105, 1
    %p109 = scmp.eq.s32.totalorder %s17, 1
    %p110 = scmp.ne.s32.totalorder %s105, %s107
    %p111 = scmp.eq.s32.totalorder %s17, 0
    %p112 = por %p110, %p111
    %p113 = scmp.ne.s32.totalorder %s105, %s107
    %p114 = scmp.eq.s32.totalorder %s22, 1
    %p115 = por %p113, %p114
    %p116 = scmp.ne.s32.totalorder %s107, %s108
    %p117 = scmp.eq.s32.totalorder %s22, 0
    %p118 = por %p116, %p117
    %p119 = scmp.ne.s32.totalorder %s107, %s108
    %p120 = scmp.eq.s32.totalorder %s23, 1
    %p121 = por %p119, %p120
    %p123 = scmp.ne.s32.totalorder %s108, %s122
    %p124 = scmp.eq.s32.totalorder %s23, 0
    %p125 = por %p123, %p124
    %s127 = sadd.s32 %s126, 1
    %p130 = scmp.eq.s32.totalorder %s17, 1
    %p131 = scmp.ne.s32.totalorder %s126, %s128
    %p132 = scmp.eq.s32.totalorder %s17, 0
    %p133 = por %p131, %p132
    %p134 = scmp.ne.s32.totalorder %s126, %s128
    %p135 = scmp.eq.s32.totalorder %s22, 1
    %p136 = por %p134, %p135
    %p137 = scmp.ne.s32.totalorder %s128, %s129
    %p138 = scmp.eq.s32.totalorder %s22, 0
    %p139 = por %p137, %p138
    %p140 = scmp.ne.s32.totalorder %s128, %s129
    %p141 = scmp.eq.s32.totalorder %s23, 1
    %p142 = por %p140, %p141
    %p144 = scmp.ne.s32.totalorder %s129, %s143
    %p145 = scmp.eq.s32.totalorder %s23, 0
    %p146 = por %p144, %p145
    %s148 = sadd.s32 %s147, 1
    %p151 = scmp.eq.s32.totalorder %s17, 1
    %p152 = scmp.ne.s32.totalorder %s147, %s149
    %p153 = scmp.eq.s32.totalorder %s17, 0
    %p154 = por %p152, %p153
    %p155 = scmp.ne.s32.totalorder %s147, %s149
    %p156 = scmp.eq.s32.totalorder %s22, 1
    %p157 = por %p155, %p156
    %p158 = scmp.ne.s32.totalorder %s149, %s150
    %p159 = scmp.eq.s32.totalorder %s22, 0
    %p160 = por %p158, %p159
    %p161 = scmp.ne.s32.totalorder %s149, %s150
    %p162 = scmp.eq.s32.totalorder %s23, 1
    %p163 = por %p161, %p162
    %p165 = scmp.ne.s32.totalorder %s150, %s164
    %p166 = scmp.eq.s32.totalorder %s23, 0
    %p167 = por %p165, %p166
    %s169 = sadd.s32 %s168, 1
    %p172 = scmp.eq.s32.totalorder %s17, 1
    %p173 = scmp.ne.s32.totalorder %s168, %s170
    %p174 = scmp.eq.s32.totalorder %s17, 0
    %p175 = por %p173, %p174
    %p176 = scmp.ne.s32.totalorder %s168, %s170
    %p177 = scmp.eq.s32.totalorder %s22, 1
    %p178 = por %p176, %p177
    %p179 = scmp.ne.s32.totalorder %s170, %s171
    %p180 = scmp.eq.s32.totalorder %s22, 0
    %p181 = por %p179, %p180
    %p182 = scmp.ne.s32.totalorder %s170, %s171
    %p183 = scmp.eq.s32.totalorder %s23, 1
    %p184 = por %p182, %p183
    %p186 = scmp.ne.s32.totalorder %s171, %s185
    %p187 = scmp.eq.s32.totalorder %s23, 0
    %p188 = por %p186, %p187
    %s190 = sadd.s32 %s189, 1
    %p193 = scmp.eq.s32.totalorder %s17, 1
    %p194 = scmp.ne.s32.totalorder %s189, %s191
    %p195 = scmp.eq.s32.totalorder %s17, 0
    %p196 = por %p194, %p195
    %p197 = scmp.ne.s32.totalorder %s189, %s191
    %p198 = scmp.eq.s32.totalorder %s22, 1
    %p199 = por %p197, %p198
    %p200 = scmp.ne.s32.totalorder %s191, %s192
    %p201 = scmp.eq.s32.totalorder %s22, 0
    %p202 = por %p200, %p201
    %p203 = scmp.ne.s32.totalorder %s191, %s192
    %p204 = scmp.eq.s32.totalorder %s23, 1
    %p205 = por %p203, %p204
    %p207 = scmp.ne.s32.totalorder %s192, %s206
    %p208 = scmp.eq.s32.totalorder %s23, 0
    %p209 = por %p207, %p208
    %s211 = sadd.s32 %s210, 1
    %p214 = scmp.eq.s32.totalorder %s17, 1
    %p215 = scmp.ne.s32.totalorder %s210, %s212
    %p216 = scmp.eq.s32.totalorder %s17, 0
    %p217 = por %p215, %p216
    %p218 = scmp.ne.s32.totalorder %s210, %s212
    %p219 = scmp.eq.s32.totalorder %s22, 1
    %p220 = por %p218, %p219
    %p221 = scmp.ne.s32.totalorder %s212, %s213
    %p222 = scmp.eq.s32.totalorder %s22, 0
    %p223 = por %p221, %p222
    %p224 = scmp.ne.s32.totalorder %s212, %s213
    %p225 = scmp.eq.s32.totalorder %s23, 1
    %p226 = por %p224, %p225
    %p228 = scmp.ne.s32.totalorder %s213, %s227
    %p229 = scmp.eq.s32.totalorder %s23, 0
    %p230 = por %p228, %p229
    %s232 = sadd.s32 %s231, 1
    %p235 = scmp.eq.s32.totalorder %s17, 1
    %p236 = scmp.ne.s32.totalorder %s231, %s233
    %p237 = scmp.eq.s32.totalorder %s17, 0
    %p238 = por %p236, %p237
    %p239 = scmp.ne.s32.totalorder %s231, %s233
    %p240 = scmp.eq.s32.totalorder %s22, 1
    %p241 = por %p239, %p240
    %p242 = scmp.ne.s32.totalorder %s233, %s234
    %p243 = scmp.eq.s32.totalorder %s22, 0
    %p244 = por %p242, %p243
    %p245 = scmp.ne.s32.totalorder %s233, %s234
    %p246 = scmp.eq.s32.totalorder %s23, 1
    %p247 = por %p245, %p246
    %p249 = scmp.ne.s32.totalorder %s234, %s248
    %p250 = scmp.eq.s32.totalorder %s23, 0
    %p251 = por %p249, %p250
    %s253 = sadd.s32 %s252, 1
    %p256 = scmp.eq.s32.totalorder %s17, 1
    %p257 = scmp.ne.s32.totalorder %s252, %s254
    %p258 = scmp.eq.s32.totalorder %s17, 0
    %p259 = por %p257, %p258
    %p260 = scmp.ne.s32.totalorder %s252, %s254
    %p261 = scmp.eq.s32.totalorder %s22, 1
    %p262 = por %p260, %p261
    %p263 = scmp.ne.s32.totalorder %s254, %s255
    %p264 = scmp.eq.s32.totalorder %s22, 0
    %p265 = por %p263, %p264
    %p266 = scmp.ne.s32.totalorder %s254, %s255
    %p267 = scmp.eq.s32.totalorder %s23, 1
    %p268 = por %p266, %p267
    %p270 = scmp.ne.s32.totalorder %s255, %s269
    %p271 = scmp.eq.s32.totalorder %s23, 0
    %p272 = por %p270, %p271
    %s273 = ssub.s32 %s24, %s36
    %s274 = ssub.s32 %s25, %s32
    %s275 = sor.u32 %s273, %s274
    %p276 = scmp.eq.s32.totalorder %s275, 0
    %s278 = sadd.s32 %s277, 1
    %s279 = scalar_select %p276, %s277, %s278
    %p282 = pneg %p276
    %p283 = scmp.eq.s32.totalorder %s17, 1
    %p284 = por %p282, %p283
    %p285 = scmp.ne.s32.totalorder %s277, %s280
    %p286 = scmp.eq.s32.totalorder %s17, 0
    %p287 = por %p285, %p286
    %p288 = scmp.ne.s32.totalorder %s277, %s280
    %p289 = scmp.eq.s32.totalorder %s22, 1
    %p290 = por %p288, %p289
    %p291 = scmp.ne.s32.totalorder %s280, %s281
    %p292 = scmp.eq.s32.totalorder %s22, 0
    %p293 = por %p291, %p292
    %p294 = scmp.ne.s32.totalorder %s280, %s281
    %p295 = scmp.eq.s32.totalorder %s23, 1
    %p296 = por %p294, %p295
    %p298 = scmp.ne.s32.totalorder %s281, %s297
    %p299 = scmp.eq.s32.totalorder %s23, 0
    %p300 = por %p298, %p299
    %p301 = scmp.le.s32.totalorder 1, %s17
    %p302 = scmp.lt.s32.totalorder %s17, 3
    %p303 = pnand %p301, %p302
    %p304 = pneg %p303
    // Predicated region
    $region9: #{transformer_encoder.3} parent=5 // pred_check
      _
    $region10: #{transformer_encoder.3} parent=5 // pred_check_branch
      %306 = sbr.rel (%p303) target = $region12
    $region11: #{transformer_encoder.3} parent=5 // pred_region
      %s307 = ssub.s32 %s17, 1
      // Predicated region
      $region13: #{transformer_encoder.3} parent=11 // pred_check
        %p308 = pneg %p55
      $region14: #{transformer_encoder.3} parent=11 // pred_check_branch
        %310 = sbr.rel (%p308) target = $region16
      $region15: #{transformer_encoder.3} parent=11 // pred_region
        %p311 = scmp.lt.s32.totalorder %s26, 1
        %s312 = scalar_select %p311, %s26, 1
        %s313 = smul.addr %s312, 4
        %s314 = scalar_lea.vmem %s0, %s313
      $region16: #{transformer_encoder.3} parent=11 // pred_fallthru
        _
      // Predicated region
      $region17: #{transformer_encoder.3} parent=11 // pred_check
        %p315 = pneg %p76
      $region18: #{transformer_encoder.3} parent=11 // pred_check_branch
        %317 = sbr.rel (%p315) target = $region20
      $region19: #{transformer_encoder.3} parent=11 // pred_region
        _
      $region20: #{transformer_encoder.3} parent=11 // pred_fallthru
        _
      // Predicated region
      $region21: #{transformer_encoder.3} parent=11 // pred_check
        %p318 = pneg %p97
      $region22: #{transformer_encoder.3} parent=11 // pred_check_branch
        %320 = sbr.rel (%p318) target = $region24
      $region23: #{transformer_encoder.3} parent=11 // pred_region
        _
      $region24: #{transformer_encoder.3} parent=11 // pred_fallthru
        _
      // Predicated region
      $region25: #{transformer_encoder.3} parent=11 // pred_check
        %p321 = pneg %p118
      $region26: #{transformer_encoder.3} parent=11 // pred_check_branch
        %323 = sbr.rel (%p321) target = $region28
      $region27: #{transformer_encoder.3} parent=11 // pred_region
        _
      $region28: #{transformer_encoder.3} parent=11 // pred_fallthru
        _
      // Predicated region
      $region29: #{transformer_encoder.3} parent=11 // pred_check
        %p324 = pneg %p139
      $region30: #{transformer_encoder.3} parent=11 // pred_check_branch
        %326 = sbr.rel (%p324) target = $region32
      $region31: #{transformer_encoder.3} parent=11 // pred_region
        _
      $region32: #{transformer_encoder.3} parent=11 // pred_fallthru
        _
      // Predicated region
      $region33: #{transformer_encoder.3} parent=11 // pred_check
        %p327 = pneg %p160
      $region34: #{transformer_encoder.3} parent=11 // pred_check_branch
        %329 = sbr.rel (%p327) target = $region36
      $region35: #{transformer_encoder.3} parent=11 // pred_region
        _
      $region36: #{transformer_encoder.3} parent=11 // pred_fallthru
        _
      // Predicated region
      $region37: #{transformer_encoder.3} parent=11 // pred_check
        %p330 = pneg %p181
      $region38: #{transformer_encoder.3} parent=11 // pred_check_branch
        %332 = sbr.rel (%p330) target = $region40
      $region39: #{transformer_encoder.3} parent=11 // pred_region
        _
      $region40: #{transformer_encoder.3} parent=11 // pred_fallthru
        _
      // Predicated region
      $region41: #{transformer_encoder.3} parent=11 // pred_check
        %p333 = pneg %p202
      $region42: #{transformer_encoder.3} parent=11 // pred_check_branch
        %335 = sbr.rel (%p333) target = $region44
      $region43: #{transformer_encoder.3} parent=11 // pred_region
        _
      $region44: #{transformer_encoder.3} parent=11 // pred_fallthru
        _
      // Predicated region
      $region45: #{transformer_encoder.3} parent=11 // pred_check
        %p336 = pneg %p223
      $region46: #{transformer_encoder.3} parent=11 // pred_check_branch
        %338 = sbr.rel (%p336) target = $region48
      $region47: #{transformer_encoder.3} parent=11 // pred_region
        _
      $region48: #{transformer_encoder.3} parent=11 // pred_fallthru
        _
      // Predicated region
      $region49: #{transformer_encoder.3} parent=11 // pred_check
        %p339 = pneg %p244
      $region50: #{transformer_encoder.3} parent=11 // pred_check_branch
        %341 = sbr.rel (%p339) target = $region52
      $region51: #{transformer_encoder.3} parent=11 // pred_region
        _
      $region52: #{transformer_encoder.3} parent=11 // pred_fallthru
        _
      // Predicated region
      $region53: #{transformer_encoder.3} parent=11 // pred_check
        %p342 = pneg %p265
      $region54: #{transformer_encoder.3} parent=11 // pred_check_branch
        %344 = sbr.rel (%p342) target = $region56
      $region55: #{transformer_encoder.3} parent=11 // pred_region
        _
      $region56: #{transformer_encoder.3} parent=11 // pred_fallthru
        _
    $region12: #{transformer_encoder.3} parent=5 // pred_fallthru
      _
    %p345 = scmp.lt.s32.totalorder %s17, 2
    // Predicated region
    $region57: #{transformer_encoder.3} parent=5 // pred_check
      %p346 = pneg %p345
    $region58: #{transformer_encoder.3} parent=5 // pred_check_branch
      %348 = sbr.rel (%p346) target = $region60
    $region59: #{transformer_encoder.3} parent=5 // pred_region
      _
    $region60: #{transformer_encoder.3} parent=5 // pred_fallthru
      _
    %p349 = scmp.le.s32.totalorder 1, %s17
    %p350 = scmp.lt.s32.totalorder %s17, 3
    %p351 = pnand %p349, %p350
    %p352 = pneg %p351
    // Predicated region
    $region61: #{transformer_encoder.3} parent=5 // pred_check
      _
    $region62: #{transformer_encoder.3} parent=5 // pred_check_branch
      %354 = sbr.rel (%p351) target = $region64
    $region63: #{transformer_encoder.3} parent=5 // pred_region
      %s355 = ssub.s32 %s17, 1
      %p356 = scmp.lt.s32.totalorder %s26, 1
      %s357 = scalar_select %p356, %s26, 1
      %s358 = smul.addr %s357, 4
      %s359 = scalar_lea.vmem %s0, %s358
      %p360 = pneg %p55
      %p361 = pneg %p52
      %p362 = pneg %p76
      %p363 = pneg %p73
      %p364 = pneg %p97
      %p365 = pneg %p94
      %p366 = pneg %p118
      %p367 = pneg %p115
      %p368 = pneg %p139
      %p369 = pneg %p136
      %p370 = pneg %p160
      %p371 = pneg %p157
      %p372 = pneg %p181
      %p373 = pneg %p178
      %p374 = pneg %p202
      %p375 = pneg %p199
      %p376 = pneg %p223
      %p377 = pneg %p220
      %p378 = pneg %p244
      %p379 = pneg %p241
      %p380 = pneg %p265
      %p381 = pneg %p262
      %p382 = pneg %p293
      %p383 = pneg %p290
      %p384 = scmp.lt.s32.totalorder %s26, 1
      %s385 = scalar_select %p384, %s26, 1
      %p386 = scmp.lt.s32.totalorder %s27, 0
      %s387 = scalar_select %p386, %s27, 0
      %s388 = sadd.s32 %s387, %s385
      %s389 = smul.addr %s388, 4
      %s390 = scalar_lea.vmem %s11, %s389
      %p391 = scmp.lt.s32.totalorder %s26, 1
      %s392 = scalar_select %p391, %s26, 1
      %s393 = smul.addr %s392, 4
      %s394 = scalar_lea.vmem %s0, %s393
      %p395 = scmp.lt.s32.totalorder %s26, 1
      %s396 = scalar_select %p395, %s26, 1
      %p397 = scmp.lt.s32.totalorder %s27, 0
      %s398 = scalar_select %p397, %s27, 0
      %s399 = sadd.s32 %s398, %s396
      %s400 = smul.addr %s399, 4
      %s401 = scalar_lea.vmem %s11, %s400
      %p403 = scmp.eq.s32.totalorder %s27, 0
      // Predicated region
      $region65: #{transformer_encoder.3} parent=63 // pred_check
        %p404 = pneg %p403
      $region66: #{transformer_encoder.3} parent=63 // pred_check_branch
        %406 = sbr.rel (%p404) target = $region68
      $region67: #{transformer_encoder.3} parent=63 // pred_region
        %v407 = vld [vmem:[%s394] sm:$0xf]
        %v408 = vld [vmem:[%s1] sm:$0xf]
        %v409 = vld [vmem:[%s1 + $0x4] sm:$0xf]
        %v410 = vld [vmem:[%s1 + $0x8] sm:$0xf]
        %v411 = vld [vmem:[%s1 + $0xc] sm:$0xf]
        %v416 = vunpack.c.l.b16 %v408
        %v417 = vunpack.c.l.b16 %v409
        %v418 = vunpack.c.l.b16 %v410
        %v419 = vunpack.c.l.b16 %v411
        %v420 = vpack.c.b16 %v417, %v416
        %v421 = vpack.c.b16 %v419, %v418
        %vm424 = vcmask 261120
        %v426 = vsel %vm424, %v407, 0
        %428 = vmatpush.bf16.msra.mxu0 0
        %429 = vmatpush.bf16.msra.mxu0 0
        %430 = vmatpush.bf16.msra.mxu0 0
        %431 = vmatpush.bf16.msra.mxu0 0
        %432 = vmatpush.bf16.msra.mxu0 0
        %433 = vmatpush.bf16.msra.mxu0 0
        %434 = vmatpush.bf16.msra.mxu0 %v421
        %435 = vmatpush.bf16.msra.mxu0 %v420
        %436 = vmatmul.bf16.gmra.mxu0 %v426
        %v437 = vpop.f32.mrf.mxu0
        %v438 = vadd.f32 0.0, %v437
        %v439 = vpop.f32.mrf.mxu0
        %440 = vdwg.mxu0
        %v441 = vpack.c.bf16 %v438, %v438
        %vm442 = vcmask 781312
        %443 = vst.msk [vmem:[#allocation2] sm:$0xf] %vm442, %v441
      $region68: #{transformer_encoder.3} parent=63 // pred_fallthru
        _
      %s444 = smul.u32 %s27, 8
      %s445 = sshra.s32 %s444, 3
      %s446 = sand.u32 %s444, 7
      %s447 = smul.addr %s445, 4
      %s448 = scalar_lea.vmem %s394, %s447
      %v449 = vld [vmem:[%s448] sm:$0xf]
      %v450 = vunpack.c.l.bf16 %v449
      %s451 = smul.addr %s445, 4
      %s452 = scalar_lea.vmem [#allocation2], %s451
      %v453 = vld [vmem:[%s452] sm:$0xf]
      %v454 = vld [vmem:[#allocation2] sm:$0xf]
      %v456 = vunpack.c.l.b16 %v454
      %v457 = vpack.c.b16 %v456, %v456
      %458 = vrot.lane.b32.xlu0 %v457, 96
      %v459 = vpop.permute.xlu0 %458
      %vm460 = vcmask 31744
      %v462 = vsel %vm460, %v453, 0
      %v465 = vsel %vm460, %v459, 0
      %467 = vmatpush.bf16.xpose.msra.mxu0 0
      %468 = vmatpush.bf16.xpose.msra.mxu0 0
      %469 = vmatpush.bf16.xpose.msra.mxu0 0
      %470 = vmatpush.bf16.xpose.msra.mxu0 0
      %471 = vmatpush.bf16.xpose.msra.mxu0 0
      %472 = vmatpush.bf16.xpose.msra.mxu0 0
      %473 = vmatpush.bf16.xpose.msra.mxu0 0
      %474 = vmatpush.bf16.xpose.msra.mxu0 %v465
      %475 = vmatmul.bf16.gmra.mxu0 %v462
      %v476 = vpop.f32.mrf.mxu0
      %v477 = vadd.f32 0.0, %v476
      %v478 = vpop.f32.mrf.mxu0
      %479 = vdwg.mxu0
      %vm480 = vcmask 64512
      %v481 = vsel %vm480, %v477, -inf
      %482 = vmax.xlane.f32.xlu0 %v481
      %v483 = vpop.xlane.xlu0 %482
      %v484 = vsub.f32 %v477, %v483
      %v485 = vmul.f32 %v484, 1.442695
      %v486 = vpow.pop %v485
      %v487 = vsel %vm480, %v486, 0.0
      %488 = vadd.xlane.f32.xlu0 %v487
      %v489 = vpop.xlane.xlu0 %488
      %v490 = vrcp.pop %v489
      %v491 = vmul.f32 %v486, %v490
      %v492 = vpack.c.bf16 %v491, %v491
      %493 = vrot.lane.b32.xlu0 %v457, 64
      %v494 = vpop.permute.xlu0 %493
      %v496 = vsel %vm480, %v492, 0
      %vm498 = vcmask 1043456
      %v500 = vsel %vm498, %v494, 0
      %502 = vmatpush.bf16.msra.mxu0 0
      %503 = vmatpush.bf16.msra.mxu0 0
      %504 = vmatpush.bf16.msra.mxu0 0
      %505 = vmatpush.bf16.msra.mxu0 0
      %506 = vmatpush.bf16.msra.mxu0 0
      %507 = vmatpush.bf16.msra.mxu0 0
      %508 = vmatpush.bf16.msra.mxu0 0
      %509 = vmatpush.bf16.msra.mxu0 %v500
      %510 = vmatmul.bf16.gmra.mxu0 %v496
      %v511 = vpop.f32.mrf.mxu0
      %v512 = vadd.f32 0.0, %v511
      %v513 = vpop.f32.mrf.mxu0
      %514 = vdwg.mxu0
      %515 = vst.msk [vmem:[#allocation3] sm:$0xff] %vm460, %v512
      %v516 = vld [vmem:[#allocation2] sm:$0xf]
      %v518 = vunpack.c.l.b16 %v453
      %v519 = vpack.c.b16 %v518, %v518
      %520 = vrot.lane.b32.xlu0 %v519, 124
      %v521 = vpop.permute.xlu0 %520
      %v523 = vunpack.c.l.b16 %v516
      %v524 = vpack.c.b16 %v523, %v523
      %525 = vrot.lane.b32.xlu0 %v524, 92
      %v526 = vpop.permute.xlu0 %525
      %v528 = vsel %vm460, %v521, 0
      %v531 = vsel %vm460, %v526, 0
      %533 = vmatpush.bf16.xpose.msra.mxu0 0
      %534 = vmatpush.bf16.xpose.msra.mxu0 0
      %535 = vmatpush.bf16.xpose.msra.mxu0 0
      %536 = vmatpush.bf16.xpose.msra.mxu0 0
      %537 = vmatpush.bf16.xpose.msra.mxu0 0
      %538 = vmatpush.bf16.xpose.msra.mxu0 0
      %539 = vmatpush.bf16.xpose.msra.mxu0 0
      %540 = vmatpush.bf16.xpose.msra.mxu0 %v531
      %541 = vmatmul.bf16.gmra.mxu0 %v528
      %v542 = vpop.f32.mrf.mxu0
      %v543 = vadd.f32 0.0, %v542
      %v544 = vpop.f32.mrf.mxu0
      %545 = vdwg.mxu0
      %v546 = vsel %vm480, %v543, -inf
      %547 = vmax.xlane.f32.xlu0 %v546
      %v548 = vpop.xlane.xlu0 %547
      %v549 = vsub.f32 %v543, %v548
      %v550 = vmul.f32 %v549, 1.442695
      %v551 = vpow.pop %v550
      %v552 = vsel %vm480, %v551, 0.0
      %553 = vadd.xlane.f32.xlu0 %v552
      %v554 = vpop.xlane.xlu0 %553
      %v555 = vrcp.pop %v554
      %v556 = vmul.f32 %v551, %v555
      %v557 = vpack.c.bf16 %v556, %v556
      %558 = vrot.lane.b32.xlu0 %v524, 60
      %v559 = vpop.permute.xlu0 %558
      %v561 = vsel %vm480, %v557, 0
      %v564 = vsel %vm498, %v559, 0
      %566 = vmatpush.bf16.msra.mxu0 0
      %567 = vmatpush.bf16.msra.mxu0 0
      %568 = vmatpush.bf16.msra.mxu0 0
      %569 = vmatpush.bf16.msra.mxu0 0
      %570 = vmatpush.bf16.msra.mxu0 0
      %571 = vmatpush.bf16.msra.mxu0 0
      %572 = vmatpush.bf16.msra.mxu0 0
      %573 = vmatpush.bf16.msra.mxu0 %v564
      %574 = vmatmul.bf16.gmra.mxu0 %v561
      %v575 = vpop.f32.mrf.mxu0
      %v576 = vadd.f32 0.0, %v575
      %v577 = vpop.f32.mrf.mxu0
      %578 = vdwg.mxu0
      %580 = vrot.lane.b32.xlu0 %v576, 4
      %v581 = vpop.permute.xlu0 %580
      %vm583 = vcmask 64544
      %584 = vst.msk [vmem:[#allocation3] sm:$0xff] %vm583, %v581
      %v585 = vld [vmem:[#allocation2] sm:$0xf]
      %586 = vrot.lane.b32.xlu0 %v519, 120
      %v587 = vpop.permute.xlu0 %586
      %v589 = vunpack.c.l.b16 %v585
      %v590 = vpack.c.b16 %v589, %v589
      %591 = vrot.lane.b32.xlu0 %v590, 88
      %v592 = vpop.permute.xlu0 %591
      %v594 = vsel %vm460, %v587, 0
      %v597 = vsel %vm460, %v592, 0
      %599 = vmatpush.bf16.xpose.msra.mxu0 0
      %600 = vmatpush.bf16.xpose.msra.mxu0 0
      %601 = vmatpush.bf16.xpose.msra.mxu0 0
      %602 = vmatpush.bf16.xpose.msra.mxu0 0
      %603 = vmatpush.bf16.xpose.msra.mxu0 0
      %604 = vmatpush.bf16.xpose.msra.mxu0 0
      %605 = vmatpush.bf16.xpose.msra.mxu0 0
      %606 = vmatpush.bf16.xpose.msra.mxu0 %v597
      %607 = vmatmul.bf16.gmra.mxu0 %v594
      %v608 = vpop.f32.mrf.mxu0
      %v609 = vadd.f32 0.0, %v608
      %v610 = vpop.f32.mrf.mxu0
      %611 = vdwg.mxu0
      %v612 = vsel %vm480, %v609, -inf
      %613 = vmax.xlane.f32.xlu0 %v612
      %v614 = vpop.xlane.xlu0 %613
      %v615 = vsub.f32 %v609, %v614
      %v616 = vmul.f32 %v615, 1.442695
      %v617 = vpow.pop %v616
      %v618 = vsel %vm480, %v617, 0.0
      %619 = vadd.xlane.f32.xlu0 %v618
      %v620 = vpop.xlane.xlu0 %619
      %v621 = vrcp.pop %v620
      %v622 = vmul.f32 %v617, %v621
      %v623 = vpack.c.bf16 %v622, %v622
      %624 = vrot.lane.b32.xlu0 %v590, 56
      %v625 = vpop.permute.xlu0 %624
      %v627 = vsel %vm480, %v623, 0
      %v630 = vsel %vm498, %v625, 0
      %632 = vmatpush.bf16.msra.mxu0 0
      %633 = vmatpush.bf16.msra.mxu0 0
      %634 = vmatpush.bf16.msra.mxu0 0
      %635 = vmatpush.bf16.msra.mxu0 0
      %636 = vmatpush.bf16.msra.mxu0 0
      %637 = vmatpush.bf16.msra.mxu0 0
      %638 = vmatpush.bf16.msra.mxu0 0
      %639 = vmatpush.bf16.msra.mxu0 %v630
      %640 = vmatmul.bf16.gmra.mxu0 %v627
      %v641 = vpop.f32.mrf.mxu0
      %v642 = vadd.f32 0.0, %v641
      %v643 = vpop.f32.mrf.mxu0
      %644 = vdwg.mxu0
      %646 = vrot.lane.b32.xlu0 %v642, 8
      %v647 = vpop.permute.xlu0 %646
      %vm649 = vcmask 97344
      %650 = vst.msk [vmem:[#allocation3] sm:$0xff] %vm649, %v647
      %v651 = vld [vmem:[#allocation2] sm:$0xf]
      %652 = vrot.lane.b32.xlu0 %v519, 116
      %v653 = vpop.permute.xlu0 %652
      %v655 = vunpack.c.l.b16 %v651
      %v656 = vpack.c.b16 %v655, %v655
      %657 = vrot.lane.b32.xlu0 %v656, 84
      %v658 = vpop.permute.xlu0 %657
      %v660 = vsel %vm460, %v653, 0
      %v663 = vsel %vm460, %v658, 0
      %665 = vmatpush.bf16.xpose.msra.mxu0 0
      %666 = vmatpush.bf16.xpose.msra.mxu0 0
      %667 = vmatpush.bf16.xpose.msra.mxu0 0
      %668 = vmatpush.bf16.xpose.msra.mxu0 0
      %669 = vmatpush.bf16.xpose.msra.mxu0 0
      %670 = vmatpush.bf16.xpose.msra.mxu0 0
      %671 = vmatpush.bf16.xpose.msra.mxu0 0
      %672 = vmatpush.bf16.xpose.msra.mxu0 %v663
      %673 = vmatmul.bf16.gmra.mxu0 %v660
      %v674 = vpop.f32.mrf.mxu0
      %v675 = vadd.f32 0.0, %v674
      %v676 = vpop.f32.mrf.mxu0
      %677 = vdwg.mxu0
      %v678 = vsel %vm480, %v675, -inf
      %679 = vmax.xlane.f32.xlu0 %v678
      %v680 = vpop.xlane.xlu0 %679
      %v681 = vsub.f32 %v675, %v680
      %v682 = vmul.f32 %v681, 1.442695
      %v683 = vpow.pop %v682
      %v684 = vsel %vm480, %v683, 0.0
      %685 = vadd.xlane.f32.xlu0 %v684
      %v686 = vpop.xlane.xlu0 %685
      %v687 = vrcp.pop %v686
      %v688 = vmul.f32 %v683, %v687
      %v689 = vpack.c.bf16 %v688, %v688
      %690 = vrot.lane.b32.xlu0 %v656, 52
      %v691 = vpop.permute.xlu0 %690
      %v693 = vsel %vm480, %v689, 0
      %v696 = vsel %vm498, %v691, 0
      %698 = vmatpush.bf16.msra.mxu0 0
      %699 = vmatpush.bf16.msra.mxu0 0
      %700 = vmatpush.bf16.msra.mxu0 0
      %701 = vmatpush.bf16.msra.mxu0 0
      %702 = vmatpush.bf16.msra.mxu0 0
      %703 = vmatpush.bf16.msra.mxu0 0
      %704 = vmatpush.bf16.msra.mxu0 0
      %705 = vmatpush.bf16.msra.mxu0 %v696
      %706 = vmatmul.bf16.gmra.mxu0 %v693
      %v707 = vpop.f32.mrf.mxu0
      %v708 = vadd.f32 0.0, %v707
      %v709 = vpop.f32.mrf.mxu0
      %710 = vdwg.mxu0
      %712 = vrot.lane.b32.xlu0 %v708, 12
      %v713 = vpop.permute.xlu0 %712
      %vm715 = vcmask 130144
      %716 = vst.msk [vmem:[#allocation3] sm:$0xff] %vm715, %v713
      %v717 = vld [vmem:[#allocation2] sm:$0xf]
      %718 = vrot.lane.b32.xlu0 %v519, 112
      %v719 = vpop.permute.xlu0 %718
      %v721 = vunpack.c.l.b16 %v717
      %v722 = vpack.c.b16 %v721, %v721
      %723 = vrot.lane.b32.xlu0 %v722, 80
      %v724 = vpop.permute.xlu0 %723
      %v726 = vsel %vm460, %v719, 0
      %v729 = vsel %vm460, %v724, 0
      %731 = vmatpush.bf16.xpose.msra.mxu0 0
      %732 = vmatpush.bf16.xpose.msra.mxu0 0
      %733 = vmatpush.bf16.xpose.msra.mxu0 0
      %734 = vmatpush.bf16.xpose.msra.mxu0 0
      %735 = vmatpush.bf16.xpose.msra.mxu0 0
      %736 = vmatpush.bf16.xpose.msra.mxu0 0
      %737 = vmatpush.bf16.xpose.msra.mxu0 0
      %738 = vmatpush.bf16.xpose.msra.mxu0 %v729
      %739 = vmatmul.bf16.gmra.mxu0 %v726
      %v740 = vpop.f32.mrf.mxu0
      %v741 = vadd.f32 0.0, %v740
      %v742 = vpop.f32.mrf.mxu0
      %743 = vdwg.mxu0
      %v744 = vsel %vm480, %v741, -inf
      %745 = vmax.xlane.f32.xlu0 %v744
      %v746 = vpop.xlane.xlu0 %745
      %v747 = vsub.f32 %v741, %v746
      %v748 = vmul.f32 %v747, 1.442695
      %v749 = vpow.pop %v748
      %v750 = vsel %vm480, %v749, 0.0
      %751 = vadd.xlane.f32.xlu0 %v750
      %v752 = vpop.xlane.xlu0 %751
      %v753 = vrcp.pop %v752
      %v754 = vmul.f32 %v749, %v753
      %v755 = vpack.c.bf16 %v754, %v754
      %756 = vrot.lane.b32.xlu0 %v722, 48
      %v757 = vpop.permute.xlu0 %756
      %v759 = vsel %vm480, %v755, 0
      %v762 = vsel %vm498, %v757, 0
      %764 = vmatpush.bf16.msra.mxu0 0
      %765 = vmatpush.bf16.msra.mxu0 0
      %766 = vmatpush.bf16.msra.mxu0 0
      %767 = vmatpush.bf16.msra.mxu0 0
      %768 = vmatpush.bf16.msra.mxu0 0
      %769 = vmatpush.bf16.msra.mxu0 0
      %770 = vmatpush.bf16.msra.mxu0 0
      %771 = vmatpush.bf16.msra.mxu0 %v762
      %772 = vmatmul.bf16.gmra.mxu0 %v759
      %v773 = vpop.f32.mrf.mxu0
      %v774 = vadd.f32 0.0, %v773
      %v775 = vpop.f32.mrf.mxu0
      %776 = vdwg.mxu0
      %778 = vrot.lane.b32.xlu0 %v774, 16
      %v779 = vpop.permute.xlu0 %778
      %vm781 = vcmask 162944
      %782 = vst.msk [vmem:[#allocation3] sm:$0xff] %vm781, %v779
      %v783 = vld [vmem:[#allocation2] sm:$0xf]
      %784 = vrot.lane.b32.xlu0 %v519, 108
      %v785 = vpop.permute.xlu0 %784
      %v787 = vunpack.c.l.b16 %v783
      %v788 = vpack.c.b16 %v787, %v787
      %789 = vrot.lane.b32.xlu0 %v788, 76
      %v790 = vpop.permute.xlu0 %789
      %v792 = vsel %vm460, %v785, 0
      %v795 = vsel %vm460, %v790, 0
      %797 = vmatpush.bf16.xpose.msra.mxu0 0
      %798 = vmatpush.bf16.xpose.msra.mxu0 0
      %799 = vmatpush.bf16.xpose.msra.mxu0 0
      %800 = vmatpush.bf16.xpose.msra.mxu0 0
      %801 = vmatpush.bf16.xpose.msra.mxu0 0
      %802 = vmatpush.bf16.xpose.msra.mxu0 0
      %803 = vmatpush.bf16.xpose.msra.mxu0 0
      %804 = vmatpush.bf16.xpose.msra.mxu0 %v795
      %805 = vmatmul.bf16.gmra.mxu0 %v792
      %v806 = vpop.f32.mrf.mxu0
      %v807 = vadd.f32 0.0, %v806
      %v808 = vpop.f32.mrf.mxu0
      %809 = vdwg.mxu0
      %v810 = vsel %vm480, %v807, -inf
      %811 = vmax.xlane.f32.xlu0 %v810
      %v812 = vpop.xlane.xlu0 %811
      %v813 = vsub.f32 %v807, %v812
      %v814 = vmul.f32 %v813, 1.442695
      %v815 = vpow.pop %v814
      %v816 = vsel %vm480, %v815, 0.0
      %817 = vadd.xlane.f32.xlu0 %v816
      %v818 = vpop.xlane.xlu0 %817
      %v819 = vrcp.pop %v818
      %v820 = vmul.f32 %v815, %v819
      %v821 = vpack.c.bf16 %v820, %v820
      %822 = vrot.lane.b32.xlu0 %v788, 44
      %v823 = vpop.permute.xlu0 %822
      %v825 = vsel %vm480, %v821, 0
      %v828 = vsel %vm498, %v823, 0
      %830 = vmatpush.bf16.msra.mxu0 0
      %831 = vmatpush.bf16.msra.mxu0 0
      %832 = vmatpush.bf16.msra.mxu0 0
      %833 = vmatpush.bf16.msra.mxu0 0
      %834 = vmatpush.bf16.msra.mxu0 0
      %835 = vmatpush.bf16.msra.mxu0 0
      %836 = vmatpush.bf16.msra.mxu0 0
      %837 = vmatpush.bf16.msra.mxu0 %v828
      %838 = vmatmul.bf16.gmra.mxu0 %v825
      %v839 = vpop.f32.mrf.mxu0
      %v840 = vadd.f32 0.0, %v839
      %v841 = vpop.f32.mrf.mxu0
      %842 = vdwg.mxu0
      %844 = vrot.lane.b32.xlu0 %v840, 20
      %v845 = vpop.permute.xlu0 %844
      %vm847 = vcmask 195744
      %848 = vst.msk [vmem:[#allocation3] sm:$0xff] %vm847, %v845
      %v849 = vld [vmem:[#allocation2] sm:$0xf]
      %850 = vrot.lane.b32.xlu0 %v519, 104
      %v851 = vpop.permute.xlu0 %850
      %v853 = vunpack.c.l.b16 %v849
      %v854 = vpack.c.b16 %v853, %v853
      %855 = vrot.lane.b32.xlu0 %v854, 72
      %v856 = vpop.permute.xlu0 %855
      %v858 = vsel %vm460, %v851, 0
      %v861 = vsel %vm460, %v856, 0
      %863 = vmatpush.bf16.xpose.msra.mxu0 0
      %864 = vmatpush.bf16.xpose.msra.mxu0 0
      %865 = vmatpush.bf16.xpose.msra.mxu0 0
      %866 = vmatpush.bf16.xpose.msra.mxu0 0
      %867 = vmatpush.bf16.xpose.msra.mxu0 0
      %868 = vmatpush.bf16.xpose.msra.mxu0 0
      %869 = vmatpush.bf16.xpose.msra.mxu0 0
      %870 = vmatpush.bf16.xpose.msra.mxu0 %v861
      %871 = vmatmul.bf16.gmra.mxu0 %v858
      %v872 = vpop.f32.mrf.mxu0
      %v873 = vadd.f32 0.0, %v872
      %v874 = vpop.f32.mrf.mxu0
      %875 = vdwg.mxu0
      %v876 = vsel %vm480, %v873, -inf
      %877 = vmax.xlane.f32.xlu0 %v876
      %v878 = vpop.xlane.xlu0 %877
      %v879 = vsub.f32 %v873, %v878
      %v880 = vmul.f32 %v879, 1.442695
      %v881 = vpow.pop %v880
      %v882 = vsel %vm480, %v881, 0.0
      %883 = vadd.xlane.f32.xlu0 %v882
      %v884 = vpop.xlane.xlu0 %883
      %v885 = vrcp.pop %v884
      %v886 = vmul.f32 %v881, %v885
      %v887 = vpack.c.bf16 %v886, %v886
      %888 = vrot.lane.b32.xlu0 %v854, 40
      %v889 = vpop.permute.xlu0 %888
      %v891 = vsel %vm480, %v887, 0
      %v894 = vsel %vm498, %v889, 0
      %896 = vmatpush.bf16.msra.mxu0 0
      %897 = vmatpush.bf16.msra.mxu0 0
      %898 = vmatpush.bf16.msra.mxu0 0
      %899 = vmatpush.bf16.msra.mxu0 0
      %900 = vmatpush.bf16.msra.mxu0 0
      %901 = vmatpush.bf16.msra.mxu0 0
      %902 = vmatpush.bf16.msra.mxu0 0
      %903 = vmatpush.bf16.msra.mxu0 %v894
      %904 = vmatmul.bf16.gmra.mxu0 %v891
      %v905 = vpop.f32.mrf.mxu0
      %v906 = vadd.f32 0.0, %v905
      %v907 = vpop.f32.mrf.mxu0
      %908 = vdwg.mxu0
      %910 = vrot.lane.b32.xlu0 %v906, 24
      %v911 = vpop.permute.xlu0 %910
      %vm913 = vcmask 228544
      %914 = vst.msk [vmem:[#allocation3] sm:$0xff] %vm913, %v911
      %v915 = vld [vmem:[#allocation2] sm:$0xf]
      %916 = vrot.lane.b32.xlu0 %v519, 100
      %v917 = vpop.permute.xlu0 %916
      %v919 = vunpack.c.l.b16 %v915
      %v920 = vpack.c.b16 %v919, %v919
      %921 = vrot.lane.b32.xlu0 %v920, 68
      %v922 = vpop.permute.xlu0 %921
      %v924 = vsel %vm460, %v917, 0
      %v927 = vsel %vm460, %v922, 0
      %929 = vmatpush.bf16.xpose.msra.mxu0 0
      %930 = vmatpush.bf16.xpose.msra.mxu0 0
      %931 = vmatpush.bf16.xpose.msra.mxu0 0
      %932 = vmatpush.bf16.xpose.msra.mxu0 0
      %933 = vmatpush.bf16.xpose.msra.mxu0 0
      %934 = vmatpush.bf16.xpose.msra.mxu0 0
      %935 = vmatpush.bf16.xpose.msra.mxu0 0
      %936 = vmatpush.bf16.xpose.msra.mxu0 %v927
      %937 = vmatmul.bf16.gmra.mxu0 %v924
      %v938 = vpop.f32.mrf.mxu0
      %v939 = vadd.f32 0.0, %v938
      %v940 = vpop.f32.mrf.mxu0
      %941 = vdwg.mxu0
      %v942 = vsel %vm480, %v939, -inf
      %943 = vmax.xlane.f32.xlu0 %v942
      %v944 = vpop.xlane.xlu0 %943
      %v945 = vsub.f32 %v939, %v944
      %v946 = vmul.f32 %v945, 1.442695
      %v947 = vpow.pop %v946
      %v948 = vsel %vm480, %v947, 0.0
      %949 = vadd.xlane.f32.xlu0 %v948
      %v950 = vpop.xlane.xlu0 %949
      %v951 = vrcp.pop %v950
      %v952 = vmul.f32 %v947, %v951
      %v953 = vpack.c.bf16 %v952, %v952
      %954 = vrot.lane.b32.xlu0 %v920, 36
      %v955 = vpop.permute.xlu0 %954
      %v957 = vsel %vm480, %v953, 0
      %v960 = vsel %vm498, %v955, 0
      %962 = vmatpush.bf16.msra.mxu0 0
      %963 = vmatpush.bf16.msra.mxu0 0
      %964 = vmatpush.bf16.msra.mxu0 0
      %965 = vmatpush.bf16.msra.mxu0 0
      %966 = vmatpush.bf16.msra.mxu0 0
      %967 = vmatpush.bf16.msra.mxu0 0
      %968 = vmatpush.bf16.msra.mxu0 0
      %969 = vmatpush.bf16.msra.mxu0 %v960
      %970 = vmatmul.bf16.gmra.mxu0 %v957
      %v971 = vpop.f32.mrf.mxu0
      %v972 = vadd.f32 0.0, %v971
      %v973 = vpop.f32.mrf.mxu0
      %974 = vdwg.mxu0
      %976 = vrot.lane.b32.xlu0 %v972, 28
      %v977 = vpop.permute.xlu0 %976
      %vm979 = vcmask 261344
      %980 = vst.msk [vmem:[#allocation3] sm:$0xff] %vm979, %v977
      %v981 = vld [vmem:[#allocation3] sm:$0xff]
      %v982 = vpack.c.bf16 %v981, %v981
      %v983 = vld [vmem:[%s2] sm:$0xf]
      %v984 = vld [vmem:[%s2 + $0x4] sm:$0xf]
      %v985 = vld [vmem:[%s2 + $0x8] sm:$0xf]
      %v986 = vld [vmem:[%s2 + $0xc] sm:$0xf]
      %v991 = vunpack.c.l.b16 %v983
      %v992 = vunpack.c.l.b16 %v984
      %v993 = vunpack.c.l.b16 %v985
      %v994 = vunpack.c.l.b16 %v986
      %v995 = vpack.c.b16 %v992, %v991
      %v996 = vpack.c.b16 %v994, %v993
      %vm999 = vcmask 261120
      %v1001 = vsel %vm999, %v982, 0
      %1003 = vmatpush.bf16.msra.mxu0 0
      %1004 = vmatpush.bf16.msra.mxu0 0
      %1005 = vmatpush.bf16.msra.mxu0 0
      %1006 = vmatpush.bf16.msra.mxu0 0
      %1007 = vmatpush.bf16.msra.mxu0 0
      %1008 = vmatpush.bf16.msra.mxu0 0
      %1009 = vmatpush.bf16.msra.mxu0 %v996
      %1010 = vmatpush.bf16.msra.mxu0 %v995
      %1011 = vmatmul.bf16.gmra.mxu0 %v1001
      %v1012 = vpop.f32.mrf.mxu0
      %v1013 = vadd.f32 %v450, %v1012
      %v1014 = vpop.f32.mrf.mxu0
      %1015 = vdwg.mxu0
      %v1016 = vld [vmem:[%s3] sm:$0x1]
      %v1017 = vld [vmem:[%s4] sm:$0x1]
      %v1018 = vsel %vm999, %v1013, 0.0
      %1019 = vadd.xlane.f32.xlu0 %v1018
      %v1020 = vpop.xlane.xlu0 %1019
      %v1021 = vrcp.pop 32.0
      %v1022 = vmul.f32 32.0, %v1021
      %v1023 = vsub.f32 1.0, %v1022
      %v1024 = vmul.f32 %v1021, %v1023
      %v1025 = vadd.f32 %v1021, %v1024
      %vm1026 = vweird.f32 %v1021
      %v1027 = vsel %vm1026, %v1021, %v1025
      %v1028 = vmul.f32 %v1020, %v1027
      %v1029 = vsub.f32 %v1013, %v1028
      %v1030 = vmul.f32 %v1029, %v1029
      %v1031 = vsel %vm999, %v1030, 0.0
      %1032 = vadd.xlane.f32.xlu0 %v1031
      %v1033 = vpop.xlane.xlu0 %1032
      %v1034 = vmul.f32 %v1033, %v1027
      %v1035 = vadd.f32 %v1034, 1e-05
      %v1036 = vrsqrt.pop %v1035
      %v1037 = vmul.f32 %v1036, %v1035
      %v1038 = vmul.f32 %v1037, %v1036
      %v1039 = vmul.f32 0.5, %v1038
      %v1040 = vsub.f32 1.5, %v1039
      %v1041 = vmul.f32 %v1036, %v1040
      %vm1042 = vweird.f32 %v1035
      %vm1043 = vweird.f32 %v1036
      %vm1044 = vmor %vm1042, %vm1043
      %v1045 = vsel %vm1044, %v1036, %v1041
      %v1046 = vmul.f32 %v1029, %v1045
      %v1048 = vperm.slane %v1016, 0
      %v1050 = vmul.f32 %v1046, %v1048
      %v1052 = vperm.slane %v1017, 0
      %v1054 = vadd.f32 %v1050, %v1052
      %v1055 = vpack.c.bf16 %v1054, %v1054
      %v1056 = vld [vmem:[%s5] sm:$0xf]
      %v1057 = vld [vmem:[%s5 + $0x4] sm:$0xf]
      %v1058 = vld [vmem:[%s5 + $0x8] sm:$0xf]
      %v1059 = vld [vmem:[%s5 + $0xc] sm:$0xf]
      %v1060 = vld [vmem:[%s6] sm:$0x1]
      %v1062 = vperm.slane %v1060, 0
      %v1068 = vunpack.c.l.b16 %v1056
      %v1069 = vunpack.c.l.b16 %v1057
      %v1070 = vunpack.c.l.b16 %v1058
      %v1071 = vunpack.c.l.b16 %v1059
      %v1072 = vpack.c.b16 %v1069, %v1068
      %v1073 = vpack.c.b16 %v1071, %v1070
      %v1077 = vsel %vm999, %v1055, 0
      %1079 = vmatpush.bf16.msra.mxu0 0
      %1080 = vmatpush.bf16.msra.mxu0 0
      %1081 = vmatpush.bf16.msra.mxu0 0
      %1082 = vmatpush.bf16.msra.mxu0 0
      %1083 = vmatpush.bf16.msra.mxu0 0
      %1084 = vmatpush.bf16.msra.mxu0 0
      %1085 = vmatpush.bf16.msra.mxu0 %v1073
      %1086 = vmatpush.bf16.msra.mxu0 %v1072
      %1087 = vmatmul.bf16.gmra.mxu0 %v1077
      %v1088 = vpop.f32.mrf.mxu0
      %v1089 = vadd.f32 %v1062, %v1088
      %v1090 = vpop.f32.mrf.mxu0
      %1091 = vdwg.mxu0
      %v1092 = vmul.f32 %v1089, 0.5
      %v1093 = vmul.f32 %v1089, 0.70710677
      %v1094 = vmul.f32 %v1093, %v1093
      %v1095 = vmin.f32 16.0, %v1094
      %v1096 = vmul.f32 %v1095, 2.1237322e-06
      %v1097 = vadd.f32 %v1096, 0.00028619796
      %v1098 = vmul.f32 %v1095, %v1097
      %v1099 = vadd.f32 %v1098, 0.0036580483
      %v1100 = vmul.f32 %v1095, %v1099
      %v1101 = vadd.f32 %v1100, 0.05243302
      %v1102 = vmul.f32 %v1095, %v1101
      %v1103 = vadd.f32 %v1102, 0.18741608
      %v1104 = vmul.f32 %v1095, %v1103
      %v1105 = vadd.f32 %v1104, 1.1283791
      %v1106 = vmul.f32 %v1093, %v1105
      %v1107 = vmul.f32 %v1095, 3.8918573e-05
      %v1108 = vadd.f32 %v1107, 0.001143296
      %v1109 = vmul.f32 %v1095, %v1108
      %v1110 = vadd.f32 %v1109, 0.014752088
      %v1111 = vmul.f32 %v1095, %v1110
      %v1112 = vadd.f32 %v1111, 0.112945676
      %v1113 = vmul.f32 %v1095, %v1112
      %v1114 = vadd.f32 %v1113, 0.4994258
      %v1115 = vmul.f32 %v1095, %v1114
      %v1116 = vadd.f32 %v1115, 1.0
      %v1117 = vrcp.pop %v1116
      %v1118 = vmul.f32 %v1116, %v1117
      %v1119 = vsub.f32 1.0, %v1118
      %v1120 = vmul.f32 %v1117, %v1119
      %v1121 = vadd.f32 %v1117, %v1120
      %vm1122 = vweird.f32 %v1116
      %vm1123 = vweird.f32 %v1117
      %vm1124 = vmor %vm1122, %vm1123
      %v1125 = vsel %vm1124, %v1117, %v1121
      %v1126 = vand.u32 2147483647, %v1116
      %vm1127 = vcmp.eq.f32.partialorder %v1126, 8.507059e+37
      %v1128 = vand.u32 %v1116, 2147483648
      %v1129 = vor.u32 1.1754944e-38, %v1128
      %v1130 = vsel %vm1127, %v1129, %v1125
      %v1131 = vmul.f32 %v1106, %v1130
      %v1132 = vmin.f32 %v1131, 1.0
      %v1133 = vmax.f32 %v1132, -1.0
      %v1134 = vadd.f32 %v1133, 1.0
      %v1135 = vmul.f32 %v1092, %v1134
      %v1136 = vpack.c.bf16 %v1135, %v1135
      %v1137 = vld [vmem:[%s7] sm:$0xf]
      %v1138 = vld [vmem:[%s7 + $0x4] sm:$0xf]
      %v1139 = vld [vmem:[%s7 + $0x8] sm:$0xf]
      %v1140 = vld [vmem:[%s7 + $0xc] sm:$0xf]
      %v1141 = vld [vmem:[%s7 + $0x10] sm:$0xf]
      %v1142 = vld [vmem:[%s7 + $0x14] sm:$0xf]
      %v1143 = vld [vmem:[%s7 + $0x18] sm:$0xf]
      %v1144 = vld [vmem:[%s7 + $0x1c] sm:$0xf]
      %v1145 = vld [vmem:[%s8] sm:$0x1]
      %v1147 = vperm.slane %v1145, 0
      %v1157 = vunpack.c.l.b16 %v1137
      %v1158 = vunpack.c.l.b16 %v1138
      %v1159 = vunpack.c.l.b16 %v1139
      %v1160 = vunpack.c.l.b16 %v1140
      %v1161 = vunpack.c.l.b16 %v1141
      %v1162 = vunpack.c.l.b16 %v1142
      %v1163 = vunpack.c.l.b16 %v1143
      %v1164 = vunpack.c.l.b16 %v1144
      %v1165 = vpack.c.b16 %v1158, %v1157
      %v1166 = vpack.c.b16 %v1160, %v1159
      %v1167 = vpack.c.b16 %v1162, %v1161
      %v1168 = vpack.c.b16 %v1164, %v1163
      %vm1173 = vcmask 523264
      %v1175 = vsel %vm1173, %v1136, 0
      %1177 = vmatpush.bf16.msra.mxu0 0
      %1178 = vmatpush.bf16.msra.mxu0 0
      %1179 = vmatpush.bf16.msra.mxu0 0
      %1180 = vmatpush.bf16.msra.mxu0 0
      %1181 = vmatpush.bf16.msra.mxu0 %v1168
      %1182 = vmatpush.bf16.msra.mxu0 %v1167
      %1183 = vmatpush.bf16.msra.mxu0 %v1166
      %1184 = vmatpush.bf16.msra.mxu0 %v1165
      %1185 = vmatmul.bf16.gmra.mxu0 %v1175
      %v1186 = vpop.f32.mrf.mxu0
      %v1187 = vadd.f32 %v1147, %v1186
      %v1188 = vpop.f32.mrf.mxu0
      %1189 = vdwg.mxu0
      %v1190 = vadd.f32 %v1187, %v1054
      %v1191 = vld [vmem:[%s9] sm:$0x1]
      %v1192 = vld [vmem:[%s10] sm:$0x1]
      %v1193 = vsel %vm999, %v1190, 0.0
      %1194 = vadd.xlane.f32.xlu0 %v1193
      %v1195 = vpop.xlane.xlu0 %1194
      %v1196 = vmul.f32 %v1195, %v1027
      %v1197 = vsub.f32 %v1190, %v1196
      %v1198 = vmul.f32 %v1197, %v1197
      %v1199 = vsel %vm999, %v1198, 0.0
      %1200 = vadd.xlane.f32.xlu0 %v1199
      %v1201 = vpop.xlane.xlu0 %1200
      %v1202 = vmul.f32 %v1201, %v1027
      %v1203 = vadd.f32 %v1202, 1e-05
      %v1204 = vrsqrt.pop %v1203
      %v1205 = vmul.f32 %v1204, %v1203
      %v1206 = vmul.f32 %v1205, %v1204
      %v1207 = vmul.f32 0.5, %v1206
      %v1208 = vsub.f32 1.5, %v1207
      %v1209 = vmul.f32 %v1204, %v1208
      %vm1210 = vweird.f32 %v1203
      %vm1211 = vweird.f32 %v1204
      %vm1212 = vmor %vm1210, %vm1211
      %v1213 = vsel %vm1212, %v1204, %v1209
      %v1214 = vmul.f32 %v1197, %v1213
      %v1216 = vperm.slane %v1191, 0
      %v1218 = vmul.f32 %v1214, %v1216
      %v1220 = vperm.slane %v1192, 0
      %v1222 = vadd.f32 %v1218, %v1220
      %v1223 = vpack.c.bf16 %v1222, %v1222
      %vm1224 = vcmask 257024
      %1225 = vst.msk [vmem:[%s401] sm:$0xf] %vm1224, %v1223
      %p1226 = scmp.lt.s32.totalorder %s26, 1
      %s1227 = scalar_select %p1226, %s26, 1
      %p1228 = scmp.lt.s32.totalorder %s27, 0
      %s1229 = scalar_select %p1228, %s27, 0
      %s1230 = sadd.s32 %s1229, %s1227
      %s1231 = smul.addr %s1230, 4
      %s1232 = scalar_lea.vmem %s11, %s1231
      // Predicated region
      $region69: #{transformer_encoder.3} parent=63 // pred_check
        %p1233 = pneg %p290
      $region70: #{transformer_encoder.3} parent=63 // pred_check_branch
        %1235 = sbr.rel (%p1233) target = $region72
      $region71: #{transformer_encoder.3} parent=63 // pred_region
        _
      $region72: #{transformer_encoder.3} parent=63 // pred_fallthru
        _
    $region64: #{transformer_encoder.3} parent=5 // pred_fallthru
      _
    %p1236 = scmp.le.s32.totalorder 2, %s17
    // Predicated region
    $region73: #{transformer_encoder.3} parent=5 // pred_check
      %p1237 = pneg %p1236
    $region74: #{transformer_encoder.3} parent=5 // pred_check_branch
      %1239 = sbr.rel (%p1237) target = $region76
    $region75: #{transformer_encoder.3} parent=5 // pred_region
      %s1240 = ssub.s32 %s17, 2
      // Predicated region
      $region77: #{transformer_encoder.3} parent=75 // pred_check
        %p1241 = pneg %p296
      $region78: #{transformer_encoder.3} parent=75 // pred_check_branch
        %1243 = sbr.rel (%p1241) target = $region80
      $region79: #{transformer_encoder.3} parent=75 // pred_region
        %p1244 = scmp.lt.s32.totalorder %s28, 1
        %s1245 = scalar_select %p1244, %s28, 1
        %p1246 = scmp.lt.s32.totalorder %s29, 0
        %s1247 = scalar_select %p1246, %s29, 0
        %s1248 = sadd.s32 %s1247, %s1245
        %s1249 = smul.addr %s1248, 4
        %s1250 = scalar_lea.vmem %s11, %s1249
      $region80: #{transformer_encoder.3} parent=75 // pred_fallthru
        _
    $region76: #{transformer_encoder.3} parent=5 // pred_fallthru
      _
  $region6: #{transformer_encoder.3} parent=0 // loop_footer
    %s21 = sadd.s32 1, %s17
  $region7: #{transformer_encoder.3} parent=0 // loop_footer_branch
    %16 = sbr.rel target = $region3
  $region8: #{transformer_encoder.3} parent=0 // loop_exit
    _

// kernel: transformer_encoder.2
$region0: #{transformer_encoder.2}
  #allocation0 [shape = 'u32[]', space=smem, size = 0x4, offset = 0x4, fixed_abs, tag = 'smem constant byte address 0x4 - core index']
  #allocation1 [shape = 'u32[72,128]{1,0:T(1,128)}', space=vmem, size = 0x9000, scoped, tag = 'internal scratch']
  #allocation2 [shape = 'bf16[8,96]{1,0:T(8,128)(2,1)}', space=vmem, size = 0x800, scoped, tag = 'scratch operand']
  #allocation3 [shape = 'f32[8,32]{1,0:T(8,128)}', space=vmem, size = 0x1000, scoped, tag = 'scratch operand']
  %s0 = inlined_call_operand.vmem [shape: bf16[2,8,32], index: 0, kind: input, shape index: {}]
  %s1 = inlined_call_operand.vmem [shape: bf16[32,96], index: 1, kind: input, shape index: {}]
  %s2 = inlined_call_operand.vmem [shape: bf16[32,32], index: 2, kind: input, shape index: {}]
  %s3 = inlined_call_operand.vmem [shape: f32[1,32], index: 3, kind: input, shape index: {}]
  %s4 = inlined_call_operand.vmem [shape: f32[1,32], index: 4, kind: input, shape index: {}]
  %s5 = inlined_call_operand.hbm [shape: bf16[32,64], index: 5, kind: input, shape index: {}]
  %s6 = inlined_call_operand.vmem [shape: f32[1,64], index: 6, kind: input, shape index: {}]
  %s7 = inlined_call_operand.vmem [shape: bf16[64,32], index: 7, kind: input, shape index: {}]
  %s8 = inlined_call_operand.vmem [shape: f32[1,32], index: 8, kind: input, shape index: {}]
  %s9 = inlined_call_operand.vmem [shape: f32[1,32], index: 9, kind: input, shape index: {}]
  %s10 = inlined_call_operand.vmem [shape: f32[1,32], index: 10, kind: input, shape index: {}]
  %s11 = inlined_call_operand.vmem [shape: bf16[2,8,32], index: 11, kind: output, shape index: {}]
  %s12 = sld [smem:[#allocation0]]
  $region85: #{transformer_encoder.2} parent=0
    _
  %s14 = ssub.s32 1, %s12
  %s15 = scalar_select 0, %s14, %s12
  $region1: #{transformer_encoder.2} parent=0
    #allocation4 [shape = 'u8[8192]{0}', space=vmem, size = 0x2000, scoped, tag = 'input window, operand 5, single buffered']
    #allocation5 [shape = 's32[2]{0}', space=sflag, size = 0x8, scoped, tag = 'scoped memory for transformer_encoder.2']
    %16 = vsyncpa [#allocation5], 0
    loop: start=0, step=1, limit=4
    $region2: #{transformer_encoder.2} parent=1 // loop_pre_header
      _
    $region3: #{transformer_encoder.2} parent=1 // loop_header
      %s18 = sphi 0, %s22
      %p19 = scmp.ge.s32.totalorder %s18, 4
      %s25 = sphi 0, %s37
      %s26 = sphi 0, %s33
      %s27 = sphi 0, %s25
      %s28 = sphi 0, %s26
      %s29 = sphi 0, %s27
      %s30 = sphi 0, %s28
      %s40 = sphi 0, %s42
      %s43 = sphi 0, %s40
      %s44 = sphi 0, %s43
      %s60 = sphi 0, %s44
      %s64 = sphi 0, %s64
      %s66 = sphi 0, %s64
      %s67 = sphi 0, %s66
      %s81 = sphi 0, %s67
      %s85 = sphi 0, %s85
      %s87 = sphi 0, %s85
      %s88 = sphi 0, %s87
      %s102 = sphi 0, %s88
      %s106 = sphi 0, %s106
      %s108 = sphi 0, %s106
      %s109 = sphi 0, %s108
      %s123 = sphi 0, %s109
      %s127 = sphi 0, %s127
      %s129 = sphi 0, %s127
      %s130 = sphi 0, %s129
      %s144 = sphi 0, %s130
      %s148 = sphi 0, %s148
      %s150 = sphi 0, %s148
      %s151 = sphi 0, %s150
      %s165 = sphi 0, %s151
      %s169 = sphi 0, %s169
      %s171 = sphi 0, %s169
      %s172 = sphi 0, %s171
      %s186 = sphi 0, %s172
      %s190 = sphi 0, %s190
      %s192 = sphi 0, %s190
      %s193 = sphi 0, %s192
      %s207 = sphi 0, %s193
      %s211 = sphi 0, %s211
      %s213 = sphi 0, %s211
      %s214 = sphi 0, %s213
      %s228 = sphi 0, %s214
      %s232 = sphi 0, %s232
      %s234 = sphi 0, %s232
      %s235 = sphi 0, %s234
      %s249 = sphi 0, %s235
      %s253 = sphi 0, %s253
      %s255 = sphi 0, %s253
      %s256 = sphi 0, %s255
      %s270 = sphi 0, %s256
      %s278 = sphi 0, %s280
      %s281 = sphi 0, %s278
      %s282 = sphi 0, %s281
      %s298 = sphi 0, %s282
    $region4: #{transformer_encoder.2} parent=1 // loop_header_branch
      %21 = sbr.rel (%p19) target = $region8
    $region5: #{transformer_encoder.2} parent=1 // loop_body
      %s23 = ssub.s32 %s18, 1
      %s24 = ssub.s32 %s18, 2
      %s31 = sadd.s32 1, %s26
      %p32 = scmp.ge.s32.totalorder %s31, 1
      %s33 = scalar_select %p32, 0, %s31
      %s34 = sadd.s32 1, %s25
      %s35 = scalar_select %p32, %s34, %s25
      %p36 = scmp.ge.s32.totalorder %s35, 2
      %s37 = scalar_select %p36, 0, %s35
      %s38 = ssub.s32 %s25, %s37
      %p39 = scmp.eq.s32.totalorder %s38, 0
      %s41 = sadd.s32 %s40, 1
      %s42 = scalar_select %p39, %s40, %s41
      %p45 = pneg %p39
      %p46 = scmp.eq.s32.totalorder %s18, 1
      %p47 = por %p45, %p46
      %p48 = scmp.ne.s32.totalorder %s40, %s43
      %p49 = scmp.eq.s32.totalorder %s18, 0
      %p50 = por %p48, %p49
      %p51 = scmp.ne.s32.totalorder %s40, %s43
      %p52 = scmp.eq.s32.totalorder %s23, 1
      %p53 = por %p51, %p52
      %p54 = scmp.ne.s32.totalorder %s43, %s44
      %p55 = scmp.eq.s32.totalorder %s23, 0
      %p56 = por %p54, %p55
      %p57 = scmp.ne.s32.totalorder %s43, %s44
      %p58 = scmp.eq.s32.totalorder %s24, 1
      %p59 = por %p57, %p58
      %p61 = scmp.ne.s32.totalorder %s44, %s60
      %p62 = scmp.eq.s32.totalorder %s24, 0
      %p63 = por %p61, %p62
      %s65 = sadd.s32 %s64, 1
      %p68 = scmp.eq.s32.totalorder %s18, 1
      %p69 = scmp.ne.s32.totalorder %s64, %s66
      %p70 = scmp.eq.s32.totalorder %s18, 0
      %p71 = por %p69, %p70
      %p72 = scmp.ne.s32.totalorder %s64, %s66
      %p73 = scmp.eq.s32.totalorder %s23, 1
      %p74 = por %p72, %p73
      %p75 = scmp.ne.s32.totalorder %s66, %s67
      %p76 = scmp.eq.s32.totalorder %s23, 0
      %p77 = por %p75, %p76
      %p78 = scmp.ne.s32.totalorder %s66, %s67
      %p79 = scmp.eq.s32.totalorder %s24, 1
      %p80 = por %p78, %p79
      %p82 = scmp.ne.s32.totalorder %s67, %s81
      %p83 = scmp.eq.s32.totalorder %s24, 0
      %p84 = por %p82, %p83
      %s86 = sadd.s32 %s85, 1
      %p89 = scmp.eq.s32.totalorder %s18, 1
      %p90 = scmp.ne.s32.totalorder %s85, %s87
      %p91 = scmp.eq.s32.totalorder %s18, 0
      %p92 = por %p90, %p91
      %p93 = scmp.ne.s32.totalorder %s85, %s87
      %p94 = scmp.eq.s32.totalorder %s23, 1
      %p95 = por %p93, %p94
      %p96 = scmp.ne.s32.totalorder %s87, %s88
      %p97 = scmp.eq.s32.totalorder %s23, 0
      %p98 = por %p96, %p97
      %p99 = scmp.ne.s32.totalorder %s87, %s88
      %p100 = scmp.eq.s32.totalorder %s24, 1
      %p101 = por %p99, %p100
      %p103 = scmp.ne.s32.totalorder %s88, %s102
      %p104 = scmp.eq.s32.totalorder %s24, 0
      %p105 = por %p103, %p104
      %s107 = sadd.s32 %s106, 1
      %p110 = scmp.eq.s32.totalorder %s18, 1
      %p111 = scmp.ne.s32.totalorder %s106, %s108
      %p112 = scmp.eq.s32.totalorder %s18, 0
      %p113 = por %p111, %p112
      %p114 = scmp.ne.s32.totalorder %s106, %s108
      %p115 = scmp.eq.s32.totalorder %s23, 1
      %p116 = por %p114, %p115
      %p117 = scmp.ne.s32.totalorder %s108, %s109
      %p118 = scmp.eq.s32.totalorder %s23, 0
      %p119 = por %p117, %p118
      %p120 = scmp.ne.s32.totalorder %s108, %s109
      %p121 = scmp.eq.s32.totalorder %s24, 1
      %p122 = por %p120, %p121
      %p124 = scmp.ne.s32.totalorder %s109, %s123
      %p125 = scmp.eq.s32.totalorder %s24, 0
      %p126 = por %p124, %p125
      %s128 = sadd.s32 %s127, 1
      %p131 = scmp.eq.s32.totalorder %s18, 1
      %p132 = scmp.ne.s32.totalorder %s127, %s129
      %p133 = scmp.eq.s32.totalorder %s18, 0
      %p134 = por %p132, %p133
      %p135 = scmp.ne.s32.totalorder %s127, %s129
      %p136 = scmp.eq.s32.totalorder %s23, 1
      %p137 = por %p135, %p136
      %p138 = scmp.ne.s32.totalorder %s129, %s130
      %p139 = scmp.eq.s32.totalorder %s23, 0
      %p140 = por %p138, %p139
      %p141 = scmp.ne.s32.totalorder %s129, %s130
      %p142 = scmp.eq.s32.totalorder %s24, 1
      %p143 = por %p141, %p142
      %p145 = scmp.ne.s32.totalorder %s130, %s144
      %p146 = scmp.eq.s32.totalorder %s24, 0
      %p147 = por %p145, %p146
      %s149 = sadd.s32 %s148, 1
      %p152 = scmp.eq.s32.totalorder %s18, 1
      %p153 = scmp.ne.s32.totalorder %s148, %s150
      %p154 = scmp.eq.s32.totalorder %s18, 0
      %p155 = por %p153, %p154
      %p156 = scmp.ne.s32.totalorder %s148, %s150
      %p157 = scmp.eq.s32.totalorder %s23, 1
      %p158 = por %p156, %p157
      %p159 = scmp.ne.s32.totalorder %s150, %s151
      %p160 = scmp.eq.s32.totalorder %s23, 0
      %p161 = por %p159, %p160
      %p162 = scmp.ne.s32.totalorder %s150, %s151
      %p163 = scmp.eq.s32.totalorder %s24, 1
      %p164 = por %p162, %p163
      %p166 = scmp.ne.s32.totalorder %s151, %s165
      %p167 = scmp.eq.s32.totalorder %s24, 0
      %p168 = por %p166, %p167
      %s170 = sadd.s32 %s169, 1
      %p173 = scmp.eq.s32.totalorder %s18, 1
      %p174 = scmp.ne.s32.totalorder %s169, %s171
      %p175 = scmp.eq.s32.totalorder %s18, 0
      %p176 = por %p174, %p175
      %p177 = scmp.ne.s32.totalorder %s169, %s171
      %p178 = scmp.eq.s32.totalorder %s23, 1
      %p179 = por %p177, %p178
      %p180 = scmp.ne.s32.totalorder %s171, %s172
      %p181 = scmp.eq.s32.totalorder %s23, 0
      %p182 = por %p180, %p181
      %p183 = scmp.ne.s32.totalorder %s171, %s172
      %p184 = scmp.eq.s32.totalorder %s24, 1
      %p185 = por %p183, %p184
      %p187 = scmp.ne.s32.totalorder %s172, %s186
      %p188 = scmp.eq.s32.totalorder %s24, 0
      %p189 = por %p187, %p188
      %s191 = sadd.s32 %s190, 1
      %p194 = scmp.eq.s32.totalorder %s18, 1
      %p195 = scmp.ne.s32.totalorder %s190, %s192
      %p196 = scmp.eq.s32.totalorder %s18, 0
      %p197 = por %p195, %p196
      %p198 = scmp.ne.s32.totalorder %s190, %s192
      %p199 = scmp.eq.s32.totalorder %s23, 1
      %p200 = por %p198, %p199
      %p201 = scmp.ne.s32.totalorder %s192, %s193
      %p202 = scmp.eq.s32.totalorder %s23, 0
      %p203 = por %p201, %p202
      %p204 = scmp.ne.s32.totalorder %s192, %s193
      %p205 = scmp.eq.s32.totalorder %s24, 1
      %p206 = por %p204, %p205
      %p208 = scmp.ne.s32.totalorder %s193, %s207
      %p209 = scmp.eq.s32.totalorder %s24, 0
      %p210 = por %p208, %p209
      %s212 = sadd.s32 %s211, 1
      %p215 = scmp.eq.s32.totalorder %s18, 1
      %p216 = scmp.ne.s32.totalorder %s211, %s213
      %p217 = scmp.eq.s32.totalorder %s18, 0
      %p218 = por %p216, %p217
      %p219 = scmp.ne.s32.totalorder %s211, %s213
      %p220 = scmp.eq.s32.totalorder %s23, 1
      %p221 = por %p219, %p220
      %p222 = scmp.ne.s32.totalorder %s213, %s214
      %p223 = scmp.eq.s32.totalorder %s23, 0
      %p224 = por %p222, %p223
      %p225 = scmp.ne.s32.totalorder %s213, %s214
      %p226 = scmp.eq.s32.totalorder %s24, 1
      %p227 = por %p225, %p226
      %p229 = scmp.ne.s32.totalorder %s214, %s228
      %p230 = scmp.eq.s32.totalorder %s24, 0
      %p231 = por %p229, %p230
      %s233 = sadd.s32 %s232, 1
      %p236 = scmp.eq.s32.totalorder %s18, 1
      %p237 = scmp.ne.s32.totalorder %s232, %s234
      %p238 = scmp.eq.s32.totalorder %s18, 0
      %p239 = por %p237, %p238
      %p240 = scmp.ne.s32.totalorder %s232, %s234
      %p241 = scmp.eq.s32.totalorder %s23, 1
      %p242 = por %p240, %p241
      %p243 = scmp.ne.s32.totalorder %s234, %s235
      %p244 = scmp.eq.s32.totalorder %s23, 0
      %p245 = por %p243, %p244
      %p246 = scmp.ne.s32.totalorder %s234, %s235
      %p247 = scmp.eq.s32.totalorder %s24, 1
      %p248 = por %p246, %p247
      %p250 = scmp.ne.s32.totalorder %s235, %s249
      %p251 = scmp.eq.s32.totalorder %s24, 0
      %p252 = por %p250, %p251
      %s254 = sadd.s32 %s253, 1
      %p257 = scmp.eq.s32.totalorder %s18, 1
      %p258 = scmp.ne.s32.totalorder %s253, %s255
      %p259 = scmp.eq.s32.totalorder %s18, 0
      %p260 = por %p258, %p259
      %p261 = scmp.ne.s32.totalorder %s253, %s255
      %p262 = scmp.eq.s32.totalorder %s23, 1
      %p263 = por %p261, %p262
      %p264 = scmp.ne.s32.totalorder %s255, %s256
      %p265 = scmp.eq.s32.totalorder %s23, 0
      %p266 = por %p264, %p265
      %p267 = scmp.ne.s32.totalorder %s255, %s256
      %p268 = scmp.eq.s32.totalorder %s24, 1
      %p269 = por %p267, %p268
      %p271 = scmp.ne.s32.totalorder %s256, %s270
      %p272 = scmp.eq.s32.totalorder %s24, 0
      %p273 = por %p271, %p272
      %s274 = ssub.s32 %s25, %s37
      %s275 = ssub.s32 %s26, %s33
      %s276 = sor.u32 %s274, %s275
      %p277 = scmp.eq.s32.totalorder %s276, 0
      %s279 = sadd.s32 %s278, 1
      %s280 = scalar_select %p277, %s278, %s279
      %p283 = pneg %p277
      %p284 = scmp.eq.s32.totalorder %s18, 1
      %p285 = por %p283, %p284
      %p286 = scmp.ne.s32.totalorder %s278, %s281
      %p287 = scmp.eq.s32.totalorder %s18, 0
      %p288 = por %p286, %p287
      %p289 = scmp.ne.s32.totalorder %s278, %s281
      %p290 = scmp.eq.s32.totalorder %s23, 1
      %p291 = por %p289, %p290
      %p292 = scmp.ne.s32.totalorder %s281, %s282
      %p293 = scmp.eq.s32.totalorder %s23, 0
      %p294 = por %p292, %p293
      %p295 = scmp.ne.s32.totalorder %s281, %s282
      %p296 = scmp.eq.s32.totalorder %s24, 1
      %p297 = por %p295, %p296
      %p299 = scmp.ne.s32.totalorder %s282, %s298
      %p300 = scmp.eq.s32.totalorder %s24, 0
      %p301 = por %p299, %p300
      %p302 = scmp.le.s32.totalorder 1, %s18
      %p303 = scmp.lt.s32.totalorder %s18, 3
      %p304 = pnand %p302, %p303
      %p305 = pneg %p304
      // Predicated region
      $region9: #{transformer_encoder.2} parent=5 // pred_check
        _
      $region10: #{transformer_encoder.2} parent=5 // pred_check_branch
        %307 = sbr.rel (%p304) target = $region12
      $region11: #{transformer_encoder.2} parent=5 // pred_region
        %s308 = ssub.s32 %s18, 1
        // Predicated region
        $region13: #{transformer_encoder.2} parent=11 // pred_check
          %p309 = pneg %p56
        $region14: #{transformer_encoder.2} parent=11 // pred_check_branch
          %311 = sbr.rel (%p309) target = $region16
        $region15: #{transformer_encoder.2} parent=11 // pred_region
          %p312 = scmp.lt.s32.totalorder %s27, 1
          %s313 = scalar_select %p312, %s27, 1
          %s314 = smul.addr %s313, 4
          %s315 = scalar_lea.vmem %s0, %s314
        $region16: #{transformer_encoder.2} parent=11 // pred_fallthru
          _
        // Predicated region
        $region17: #{transformer_encoder.2} parent=11 // pred_check
          %p316 = pneg %p77
        $region18: #{transformer_encoder.2} parent=11 // pred_check_branch
          %318 = sbr.rel (%p316) target = $region20
        $region19: #{transformer_encoder.2} parent=11 // pred_region
          _
        $region20: #{transformer_encoder.2} parent=11 // pred_fallthru
          _
        // Predicated region
        $region21: #{transformer_encoder.2} parent=11 // pred_check
          %p319 = pneg %p98
        $region22: #{transformer_encoder.2} parent=11 // pred_check_branch
          %321 = sbr.rel (%p319) target = $region24
        $region23: #{transformer_encoder.2} parent=11 // pred_region
          _
        $region24: #{transformer_encoder.2} parent=11 // pred_fallthru
          _
        // Predicated region
        $region25: #{transformer_encoder.2} parent=11 // pred_check
          %p322 = pneg %p119
        $region26: #{transformer_encoder.2} parent=11 // pred_check_branch
          %324 = sbr.rel (%p322) target = $region28
        $region27: #{transformer_encoder.2} parent=11 // pred_region
          _
        $region28: #{transformer_encoder.2} parent=11 // pred_fallthru
          _
        // Predicated region
        $region29: #{transformer_encoder.2} parent=11 // pred_check
          %p325 = pneg %p140
        $region30: #{transformer_encoder.2} parent=11 // pred_check_branch
          %327 = sbr.rel (%p325) target = $region32
        $region31: #{transformer_encoder.2} parent=11 // pred_region
          _
        $region32: #{transformer_encoder.2} parent=11 // pred_fallthru
          _
        // Predicated region
        $region33: #{transformer_encoder.2} parent=11 // pred_check
          %p328 = pneg %p161
        $region34: #{transformer_encoder.2} parent=11 // pred_check_branch
          %330 = sbr.rel (%p328) target = $region36
        $region35: #{transformer_encoder.2} parent=11 // pred_region
          %332 = vsyncadd [#allocation5], 0
          %s333 = sshll.u32 %s5, 4
          %s334 = int_to_ptr.hbm [resolvable:$true] %s333
          %s335 = sshll.u32 [#allocation4], 4
          %s336 = int_to_ptr.vmem [resolvable:$true] %s335
          %341 = dma.hbm_to_vmem [thread:$0]  %s334, 256, %s336, [#allocation5], 64, 64, 4
        $region36: #{transformer_encoder.2} parent=11 // pred_fallthru
          _
        // Predicated region
        $region37: #{transformer_encoder.2} parent=11 // pred_check
          %p342 = pneg %p182
        $region38: #{transformer_encoder.2} parent=11 // pred_check_branch
          %344 = sbr.rel (%p342) target = $region40
        $region39: #{transformer_encoder.2} parent=11 // pred_region
          _
        $region40: #{transformer_encoder.2} parent=11 // pred_fallthru
          _
        // Predicated region
        $region41: #{transformer_encoder.2} parent=11 // pred_check
          %p345 = pneg %p203
        $region42: #{transformer_encoder.2} parent=11 // pred_check_branch
          %347 = sbr.rel (%p345) target = $region44
        $region43: #{transformer_encoder.2} parent=11 // pred_region
          _
        $region44: #{transformer_encoder.2} parent=11 // pred_fallthru
          _
        // Predicated region
        $region45: #{transformer_encoder.2} parent=11 // pred_check
          %p348 = pneg %p224
        $region46: #{transformer_encoder.2} parent=11 // pred_check_branch
          %350 = sbr.rel (%p348) target = $region48
        $region47: #{transformer_encoder.2} parent=11 // pred_region
          _
        $region48: #{transformer_encoder.2} parent=11 // pred_fallthru
          _
        // Predicated region
        $region49: #{transformer_encoder.2} parent=11 // pred_check
          %p351 = pneg %p245
        $region50: #{transformer_encoder.2} parent=11 // pred_check_branch
          %353 = sbr.rel (%p351) target = $region52
        $region51: #{transformer_encoder.2} parent=11 // pred_region
          _
        $region52: #{transformer_encoder.2} parent=11 // pred_fallthru
          _
        // Predicated region
        $region53: #{transformer_encoder.2} parent=11 // pred_check
          %p354 = pneg %p266
        $region54: #{transformer_encoder.2} parent=11 // pred_check_branch
          %356 = sbr.rel (%p354) target = $region56
        $region55: #{transformer_encoder.2} parent=11 // pred_region
          _
        $region56: #{transformer_encoder.2} parent=11 // pred_fallthru
          _
      $region12: #{transformer_encoder.2} parent=5 // pred_fallthru
        _
      %p357 = scmp.lt.s32.totalorder %s18, 2
      // Predicated region
      $region57: #{transformer_encoder.2} parent=5 // pred_check
        %p358 = pneg %p357
      $region58: #{transformer_encoder.2} parent=5 // pred_check_branch
        %360 = sbr.rel (%p358) target = $region60
      $region59: #{transformer_encoder.2} parent=5 // pred_region
        _
      $region60: #{transformer_encoder.2} parent=5 // pred_fallthru
        _
      %p361 = scmp.le.s32.totalorder 1, %s18
      %p362 = scmp.lt.s32.totalorder %s18, 3
      %p363 = pnand %p361, %p362
      %p364 = pneg %p363
      // Predicated region
      $region61: #{transformer_encoder.2} parent=5 // pred_check
        _
      $region62: #{transformer_encoder.2} parent=5 // pred_check_branch
        %366 = sbr.rel (%p363) target = $region64
      $region63: #{transformer_encoder.2} parent=5 // pred_region
        %s367 = ssub.s32 %s18, 1
        // Predicated region
        $region65: #{transformer_encoder.2} parent=63 // pred_check
          %p368 = pneg %p161
        $region66: #{transformer_encoder.2} parent=63 // pred_check_branch
          %370 = sbr.rel (%p368) target = $region68
        $region67: #{transformer_encoder.2} parent=63 // pred_region
          %372 = dma.done [#allocation5], 256
        $region68: #{transformer_encoder.2} parent=63 // pred_fallthru
          _
        %p373 = scmp.lt.s32.totalorder %s27, 1
        %s374 = scalar_select %p373, %s27, 1
        %s375 = smul.addr %s374, 4
        %s376 = scalar_lea.vmem %s0, %s375
        %p377 = pneg %p56
        %p378 = pneg %p53
        %p379 = pneg %p77
        %p380 = pneg %p74
        %p381 = pneg %p98
        %p382 = pneg %p95
        %p383 = pneg %p119
        %p384 = pneg %p116
        %p385 = pneg %p140
        %p386 = pneg %p137
        %p387 = pneg %p161
        %p388 = pneg %p158
        %p389 = pneg %p182
        %p390 = pneg %p179
        %p391 = pneg %p203
        %p392 = pneg %p200
        %p393 = pneg %p224
        %p394 = pneg %p221
        %p395 = pneg %p245
        %p396 = pneg %p242
        %p397 = pneg %p266
        %p398 = pneg %p263
        %p399 = pneg %p294
        %p400 = pneg %p291
        %p401 = scmp.lt.s32.totalorder %s27, 1
        %s402 = scalar_select %p401, %s27, 1
        %p403 = scmp.lt.s32.totalorder %s28, 0
        %s404 = scalar_select %p403, %s28, 0
        %s405 = sadd.s32 %s404, %s402
        %s406 = smul.addr %s405, 4
        %s407 = scalar_lea.vmem %s11, %s406
        %p408 = scmp.lt.s32.totalorder %s27, 1
        %s409 = scalar_select %p408, %s27, 1
        %s410 = smul.addr %s409, 4
        %s411 = scalar_lea.vmem %s0, %s410
        %p412 = scmp.lt.s32.totalorder %s27, 1
        %s413 = scalar_select %p412, %s27, 1
        %p414 = scmp.lt.s32.totalorder %s28, 0
        %s415 = scalar_select %p414, %s28, 0
        %s416 = sadd.s32 %s415, %s413
        %s417 = smul.addr %s416, 4
        %s418 = scalar_lea.vmem %s11, %s417
        %p420 = scmp.eq.s32.totalorder %s28, 0
        // Predicated region
        $region69: #{transformer_encoder.2} parent=63 // pred_check
          %p421 = pneg %p420
        $region70: #{transformer_encoder.2} parent=63 // pred_check_branch
          %423 = sbr.rel (%p421) target = $region72
        $region71: #{transformer_encoder.2} parent=63 // pred_region
          %v424 = vld [vmem:[%s411] sm:$0xf]
          %v425 = vld [vmem:[%s1] sm:$0xf]
          %v426 = vld [vmem:[%s1 + $0x4] sm:$0xf]
          %v427 = vld [vmem:[%s1 + $0x8] sm:$0xf]
          %v428 = vld [vmem:[%s1 + $0xc] sm:$0xf]
          %v433 = vunpack.c.l.b16 %v425
          %v434 = vunpack.c.l.b16 %v426
          %v435 = vunpack.c.l.b16 %v427
          %v436 = vunpack.c.l.b16 %v428
          %v437 = vpack.c.b16 %v434, %v433
          %v438 = vpack.c.b16 %v436, %v435
          %vm441 = vcmask 261120
          %v443 = vsel %vm441, %v424, 0
          %445 = vmatpush.bf16.msra.mxu0 0
          %446 = vmatpush.bf16.msra.mxu0 0
          %447 = vmatpush.bf16.msra.mxu0 0
          %448 = vmatpush.bf16.msra.mxu0 0
          %449 = vmatpush.bf16.msra.mxu0 0
          %450 = vmatpush.bf16.msra.mxu0 0
          %451 = vmatpush.bf16.msra.mxu0 %v438
          %452 = vmatpush.bf16.msra.mxu0 %v437
          %453 = vmatmul.bf16.gmra.mxu0 %v443
          %v454 = vpop.f32.mrf.mxu0
          %v455 = vadd.f32 0.0, %v454
          %v456 = vpop.f32.mrf.mxu0
          %457 = vdwg.mxu0
          %v458 = vpack.c.bf16 %v455, %v455
          %vm459 = vcmask 781312
          %460 = vst.msk [vmem:[#allocation2] sm:$0xf] %vm459, %v458
        $region72: #{transformer_encoder.2} parent=63 // pred_fallthru
          _
        %s461 = smul.u32 %s28, 8
        %s462 = sshra.s32 %s461, 3
        %s463 = sand.u32 %s461, 7
        %s464 = smul.addr %s462, 4
        %s465 = scalar_lea.vmem %s411, %s464
        %v466 = vld [vmem:[%s465] sm:$0xf]
        %v467 = vunpack.c.l.bf16 %v466
        %s468 = smul.addr %s462, 4
        %s469 = scalar_lea.vmem [#allocation2], %s468
        %v470 = vld [vmem:[%s469] sm:$0xf]
        %v471 = vld [vmem:[#allocation2] sm:$0xf]
        %v473 = vunpack.c.l.b16 %v471
        %v474 = vpack.c.b16 %v473, %v473
        %475 = vrot.lane.b32.xlu0 %v474, 96
        %v476 = vpop.permute.xlu0 %475
        %vm477 = vcmask 31744
        %v479 = vsel %vm477, %v470, 0
        %v482 = vsel %vm477, %v476, 0
        %484 = vmatpush.bf16.xpose.msra.mxu0 0
        %485 = vmatpush.bf16.xpose.msra.mxu0 0
        %486 = vmatpush.bf16.xpose.msra.mxu0 0
        %487 = vmatpush.bf16.xpose.msra.mxu0 0
        %488 = vmatpush.bf16.xpose.msra.mxu0 0
        %489 = vmatpush.bf16.xpose.msra.mxu0 0
        %490 = vmatpush.bf16.xpose.msra.mxu0 0
        %491 = vmatpush.bf16.xpose.msra.mxu0 %v482
        %492 = vmatmul.bf16.gmra.mxu0 %v479
        %v493 = vpop.f32.mrf.mxu0
        %v494 = vadd.f32 0.0, %v493
        %v495 = vpop.f32.mrf.mxu0
        %496 = vdwg.mxu0
        %vm497 = vcmask 64512
        %v498 = vsel %vm497, %v494, -inf
        %499 = vmax.xlane.f32.xlu0 %v498
        %v500 = vpop.xlane.xlu0 %499
        %v501 = vsub.f32 %v494, %v500
        %v502 = vmul.f32 %v501, 1.442695
        %v503 = vpow.pop %v502
        %v504 = vsel %vm497, %v503, 0.0
        %505 = vadd.xlane.f32.xlu0 %v504
        %v506 = vpop.xlane.xlu0 %505
        %v507 = vrcp.pop %v506
        %v508 = vmul.f32 %v503, %v507
        %v509 = vpack.c.bf16 %v508, %v508
        %510 = vrot.lane.b32.xlu0 %v474, 64
        %v511 = vpop.permute.xlu0 %510
        %v513 = vsel %vm497, %v509, 0
        %vm515 = vcmask 1043456
        %v517 = vsel %vm515, %v511, 0
        %519 = vmatpush.bf16.msra.mxu0 0
        %520 = vmatpush.bf16.msra.mxu0 0
        %521 = vmatpush.bf16.msra.mxu0 0
        %522 = vmatpush.bf16.msra.mxu0 0
        %523 = vmatpush.bf16.msra.mxu0 0
        %524 = vmatpush.bf16.msra.mxu0 0
        %525 = vmatpush.bf16.msra.mxu0 0
        %526 = vmatpush.bf16.msra.mxu0 %v517
        %527 = vmatmul.bf16.gmra.mxu0 %v513
        %v528 = vpop.f32.mrf.mxu0
        %v529 = vadd.f32 0.0, %v528
        %v530 = vpop.f32.mrf.mxu0
        %531 = vdwg.mxu0
        %532 = vst.msk [vmem:[#allocation3] sm:$0xff] %vm477, %v529
        %v533 = vld [vmem:[#allocation2] sm:$0xf]
        %v535 = vunpack.c.l.b16 %v470
        %v536 = vpack.c.b16 %v535, %v535
        %537 = vrot.lane.b32.xlu0 %v536, 124
        %v538 = vpop.permute.xlu0 %537
        %v540 = vunpack.c.l.b16 %v533
        %v541 = vpack.c.b16 %v540, %v540
        %542 = vrot.lane.b32.xlu0 %v541, 92
        %v543 = vpop.permute.xlu0 %542
        %v545 = vsel %vm477, %v538, 0
        %v548 = vsel %vm477, %v543, 0
        %550 = vmatpush.bf16.xpose.msra.mxu0 0
        %551 = vmatpush.bf16.xpose.msra.mxu0 0
        %552 = vmatpush.bf16.xpose.msra.mxu0 0
        %553 = vmatpush.bf16.xpose.msra.mxu0 0
        %554 = vmatpush.bf16.xpose.msra.mxu0 0
        %555 = vmatpush.bf16.xpose.msra.mxu0 0
        %556 = vmatpush.bf16.xpose.msra.mxu0 0
        %557 = vmatpush.bf16.xpose.msra.mxu0 %v548
        %558 = vmatmul.bf16.gmra.mxu0 %v545
        %v559 = vpop.f32.mrf.mxu0
        %v560 = vadd.f32 0.0, %v559
        %v561 = vpop.f32.mrf.mxu0
        %562 = vdwg.mxu0
        %v563 = vsel %vm497, %v560, -inf
        %564 = vmax.xlane.f32.xlu0 %v563
        %v565 = vpop.xlane.xlu0 %564
        %v566 = vsub.f32 %v560, %v565
        %v567 = vmul.f32 %v566, 1.442695
        %v568 = vpow.pop %v567
        %v569 = vsel %vm497, %v568, 0.0
        %570 = vadd.xlane.f32.xlu0 %v569
        %v571 = vpop.xlane.xlu0 %570
        %v572 = vrcp.pop %v571
        %v573 = vmul.f32 %v568, %v572
        %v574 = vpack.c.bf16 %v573, %v573
        %575 = vrot.lane.b32.xlu0 %v541, 60
        %v576 = vpop.permute.xlu0 %575
        %v578 = vsel %vm497, %v574, 0
        %v581 = vsel %vm515, %v576, 0
        %583 = vmatpush.bf16.msra.mxu0 0
        %584 = vmatpush.bf16.msra.mxu0 0
        %585 = vmatpush.bf16.msra.mxu0 0
        %586 = vmatpush.bf16.msra.mxu0 0
        %587 = vmatpush.bf16.msra.mxu0 0
        %588 = vmatpush.bf16.msra.mxu0 0
        %589 = vmatpush.bf16.msra.mxu0 0
        %590 = vmatpush.bf16.msra.mxu0 %v581
        %591 = vmatmul.bf16.gmra.mxu0 %v578
        %v592 = vpop.f32.mrf.mxu0
        %v593 = vadd.f32 0.0, %v592
        %v594 = vpop.f32.mrf.mxu0
        %595 = vdwg.mxu0
        %597 = vrot.lane.b32.xlu0 %v593, 4
        %v598 = vpop.permute.xlu0 %597
        %vm600 = vcmask 64544
        %601 = vst.msk [vmem:[#allocation3] sm:$0xff] %vm600, %v598
        %v602 = vld [vmem:[#allocation2] sm:$0xf]
        %603 = vrot.lane.b32.xlu0 %v536, 120
        %v604 = vpop.permute.xlu0 %603
        %v606 = vunpack.c.l.b16 %v602
        %v607 = vpack.c.b16 %v606, %v606
        %608 = vrot.lane.b32.xlu0 %v607, 88
        %v609 = vpop.permute.xlu0 %608
        %v611 = vsel %vm477, %v604, 0
        %v614 = vsel %vm477, %v609, 0
        %616 = vmatpush.bf16.xpose.msra.mxu0 0
        %617 = vmatpush.bf16.xpose.msra.mxu0 0
        %618 = vmatpush.bf16.xpose.msra.mxu0 0
        %619 = vmatpush.bf16.xpose.msra.mxu0 0
        %620 = vmatpush.bf16.xpose.msra.mxu0 0
        %621 = vmatpush.bf16.xpose.msra.mxu0 0
        %622 = vmatpush.bf16.xpose.msra.mxu0 0
        %623 = vmatpush.bf16.xpose.msra.mxu0 %v614
        %624 = vmatmul.bf16.gmra.mxu0 %v611
        %v625 = vpop.f32.mrf.mxu0
        %v626 = vadd.f32 0.0, %v625
        %v627 = vpop.f32.mrf.mxu0
        %628 = vdwg.mxu0
        %v629 = vsel %vm497, %v626, -inf
        %630 = vmax.xlane.f32.xlu0 %v629
        %v631 = vpop.xlane.xlu0 %630
        %v632 = vsub.f32 %v626, %v631
        %v633 = vmul.f32 %v632, 1.442695
        %v634 = vpow.pop %v633
        %v635 = vsel %vm497, %v634, 0.0
        %636 = vadd.xlane.f32.xlu0 %v635
        %v637 = vpop.xlane.xlu0 %636
        %v638 = vrcp.pop %v637
        %v639 = vmul.f32 %v634, %v638
        %v640 = vpack.c.bf16 %v639, %v639
        %641 = vrot.lane.b32.xlu0 %v607, 56
        %v642 = vpop.permute.xlu0 %641
        %v644 = vsel %vm497, %v640, 0
        %v647 = vsel %vm515, %v642, 0
        %649 = vmatpush.bf16.msra.mxu0 0
        %650 = vmatpush.bf16.msra.mxu0 0
        %651 = vmatpush.bf16.msra.mxu0 0
        %652 = vmatpush.bf16.msra.mxu0 0
        %653 = vmatpush.bf16.msra.mxu0 0
        %654 = vmatpush.bf16.msra.mxu0 0
        %655 = vmatpush.bf16.msra.mxu0 0
        %656 = vmatpush.bf16.msra.mxu0 %v647
        %657 = vmatmul.bf16.gmra.mxu0 %v644
        %v658 = vpop.f32.mrf.mxu0
        %v659 = vadd.f32 0.0, %v658
        %v660 = vpop.f32.mrf.mxu0
        %661 = vdwg.mxu0
        %663 = vrot.lane.b32.xlu0 %v659, 8
        %v664 = vpop.permute.xlu0 %663
        %vm666 = vcmask 97344
        %667 = vst.msk [vmem:[#allocation3] sm:$0xff] %vm666, %v664
        %v668 = vld [vmem:[#allocation2] sm:$0xf]
        %669 = vrot.lane.b32.xlu0 %v536, 116
        %v670 = vpop.permute.xlu0 %669
        %v672 = vunpack.c.l.b16 %v668
        %v673 = vpack.c.b16 %v672, %v672
        %674 = vrot.lane.b32.xlu0 %v673, 84
        %v675 = vpop.permute.xlu0 %674
        %v677 = vsel %vm477, %v670, 0
        %v680 = vsel %vm477, %v675, 0
        %682 = vmatpush.bf16.xpose.msra.mxu0 0
        %683 = vmatpush.bf16.xpose.msra.mxu0 0
        %684 = vmatpush.bf16.xpose.msra.mxu0 0
        %685 = vmatpush.bf16.xpose.msra.mxu0 0
        %686 = vmatpush.bf16.xpose.msra.mxu0 0
        %687 = vmatpush.bf16.xpose.msra.mxu0 0
        %688 = vmatpush.bf16.xpose.msra.mxu0 0
        %689 = vmatpush.bf16.xpose.msra.mxu0 %v680
        %690 = vmatmul.bf16.gmra.mxu0 %v677
        %v691 = vpop.f32.mrf.mxu0
        %v692 = vadd.f32 0.0, %v691
        %v693 = vpop.f32.mrf.mxu0
        %694 = vdwg.mxu0
        %v695 = vsel %vm497, %v692, -inf
        %696 = vmax.xlane.f32.xlu0 %v695
        %v697 = vpop.xlane.xlu0 %696
        %v698 = vsub.f32 %v692, %v697
        %v699 = vmul.f32 %v698, 1.442695
        %v700 = vpow.pop %v699
        %v701 = vsel %vm497, %v700, 0.0
        %702 = vadd.xlane.f32.xlu0 %v701
        %v703 = vpop.xlane.xlu0 %702
        %v704 = vrcp.pop %v703
        %v705 = vmul.f32 %v700, %v704
        %v706 = vpack.c.bf16 %v705, %v705
        %707 = vrot.lane.b32.xlu0 %v673, 52
        %v708 = vpop.permute.xlu0 %707
        %v710 = vsel %vm497, %v706, 0
        %v713 = vsel %vm515, %v708, 0
        %715 = vmatpush.bf16.msra.mxu0 0
        %716 = vmatpush.bf16.msra.mxu0 0
        %717 = vmatpush.bf16.msra.mxu0 0
        %718 = vmatpush.bf16.msra.mxu0 0
        %719 = vmatpush.bf16.msra.mxu0 0
        %720 = vmatpush.bf16.msra.mxu0 0
        %721 = vmatpush.bf16.msra.mxu0 0
        %722 = vmatpush.bf16.msra.mxu0 %v713
        %723 = vmatmul.bf16.gmra.mxu0 %v710
        %v724 = vpop.f32.mrf.mxu0
        %v725 = vadd.f32 0.0, %v724
        %v726 = vpop.f32.mrf.mxu0
        %727 = vdwg.mxu0
        %729 = vrot.lane.b32.xlu0 %v725, 12
        %v730 = vpop.permute.xlu0 %729
        %vm732 = vcmask 130144
        %733 = vst.msk [vmem:[#allocation3] sm:$0xff] %vm732, %v730
        %v734 = vld [vmem:[#allocation2] sm:$0xf]
        %735 = vrot.lane.b32.xlu0 %v536, 112
        %v736 = vpop.permute.xlu0 %735
        %v738 = vunpack.c.l.b16 %v734
        %v739 = vpack.c.b16 %v738, %v738
        %740 = vrot.lane.b32.xlu0 %v739, 80
        %v741 = vpop.permute.xlu0 %740
        %v743 = vsel %vm477, %v736, 0
        %v746 = vsel %vm477, %v741, 0
        %748 = vmatpush.bf16.xpose.msra.mxu0 0
        %749 = vmatpush.bf16.xpose.msra.mxu0 0
        %750 = vmatpush.bf16.xpose.msra.mxu0 0
        %751 = vmatpush.bf16.xpose.msra.mxu0 0
        %752 = vmatpush.bf16.xpose.msra.mxu0 0
        %753 = vmatpush.bf16.xpose.msra.mxu0 0
        %754 = vmatpush.bf16.xpose.msra.mxu0 0
        %755 = vmatpush.bf16.xpose.msra.mxu0 %v746
        %756 = vmatmul.bf16.gmra.mxu0 %v743
        %v757 = vpop.f32.mrf.mxu0
        %v758 = vadd.f32 0.0, %v757
        %v759 = vpop.f32.mrf.mxu0
        %760 = vdwg.mxu0
        %v761 = vsel %vm497, %v758, -inf
        %762 = vmax.xlane.f32.xlu0 %v761
        %v763 = vpop.xlane.xlu0 %762
        %v764 = vsub.f32 %v758, %v763
        %v765 = vmul.f32 %v764, 1.442695
        %v766 = vpow.pop %v765
        %v767 = vsel %vm497, %v766, 0.0
        %768 = vadd.xlane.f32.xlu0 %v767
        %v769 = vpop.xlane.xlu0 %768
        %v770 = vrcp.pop %v769
        %v771 = vmul.f32 %v766, %v770
        %v772 = vpack.c.bf16 %v771, %v771
        %773 = vrot.lane.b32.xlu0 %v739, 48
        %v774 = vpop.permute.xlu0 %773
        %v776 = vsel %vm497, %v772, 0
        %v779 = vsel %vm515, %v774, 0
        %781 = vmatpush.bf16.msra.mxu0 0
        %782 = vmatpush.bf16.msra.mxu0 0
        %783 = vmatpush.bf16.msra.mxu0 0
        %784 = vmatpush.bf16.msra.mxu0 0
        %785 = vmatpush.bf16.msra.mxu0 0
        %786 = vmatpush.bf16.msra.mxu0 0
        %787 = vmatpush.bf16.msra.mxu0 0
        %788 = vmatpush.bf16.msra.mxu0 %v779
        %789 = vmatmul.bf16.gmra.mxu0 %v776
        %v790 = vpop.f32.mrf.mxu0
        %v791 = vadd.f32 0.0, %v790
        %v792 = vpop.f32.mrf.mxu0
        %793 = vdwg.mxu0
        %795 = vrot.lane.b32.xlu0 %v791, 16
        %v796 = vpop.permute.xlu0 %795
        %vm798 = vcmask 162944
        %799 = vst.msk [vmem:[#allocation3] sm:$0xff] %vm798, %v796
        %v800 = vld [vmem:[#allocation2] sm:$0xf]
        %801 = vrot.lane.b32.xlu0 %v536, 108
        %v802 = vpop.permute.xlu0 %801
        %v804 = vunpack.c.l.b16 %v800
        %v805 = vpack.c.b16 %v804, %v804
        %806 = vrot.lane.b32.xlu0 %v805, 76
        %v807 = vpop.permute.xlu0 %806
        %v809 = vsel %vm477, %v802, 0
        %v812 = vsel %vm477, %v807, 0
        %814 = vmatpush.bf16.xpose.msra.mxu0 0
        %815 = vmatpush.bf16.xpose.msra.mxu0 0
        %816 = vmatpush.bf16.xpose.msra.mxu0 0
        %817 = vmatpush.bf16.xpose.msra.mxu0 0
        %818 = vmatpush.bf16.xpose.msra.mxu0 0
        %819 = vmatpush.bf16.xpose.msra.mxu0 0
        %820 = vmatpush.bf16.xpose.msra.mxu0 0
        %821 = vmatpush.bf16.xpose.msra.mxu0 %v812
        %822 = vmatmul.bf16.gmra.mxu0 %v809
        %v823 = vpop.f32.mrf.mxu0
        %v824 = vadd.f32 0.0, %v823
        %v825 = vpop.f32.mrf.mxu0
        %826 = vdwg.mxu0
        %v827 = vsel %vm497, %v824, -inf
        %828 = vmax.xlane.f32.xlu0 %v827
        %v829 = vpop.xlane.xlu0 %828
        %v830 = vsub.f32 %v824, %v829
        %v831 = vmul.f32 %v830, 1.442695
        %v832 = vpow.pop %v831
        %v833 = vsel %vm497, %v832, 0.0
        %834 = vadd.xlane.f32.xlu0 %v833
        %v835 = vpop.xlane.xlu0 %834
        %v836 = vrcp.pop %v835
        %v837 = vmul.f32 %v832, %v836
        %v838 = vpack.c.bf16 %v837, %v837
        %839 = vrot.lane.b32.xlu0 %v805, 44
        %v840 = vpop.permute.xlu0 %839
        %v842 = vsel %vm497, %v838, 0
        %v845 = vsel %vm515, %v840, 0
        %847 = vmatpush.bf16.msra.mxu0 0
        %848 = vmatpush.bf16.msra.mxu0 0
        %849 = vmatpush.bf16.msra.mxu0 0
        %850 = vmatpush.bf16.msra.mxu0 0
        %851 = vmatpush.bf16.msra.mxu0 0
        %852 = vmatpush.bf16.msra.mxu0 0
        %853 = vmatpush.bf16.msra.mxu0 0
        %854 = vmatpush.bf16.msra.mxu0 %v845
        %855 = vmatmul.bf16.gmra.mxu0 %v842
        %v856 = vpop.f32.mrf.mxu0
        %v857 = vadd.f32 0.0, %v856
        %v858 = vpop.f32.mrf.mxu0
        %859 = vdwg.mxu0
        %861 = vrot.lane.b32.xlu0 %v857, 20
        %v862 = vpop.permute.xlu0 %861
        %vm864 = vcmask 195744
        %865 = vst.msk [vmem:[#allocation3] sm:$0xff] %vm864, %v862
        %v866 = vld [vmem:[#allocation2] sm:$0xf]
        %867 = vrot.lane.b32.xlu0 %v536, 104
        %v868 = vpop.permute.xlu0 %867
        %v870 = vunpack.c.l.b16 %v866
        %v871 = vpack.c.b16 %v870, %v870
        %872 = vrot.lane.b32.xlu0 %v871, 72
        %v873 = vpop.permute.xlu0 %872
        %v875 = vsel %vm477, %v868, 0
        %v878 = vsel %vm477, %v873, 0
        %880 = vmatpush.bf16.xpose.msra.mxu0 0
        %881 = vmatpush.bf16.xpose.msra.mxu0 0
        %882 = vmatpush.bf16.xpose.msra.mxu0 0
        %883 = vmatpush.bf16.xpose.msra.mxu0 0
        %884 = vmatpush.bf16.xpose.msra.mxu0 0
        %885 = vmatpush.bf16.xpose.msra.mxu0 0
        %886 = vmatpush.bf16.xpose.msra.mxu0 0
        %887 = vmatpush.bf16.xpose.msra.mxu0 %v878
        %888 = vmatmul.bf16.gmra.mxu0 %v875
        %v889 = vpop.f32.mrf.mxu0
        %v890 = vadd.f32 0.0, %v889
        %v891 = vpop.f32.mrf.mxu0
        %892 = vdwg.mxu0
        %v893 = vsel %vm497, %v890, -inf
        %894 = vmax.xlane.f32.xlu0 %v893
        %v895 = vpop.xlane.xlu0 %894
        %v896 = vsub.f32 %v890, %v895
        %v897 = vmul.f32 %v896, 1.442695
        %v898 = vpow.pop %v897
        %v899 = vsel %vm497, %v898, 0.0
        %900 = vadd.xlane.f32.xlu0 %v899
        %v901 = vpop.xlane.xlu0 %900
        %v902 = vrcp.pop %v901
        %v903 = vmul.f32 %v898, %v902
        %v904 = vpack.c.bf16 %v903, %v903
        %905 = vrot.lane.b32.xlu0 %v871, 40
        %v906 = vpop.permute.xlu0 %905
        %v908 = vsel %vm497, %v904, 0
        %v911 = vsel %vm515, %v906, 0
        %913 = vmatpush.bf16.msra.mxu0 0
        %914 = vmatpush.bf16.msra.mxu0 0
        %915 = vmatpush.bf16.msra.mxu0 0
        %916 = vmatpush.bf16.msra.mxu0 0
        %917 = vmatpush.bf16.msra.mxu0 0
        %918 = vmatpush.bf16.msra.mxu0 0
        %919 = vmatpush.bf16.msra.mxu0 0
        %920 = vmatpush.bf16.msra.mxu0 %v911
        %921 = vmatmul.bf16.gmra.mxu0 %v908
        %v922 = vpop.f32.mrf.mxu0
        %v923 = vadd.f32 0.0, %v922
        %v924 = vpop.f32.mrf.mxu0
        %925 = vdwg.mxu0
        %927 = vrot.lane.b32.xlu0 %v923, 24
        %v928 = vpop.permute.xlu0 %927
        %vm930 = vcmask 228544
        %931 = vst.msk [vmem:[#allocation3] sm:$0xff] %vm930, %v928
        %v932 = vld [vmem:[#allocation2] sm:$0xf]
        %933 = vrot.lane.b32.xlu0 %v536, 100
        %v934 = vpop.permute.xlu0 %933
        %v936 = vunpack.c.l.b16 %v932
        %v937 = vpack.c.b16 %v936, %v936
        %938 = vrot.lane.b32.xlu0 %v937, 68
        %v939 = vpop.permute.xlu0 %938
        %v941 = vsel %vm477, %v934, 0
        %v944 = vsel %vm477, %v939, 0
        %946 = vmatpush.bf16.xpose.msra.mxu0 0
        %947 = vmatpush.bf16.xpose.msra.mxu0 0
        %948 = vmatpush.bf16.xpose.msra.mxu0 0
        %949 = vmatpush.bf16.xpose.msra.mxu0 0
        %950 = vmatpush.bf16.xpose.msra.mxu0 0
        %951 = vmatpush.bf16.xpose.msra.mxu0 0
        %952 = vmatpush.bf16.xpose.msra.mxu0 0
        %953 = vmatpush.bf16.xpose.msra.mxu0 %v944
        %954 = vmatmul.bf16.gmra.mxu0 %v941
        %v955 = vpop.f32.mrf.mxu0
        %v956 = vadd.f32 0.0, %v955
        %v957 = vpop.f32.mrf.mxu0
        %958 = vdwg.mxu0
        %v959 = vsel %vm497, %v956, -inf
        %960 = vmax.xlane.f32.xlu0 %v959
        %v961 = vpop.xlane.xlu0 %960
        %v962 = vsub.f32 %v956, %v961
        %v963 = vmul.f32 %v962, 1.442695
        %v964 = vpow.pop %v963
        %v965 = vsel %vm497, %v964, 0.0
        %966 = vadd.xlane.f32.xlu0 %v965
        %v967 = vpop.xlane.xlu0 %966
        %v968 = vrcp.pop %v967
        %v969 = vmul.f32 %v964, %v968
        %v970 = vpack.c.bf16 %v969, %v969
        %971 = vrot.lane.b32.xlu0 %v937, 36
        %v972 = vpop.permute.xlu0 %971
        %v974 = vsel %vm497, %v970, 0
        %v977 = vsel %vm515, %v972, 0
        %979 = vmatpush.bf16.msra.mxu0 0
        %980 = vmatpush.bf16.msra.mxu0 0
        %981 = vmatpush.bf16.msra.mxu0 0
        %982 = vmatpush.bf16.msra.mxu0 0
        %983 = vmatpush.bf16.msra.mxu0 0
        %984 = vmatpush.bf16.msra.mxu0 0
        %985 = vmatpush.bf16.msra.mxu0 0
        %986 = vmatpush.bf16.msra.mxu0 %v977
        %987 = vmatmul.bf16.gmra.mxu0 %v974
        %v988 = vpop.f32.mrf.mxu0
        %v989 = vadd.f32 0.0, %v988
        %v990 = vpop.f32.mrf.mxu0
        %991 = vdwg.mxu0
        %993 = vrot.lane.b32.xlu0 %v989, 28
        %v994 = vpop.permute.xlu0 %993
        %vm996 = vcmask 261344
        %997 = vst.msk [vmem:[#allocation3] sm:$0xff] %vm996, %v994
        %v998 = vld [vmem:[#allocation3] sm:$0xff]
        %v999 = vpack.c.bf16 %v998, %v998
        %v1000 = vld [vmem:[%s2] sm:$0xf]
        %v1001 = vld [vmem:[%s2 + $0x4] sm:$0xf]
        %v1002 = vld [vmem:[%s2 + $0x8] sm:$0xf]
        %v1003 = vld [vmem:[%s2 + $0xc] sm:$0xf]
        %v1008 = vunpack.c.l.b16 %v1000
        %v1009 = vunpack.c.l.b16 %v1001
        %v1010 = vunpack.c.l.b16 %v1002
        %v1011 = vunpack.c.l.b16 %v1003
        %v1012 = vpack.c.b16 %v1009, %v1008
        %v1013 = vpack.c.b16 %v1011, %v1010
        %vm1016 = vcmask 261120
        %v1018 = vsel %vm1016, %v999, 0
        %1020 = vmatpush.bf16.msra.mxu0 0
        %1021 = vmatpush.bf16.msra.mxu0 0
        %1022 = vmatpush.bf16.msra.mxu0 0
        %1023 = vmatpush.bf16.msra.mxu0 0
        %1024 = vmatpush.bf16.msra.mxu0 0
        %1025 = vmatpush.bf16.msra.mxu0 0
        %1026 = vmatpush.bf16.msra.mxu0 %v1013
        %1027 = vmatpush.bf16.msra.mxu0 %v1012
        %1028 = vmatmul.bf16.gmra.mxu0 %v1018
        %v1029 = vpop.f32.mrf.mxu0
        %v1030 = vadd.f32 %v467, %v1029
        %v1031 = vpop.f32.mrf.mxu0
        %1032 = vdwg.mxu0
        %v1033 = vld [vmem:[%s3] sm:$0x1]
        %v1034 = vld [vmem:[%s4] sm:$0x1]
        %v1035 = vsel %vm1016, %v1030, 0.0
        %1036 = vadd.xlane.f32.xlu0 %v1035
        %v1037 = vpop.xlane.xlu0 %1036
        %v1038 = vrcp.pop 32.0
        %v1039 = vmul.f32 32.0, %v1038
        %v1040 = vsub.f32 1.0, %v1039
        %v1041 = vmul.f32 %v1038, %v1040
        %v1042 = vadd.f32 %v1038, %v1041
        %vm1043 = vweird.f32 %v1038
        %v1044 = vsel %vm1043, %v1038, %v1042
        %v1045 = vmul.f32 %v1037, %v1044
        %v1046 = vsub.f32 %v1030, %v1045
        %v1047 = vmul.f32 %v1046, %v1046
        %v1048 = vsel %vm1016, %v1047, 0.0
        %1049 = vadd.xlane.f32.xlu0 %v1048
        %v1050 = vpop.xlane.xlu0 %1049
        %v1051 = vmul.f32 %v1050, %v1044
        %v1052 = vadd.f32 %v1051, 1e-05
        %v1053 = vrsqrt.pop %v1052
        %v1054 = vmul.f32 %v1053, %v1052
        %v1055 = vmul.f32 %v1054, %v1053
        %v1056 = vmul.f32 0.5, %v1055
        %v1057 = vsub.f32 1.5, %v1056
        %v1058 = vmul.f32 %v1053, %v1057
        %vm1059 = vweird.f32 %v1052
        %vm1060 = vweird.f32 %v1053
        %vm1061 = vmor %vm1059, %vm1060
        %v1062 = vsel %vm1061, %v1053, %v1058
        %v1063 = vmul.f32 %v1046, %v1062
        %v1065 = vperm.slane %v1033, 0
        %v1067 = vmul.f32 %v1063, %v1065
        %v1069 = vperm.slane %v1034, 0
        %v1071 = vadd.f32 %v1067, %v1069
        %v1072 = vpack.c.bf16 %v1071, %v1071
        %v1073 = vld [vmem:[#allocation4] sm:$0xf]
        %v1074 = vld [vmem:[#allocation4 + $0x4] sm:$0xf]
        %v1075 = vld [vmem:[#allocation4 + $0x8] sm:$0xf]
        %v1076 = vld [vmem:[#allocation4 + $0xc] sm:$0xf]
        %v1077 = vld [vmem:[%s6] sm:$0x1]
        %v1079 = vperm.slane %v1077, 0
        %v1085 = vunpack.c.l.b16 %v1073
        %v1086 = vunpack.c.l.b16 %v1074
        %v1087 = vunpack.c.l.b16 %v1075
        %v1088 = vunpack.c.l.b16 %v1076
        %v1089 = vpack.c.b16 %v1086, %v1085
        %v1090 = vpack.c.b16 %v1088, %v1087
        %v1094 = vsel %vm1016, %v1072, 0
        %1096 = vmatpush.bf16.msra.mxu0 0
        %1097 = vmatpush.bf16.msra.mxu0 0
        %1098 = vmatpush.bf16.msra.mxu0 0
        %1099 = vmatpush.bf16.msra.mxu0 0
        %1100 = vmatpush.bf16.msra.mxu0 0
        %1101 = vmatpush.bf16.msra.mxu0 0
        %1102 = vmatpush.bf16.msra.mxu0 %v1090
        %1103 = vmatpush.bf16.msra.mxu0 %v1089
        %1104 = vmatmul.bf16.gmra.mxu0 %v1094
        %v1105 = vpop.f32.mrf.mxu0
        %v1106 = vadd.f32 %v1079, %v1105
        %v1107 = vpop.f32.mrf.mxu0
        %1108 = vdwg.mxu0
        %v1109 = vmul.f32 %v1106, 0.5
        %v1110 = vmul.f32 %v1106, 0.70710677
        %v1111 = vmul.f32 %v1110, %v1110
        %v1112 = vmin.f32 16.0, %v1111
        %v1113 = vmul.f32 %v1112, 2.1237322e-06
        %v1114 = vadd.f32 %v1113, 0.00028619796
        %v1115 = vmul.f32 %v1112, %v1114
        %v1116 = vadd.f32 %v1115, 0.0036580483
        %v1117 = vmul.f32 %v1112, %v1116
        %v1118 = vadd.f32 %v1117, 0.05243302
        %v1119 = vmul.f32 %v1112, %v1118
        %v1120 = vadd.f32 %v1119, 0.18741608
        %v1121 = vmul.f32 %v1112, %v1120
        %v1122 = vadd.f32 %v1121, 1.1283791
        %v1123 = vmul.f32 %v1110, %v1122
        %v1124 = vmul.f32 %v1112, 3.8918573e-05
        %v1125 = vadd.f32 %v1124, 0.001143296
        %v1126 = vmul.f32 %v1112, %v1125
        %v1127 = vadd.f32 %v1126, 0.014752088
        %v1128 = vmul.f32 %v1112, %v1127
        %v1129 = vadd.f32 %v1128, 0.112945676
        %v1130 = vmul.f32 %v1112, %v1129
        %v1131 = vadd.f32 %v1130, 0.4994258
        %v1132 = vmul.f32 %v1112, %v1131
        %v1133 = vadd.f32 %v1132, 1.0
        %v1134 = vrcp.pop %v1133
        %v1135 = vmul.f32 %v1133, %v1134
        %v1136 = vsub.f32 1.0, %v1135
        %v1137 = vmul.f32 %v1134, %v1136
        %v1138 = vadd.f32 %v1134, %v1137
        %vm1139 = vweird.f32 %v1133
        %vm1140 = vweird.f32 %v1134
        %vm1141 = vmor %vm1139, %vm1140
        %v1142 = vsel %vm1141, %v1134, %v1138
        %v1143 = vand.u32 2147483647, %v1133
        %vm1144 = vcmp.eq.f32.partialorder %v1143, 8.507059e+37
        %v1145 = vand.u32 %v1133, 2147483648
        %v1146 = vor.u32 1.1754944e-38, %v1145
        %v1147 = vsel %vm1144, %v1146, %v1142
        %v1148 = vmul.f32 %v1123, %v1147
        %v1149 = vmin.f32 %v1148, 1.0
        %v1150 = vmax.f32 %v1149, -1.0
        %v1151 = vadd.f32 %v1150, 1.0
        %v1152 = vmul.f32 %v1109, %v1151
        %v1153 = vpack.c.bf16 %v1152, %v1152
        %v1154 = vld [vmem:[%s7] sm:$0xf]
        %v1155 = vld [vmem:[%s7 + $0x4] sm:$0xf]
        %v1156 = vld [vmem:[%s7 + $0x8] sm:$0xf]
        %v1157 = vld [vmem:[%s7 + $0xc] sm:$0xf]
        %v1158 = vld [vmem:[%s7 + $0x10] sm:$0xf]
        %v1159 = vld [vmem:[%s7 + $0x14] sm:$0xf]
        %v1160 = vld [vmem:[%s7 + $0x18] sm:$0xf]
        %v1161 = vld [vmem:[%s7 + $0x1c] sm:$0xf]
        %v1162 = vld [vmem:[%s8] sm:$0x1]
        %v1164 = vperm.slane %v1162, 0
        %v1174 = vunpack.c.l.b16 %v1154
        %v1175 = vunpack.c.l.b16 %v1155
        %v1176 = vunpack.c.l.b16 %v1156
        %v1177 = vunpack.c.l.b16 %v1157
        %v1178 = vunpack.c.l.b16 %v1158
        %v1179 = vunpack.c.l.b16 %v1159
        %v1180 = vunpack.c.l.b16 %v1160
        %v1181 = vunpack.c.l.b16 %v1161
        %v1182 = vpack.c.b16 %v1175, %v1174
        %v1183 = vpack.c.b16 %v1177, %v1176
        %v1184 = vpack.c.b16 %v1179, %v1178
        %v1185 = vpack.c.b16 %v1181, %v1180
        %vm1190 = vcmask 523264
        %v1192 = vsel %vm1190, %v1153, 0
        %1194 = vmatpush.bf16.msra.mxu0 0
        %1195 = vmatpush.bf16.msra.mxu0 0
        %1196 = vmatpush.bf16.msra.mxu0 0
        %1197 = vmatpush.bf16.msra.mxu0 0
        %1198 = vmatpush.bf16.msra.mxu0 %v1185
        %1199 = vmatpush.bf16.msra.mxu0 %v1184
        %1200 = vmatpush.bf16.msra.mxu0 %v1183
        %1201 = vmatpush.bf16.msra.mxu0 %v1182
        %1202 = vmatmul.bf16.gmra.mxu0 %v1192
        %v1203 = vpop.f32.mrf.mxu0
        %v1204 = vadd.f32 %v1164, %v1203
        %v1205 = vpop.f32.mrf.mxu0
        %1206 = vdwg.mxu0
        %v1207 = vadd.f32 %v1204, %v1071
        %v1208 = vld [vmem:[%s9] sm:$0x1]
        %v1209 = vld [vmem:[%s10] sm:$0x1]
        %v1210 = vsel %vm1016, %v1207, 0.0
        %1211 = vadd.xlane.f32.xlu0 %v1210
        %v1212 = vpop.xlane.xlu0 %1211
        %v1213 = vmul.f32 %v1212, %v1044
        %v1214 = vsub.f32 %v1207, %v1213
        %v1215 = vmul.f32 %v1214, %v1214
        %v1216 = vsel %vm1016, %v1215, 0.0
        %1217 = vadd.xlane.f32.xlu0 %v1216
        %v1218 = vpop.xlane.xlu0 %1217
        %v1219 = vmul.f32 %v1218, %v1044
        %v1220 = vadd.f32 %v1219, 1e-05
        %v1221 = vrsqrt.pop %v1220
        %v1222 = vmul.f32 %v1221, %v1220
        %v1223 = vmul.f32 %v1222, %v1221
        %v1224 = vmul.f32 0.5, %v1223
        %v1225 = vsub.f32 1.5, %v1224
        %v1226 = vmul.f32 %v1221, %v1225
        %vm1227 = vweird.f32 %v1220
        %vm1228 = vweird.f32 %v1221
        %vm1229 = vmor %vm1227, %vm1228
        %v1230 = vsel %vm1229, %v1221, %v1226
        %v1231 = vmul.f32 %v1214, %v1230
        %v1233 = vperm.slane %v1208, 0
        %v1235 = vmul.f32 %v1231, %v1233
        %v1237 = vperm.slane %v1209, 0
        %v1239 = vadd.f32 %v1235, %v1237
        %v1240 = vpack.c.bf16 %v1239, %v1239
        %vm1241 = vcmask 257024
        %1242 = vst.msk [vmem:[%s418] sm:$0xf] %vm1241, %v1240
        %p1243 = scmp.lt.s32.totalorder %s27, 1
        %s1244 = scalar_select %p1243, %s27, 1
        %p1245 = scmp.lt.s32.totalorder %s28, 0
        %s1246 = scalar_select %p1245, %s28, 0
        %s1247 = sadd.s32 %s1246, %s1244
        %s1248 = smul.addr %s1247, 4
        %s1249 = scalar_lea.vmem %s11, %s1248
        // Predicated region
        $region73: #{transformer_encoder.2} parent=63 // pred_check
          %p1250 = pneg %p291
        $region74: #{transformer_encoder.2} parent=63 // pred_check_branch
          %1252 = sbr.rel (%p1250) target = $region76
        $region75: #{transformer_encoder.2} parent=63 // pred_region
          _
        $region76: #{transformer_encoder.2} parent=63 // pred_fallthru
          _
      $region64: #{transformer_encoder.2} parent=5 // pred_fallthru
        _
      %p1253 = scmp.le.s32.totalorder 2, %s18
      // Predicated region
      $region77: #{transformer_encoder.2} parent=5 // pred_check
        %p1254 = pneg %p1253
      $region78: #{transformer_encoder.2} parent=5 // pred_check_branch
        %1256 = sbr.rel (%p1254) target = $region80
      $region79: #{transformer_encoder.2} parent=5 // pred_region
        %s1257 = ssub.s32 %s18, 2
        // Predicated region
        $region81: #{transformer_encoder.2} parent=79 // pred_check
          %p1258 = pneg %p297
        $region82: #{transformer_encoder.2} parent=79 // pred_check_branch
          %1260 = sbr.rel (%p1258) target = $region84
        $region83: #{transformer_encoder.2} parent=79 // pred_region
          %p1261 = scmp.lt.s32.totalorder %s29, 1
          %s1262 = scalar_select %p1261, %s29, 1
          %p1263 = scmp.lt.s32.totalorder %s30, 0
          %s1264 = scalar_select %p1263, %s30, 0
          %s1265 = sadd.s32 %s1264, %s1262
          %s1266 = smul.addr %s1265, 4
          %s1267 = scalar_lea.vmem %s11, %s1266
        $region84: #{transformer_encoder.2} parent=79 // pred_fallthru
          _
      $region80: #{transformer_encoder.2} parent=5 // pred_fallthru
        _
    $region6: #{transformer_encoder.2} parent=1 // loop_footer
      %s22 = sadd.s32 1, %s18
    $region7: #{transformer_encoder.2} parent=1 // loop_footer_branch
      %17 = sbr.rel target = $region3
    $region8: #{transformer_encoder.2} parent=1 // loop_exit
      _
    %1268 = vsyncpa [#allocation5], 1
    %s1269 = scalar_lea.sflag [#allocation5], 1
    %1270 = vsyncpa %s1269, 1

</llo_original>
